<compile_context>
chip_gen: v7x
topology: tpu7x:2x2x1
jax: 0.10.0
libtpu: 0.0.40
codegen_flags: <defaults>
</compile_context>

<pallas_src>
import functools

import jax
import jax.numpy as jnp
from jax.experimental import pallas as pl
from jax.experimental.pallas import tpu as pltpu


# ----------------------------------------------------------------------------
# Fused kernel: ids -> embedding -> bi-LSTM stack -> attention -> fc -> softmax
# ----------------------------------------------------------------------------
def _make_fused_kernel(S, B, H, V, num_layers):

    def kernel(*refs):
        n_in = 2 + 4 + 3 * (num_layers - 1) + 3
        ids_ref, table_ref = refs[0], refs[1]
        w_refs = refs[2:n_in - 3]
        fcw_hid_ref, fcw_att_ref, fcb_ref = refs[n_in - 3:n_in]
        out_ref = refs[n_in]
        slab_refs = refs[n_in + 1:]

        def run_layer(xw, whh, slab_ref):
            """Both directions of one LSTM layer in a single recurrence.

            xw  : (S*B, 8H) pre-permuted gate input (fwd gates use time t, rev gates
                  use time S-1-t), gate-major lanes [i_f i_r f_f f_r g_f g_r o_f o_r].
            whh : (2H, 8H) block-diagonal recurrent weight.
            Per-step h layout: [h_f(time t) | h_r(time S-1-t)]  (B, 2H).
            Slab row block t lanes: [h_f(t) | h_r(S-1-t) | h_f(S-1-t) | h_r(t)].
            """
            h = jnp.zeros((B, 2 * H), jnp.float32)
            c = jnp.zeros((B, 2 * H), jnp.float32)
            for t in range(S):                       # static -> fully unrolled
                gates = xw[t * B:(t + 1) * B, :] + jnp.dot(
                    h, whh, preferred_element_type=jnp.float32)     # (B, 8H)
                # full-tile activations (2 EUP ops), then 2H-wide contiguous slices
                sg = jax.nn.sigmoid(gates)
                th = jnp.tanh(gates)
                i_g = sg[:, 0:2 * H]
                f_g = sg[:, 2 * H:4 * H]
                g_g = th[:, 4 * H:6 * H]
                o_g = sg[:, 6 * H:8 * H]
                c = f_g * c + i_g * g_g
                h = o_g * jnp.tanh(c)
                # stores are off the dependence chain; overlap with the next step
                slab_ref[pl.ds(t * B, B), pl.ds(0, 2 * H)] = h
                slab_ref[pl.ds((S - 1 - t) * B, B), pl.ds(2 * H, 2 * H)] = h
            return h          # = [h_f(S-1) | h_r(0)] = this layer's final hidden

        # ---- embedding lookup in-kernel: one-hot @ table on the MXU ----
        ids = ids_ref[...]                                       # (S*B, 2) int32
        iota_v = jax.lax.broadcasted_iota(jnp.int32, (S * B, V), 1)
        oh_f = (iota_v == ids[:, 0:1]).astype(jnp.float32)       # time-major
        oh_r = (iota_v == ids[:, 1:2]).astype(jnp.float32)       # time-reversed
        table = table_ref[...]
        emb_f = jnp.dot(oh_f, table, preferred_element_type=jnp.float32)
        emb_r = jnp.dot(oh_r, table, preferred_element_type=jnp.float32)

        # ---- layer 0: hoisted, pre-permuted input projection ----
        w0f, w0r, whh0, b0 = w_refs[0], w_refs[1], w_refs[2], w_refs[3]
        xw = (jnp.dot(emb_f, w0f[...], preferred_element_type=jnp.float32)
              + jnp.dot(emb_r, w0r[...], preferred_element_type=jnp.float32)
              + b0[...])                                         # (S*B, 8H)
        hfin = run_layer(xw, whh0[...], slab_refs[0])

        # ---- layers 1..L-1: one K=4H dot on the previous layer's slab ----
        for l in range(1, num_layers):
            base = 4 + 3 * (l - 1)
            wl, whhl, bl = w_refs[base], w_refs[base + 1], w_refs[base + 2]
            xw = jnp.dot(slab_refs[l - 1][...], wl[...],
                         preferred_element_type=jnp.float32) + bl[...]
            hfin = run_layer(xw, whhl[...], slab_refs[l])

        # ---- attention over the last layer's slab (statically unrolled) ----
        slab = slab_refs[num_layers - 1][...]                    # (S*B, 4H)
        # final hidden masked into the slab lane layout: [h_f_fin, 0, 0, h_r_fin]
        hmask = jnp.concatenate(
            [hfin[:, 0:H], jnp.zeros((B, 2 * H), jnp.float32), hfin[:, H:2 * H]],
            axis=1)                                              # (B, 4H)
        scores = [jnp.sum(slab[u * B:(u + 1) * B, :] * hmask, axis=1, keepdims=True)
                  for u in range(S)]                             # S x (B, 1)
        m = scores[0]
        for u in range(1, S):
            m = jnp.maximum(m, scores[u])
        exps = [jnp.exp(s - m) for s in scores]
        den = exps[0]
        for u in range(1, S):
            den = den + exps[u]
        inv = pl.reciprocal(den, approx=True)                    # EUP slot
        acc = exps[0] * slab[0:B, :]
        for u in range(1, S):
            acc = acc + exps[u] * slab[u * B:(u + 1) * B, :]
        acc = acc * inv      # lanes [0:H]=attn_fwd, [3H:4H]=attn_rev (middle unused)

        # ---- fc([h_f_fin, h_r_fin, attn_f, attn_r]) + softmax ----
        # fc weights are pre-split so the slab/acc lane layout maps directly
        # (zero rows kill the unused middle lanes of acc).
        logits = (jnp.dot(hfin, fcw_hid_ref[...], preferred_element_type=jnp.float32)
                  + jnp.dot(acc, fcw_att_ref[...], preferred_element_type=jnp.float32)
                  + fcb_ref[...])
        logits = logits - jnp.max(logits, axis=1, keepdims=True)
        el = jnp.exp(logits)
        out_ref[...] = el / jnp.sum(el, axis=1, keepdims=True)   # exact normalization

    return kernel


# ----------------------------------------------------------------------------
# Wrapper: single gridless pallas_call (everything resident in VMEM)
# ----------------------------------------------------------------------------
def seq2seq_attention_forward(x_ids, params, *, num_layers):
    S, B = x_ids.shape
    table = params["embedding"]
    V, _E = table.shape
    H = params["packed"][0]["whh"].shape[0] // 2
    O = params["fc_b"].shape[-1]

    # token ids, time-major rows (row = t*B + b); col 0 = time t, col 1 = time S-1-t
    ids_f = x_ids.reshape(S * B, 1)
    ids_r = x_ids[::-1].reshape(S * B, 1)
    ids2 = jnp.concatenate([ids_f, ids_r], axis=1).astype(jnp.int32)

    inputs = [ids2, table]
    for l in range(num_layers):
        pk = params["packed"][l]
        inputs.extend(pk["wx"])                    # layer 0: 2 mats, layers>=1: 1 mat
        inputs.append(pk["whh"])
        inputs.append(pk["b"])
    inputs += [params["fc_w_hid"], params["fc_w_att"], params["fc_b"]]

    vmem = pl.BlockSpec(memory_space=pltpu.MemorySpace.VMEM)
    return pl.pallas_call(
        _make_fused_kernel(S, B, H, V, num_layers),
        out_shape=jax.ShapeDtypeStruct((B, O), jnp.float32),
        in_specs=[vmem] * len(inputs),
        out_specs=vmem,
        scratch_shapes=[pltpu.VMEM((S * B, 4 * H), jnp.float32)
                        for _ in range(num_layers)],
    )(*inputs)


# ----------------------------------------------------------------------------
# Deterministic parameters (PyTorch-style shapes/init) + packed kernel weights
# ----------------------------------------------------------------------------
def make_params(key, *, vocab, embed, hidden, layers, output_size):
    H = hidden
    # nn.Linear in_features = hidden*layers*(1+bidirectional) must equal the concat
    # width 4*hidden; as in the PyTorch module this is only consistent for layers == 2.
    assert layers * 2 * H == 4 * H, "fc shape only consistent for 2 layers"

    k_emb, key = jax.random.split(key)
    embedding = jax.random.normal(k_emb, (vocab, embed), jnp.float32)

    k = 1.0 / float(H) ** 0.5
    raw = []
    in_size = embed
    for _ in range(layers):
        dirs = []
        for _d in range(2):                        # 0 = forward, 1 = reverse
            key, k1, k2, k3, k4 = jax.random.split(key, 5)
            w_ih = jax.random.uniform(k1, (in_size, 4 * H), jnp.float32, -k, k)
            w_hh = jax.random.uniform(k2, (H, 4 * H), jnp.float32, -k, k)
            b_ih = jax.random.uniform(k3, (1, 4 * H), jnp.float32, -k, k)
            b_hh = jax.random.uniform(k4, (1, 4 * H), jnp.float32, -k, k)
            dirs.append((w_ih, w_hh, b_ih + b_hh))
        raw.append(dirs)
        in_size = 2 * H

    fc_in = H * layers * 2                         # == 4*hidden for layers == 2
    key, kw, kb = jax.random.split(key, 3)
    kk = 1.0 / float(fc_in) ** 0.5
    # fc_w rows: [0:2H] -> [h_f_fin | h_r_fin], [2H:3H] -> attn_f, [3H:4H] -> attn_r
    fc_w = jax.random.uniform(kw, (fc_in, output_size), jnp.float32, -kk, kk)
    fc_b = jax.random.uniform(kb, (1, output_size), jnp.float32, -kk, kk)

    # ------- packed weights for the fused kernel (gate-major lane layout) -------
    def interleave(wf, wr):
        # (K, 4H) x2 -> (K, 8H), cols [i_f i_r f_f f_r g_f g_r o_f o_r]
        cols = []
        for g in range(4):
            cols.append(wf[:, g * H:(g + 1) * H])
            cols.append(wr[:, g * H:(g + 1) * H])
        return jnp.concatenate(cols, axis=1)

    packed = []
    for l in range(layers):
        (wih_f, whh_f, b_f), (wih_r, whh_r, b_r) = raw[l]
        z_h = jnp.zeros((H, 4 * H), jnp.float32)
        whh_blk = jnp.concatenate([interleave(whh_f, z_h),
                                   interleave(z_h, whh_r)], axis=0)    # (2H, 8H)
        b_pk = interleave(b_f, b_r)                                     # (1, 8H)
        if l == 0:
            z_e = jnp.zeros_like(wih_f)                                 # (E, 4H)
            wx = (interleave(wih_f, z_e),      # emb(time t)      -> fwd gate cols
                  interleave(z_e, wih_r))      # emb(time S-1-t)  -> rev gate cols
        else:
            # previous-layer slab lanes: [h_f(t) | h_r(S-1-t) | h_f(S-1-t) | h_r(t)]
            w_aug = jnp.concatenate([
                interleave(wih_f[0:H], z_h),           # h_f(t)     -> fwd gates
                interleave(z_h, wih_r[H:2 * H]),       # h_r(S-1-t) -> rev gates
                interleave(z_h, wih_r[0:H]),           # h_f(S-1-t) -> rev gates
                interleave(wih_f[H:2 * H], z_h),       # h_r(t)     -> fwd gates
            ], axis=0)                                                  # (4H, 8H)
            wx = (w_aug,)
        packed.append({"wx": wx, "whh": whh_blk, "b": b_pk})

    fc_w_hid = fc_w[0:2 * H]                                            # (2H, O)
    fc_w_att = jnp.concatenate(
        [fc_w[2 * H:3 * H],
         jnp.zeros((2 * H, output_size), jnp.float32),
         fc_w[3 * H:4 * H]], axis=0)                                    # (4H, O)

    return {"embedding": embedding, "raw": raw, "packed": packed,
            "fc_w": fc_w, "fc_b": fc_b,
            "fc_w_hid": fc_w_hid, "fc_w_att": fc_w_att}


# ----------------------------------------------------------------------------
# Pure-JAX reference (direct port of the PyTorch forward) for verification.
# ----------------------------------------------------------------------------
def reference_forward(x_ids, params, *, num_layers):
    emb = params["embedding"][x_ids]               # (S, B, E)
    S, B, _ = emb.shape
    H = params["raw"][0][0][1].shape[0]
    x = emb
    finals = []
    for l in range(num_layers):
        outs, finals = [], []
        for d in range(2):
            wih, whh, b = params["raw"][l][d]
            seq = x if d == 0 else x[::-1]
            h = jnp.zeros((B, H), jnp.float32)
            c = jnp.zeros((B, H), jnp.float32)
            hs = []
            for t in range(S):
                g = seq[t] @ wih + h @ whh + b
                i = jax.nn.sigmoid(g[:, :H])
                f = jax.nn.sigmoid(g[:, H:2 * H])
                gg = jnp.tanh(g[:, 2 * H:3 * H])
                o = jax.nn.sigmoid(g[:, 3 * H:])
                c = f * c + i * gg
                h = o * jnp.tanh(c)
                hs.append(h)
            hseq = jnp.stack(hs)
            if d == 1:
                hseq = hseq[::-1]
            outs.append(hseq)
            finals.append(h)
        x = jnp.concatenate(outs, axis=-1)         # (S, B, 2H)
    final_hidden = jnp.concatenate(finals, axis=1)  # (B, 2H), last layer only
    rnn_output = jnp.transpose(x, (1, 0, 2))        # (B, S, 2H)
    scores = jnp.einsum('bsd,bd->bs', rnn_output, final_hidden)
    w = jax.nn.softmax(scores, axis=1)
    attn = jnp.einsum('bs,bsd->bd', w, rnn_output)
    feat = jnp.concatenate([final_hidden, attn], axis=1)
    logits = feat @ params["fc_w"] + params["fc_b"]
    return jax.nn.softmax(logits, axis=1)


if __name__ == "__main__":
    # config: embed_size=32, hidden_size=32, hidden_layers=2, bidirectional=True,
    #         output_size=4, vocab=50, seq_len=8, batch=2
    VOCAB, EMBED, HIDDEN, LAYERS, OUT = 50, 32, 32, 2, 4
    SEQ, BATCH = 8, 2

    key = jax.random.PRNGKey(0)
    k_x, k_p = jax.random.split(key)
    x_ids = jax.random.randint(k_x, (SEQ, BATCH), 0, VOCAB, dtype=jnp.int32)
    params = make_params(k_p, vocab=VOCAB, embed=EMBED, hidden=HIDDEN,
                         layers=LAYERS, output_size=OUT)

    fwd = jax.jit(functools.partial(seq2seq_attention_forward, num_layers=LAYERS))
    out = jax.block_until_ready(fwd(x_ids, params))

    assert out.shape == (BATCH, OUT), out.shape
    assert bool(jnp.all(jnp.isfinite(out)))
    assert bool(jnp.allclose(jnp.sum(out, axis=1), 1.0, atol=1e-5))

    with jax.default_matmul_precision("highest"):
        ref = jax.block_until_ready(
            reference_forward(x_ids, params, num_layers=LAYERS))
    # 2e-3 tolerance: small margin for the EUP approx-reciprocal in the attention softmax.
    assert bool(jnp.allclose(out, ref, atol=2e-3, rtol=2e-3)), (out, ref)
    print("KERNEL_OK")
</pallas_src>

<mosaic_0001>
module attributes {stable_mosaic.version = 11 : i64} {
  func.func @kernel(%arg0: memref<16x2xi32, #tpu.memory_space<vmem>>, %arg1: memref<50x32xf32, #tpu.memory_space<vmem>>, %arg2: memref<32x256xf32, #tpu.memory_space<vmem>>, %arg3: memref<32x256xf32, #tpu.memory_space<vmem>>, %arg4: memref<64x256xf32, #tpu.memory_space<vmem>>, %arg5: memref<1x256xf32, #tpu.memory_space<vmem>>, %arg6: memref<128x256xf32, #tpu.memory_space<vmem>>, %arg7: memref<64x256xf32, #tpu.memory_space<vmem>>, %arg8: memref<1x256xf32, #tpu.memory_space<vmem>>, %arg9: memref<64x4xf32, #tpu.memory_space<vmem>>, %arg10: memref<128x4xf32, #tpu.memory_space<vmem>>, %arg11: memref<1x4xf32, #tpu.memory_space<vmem>>, %arg12: memref<2x4xf32, #tpu.memory_space<vmem>>, %arg13: memref<16x128xf32, #tpu.memory_space<vmem>>, %arg14: memref<16x128xf32, #tpu.memory_space<vmem>>) attributes {dimension_semantics = [], scalar_prefetch = 0 : i64, scratch_operands = 2 : i64, tpu.core_type = #tpu.core_type<tc>} {
    %c0 = arith.constant 0 : index
    %c0_0 = arith.constant 0 : index
    %0 = vector.load %arg0[%c0, %c0_0] : memref<16x2xi32, #tpu.memory_space<vmem>>, vector<16x2xi32>
    %1 = tpu.iota {dimensions = array<i32: 1>} : vector<16x50xi32>
    %2 = vector.extract_strided_slice %0 {offsets = [0, 0], sizes = [16, 1], strides = [1, 1]} : vector<16x2xi32> to vector<16x1xi32>
    %3 = vector.broadcast %2 : vector<16x1xi32> to vector<16x50xi32>
    %4 = arith.cmpi eq, %1, %3 : vector<16x50xi32>
    %5 = arith.extui %4 : vector<16x50xi1> to vector<16x50xi32>
    %6 = arith.sitofp %5 : vector<16x50xi32> to vector<16x50xf32>
    %7 = vector.extract_strided_slice %0 {offsets = [0, 1], sizes = [16, 1], strides = [1, 1]} : vector<16x2xi32> to vector<16x1xi32>
    %8 = vector.broadcast %7 : vector<16x1xi32> to vector<16x50xi32>
    %9 = arith.cmpi eq, %1, %8 : vector<16x50xi32>
    %10 = arith.extui %9 : vector<16x50xi1> to vector<16x50xi32>
    %11 = arith.sitofp %10 : vector<16x50xi32> to vector<16x50xf32>
    %c0_1 = arith.constant 0 : index
    %c0_2 = arith.constant 0 : index
    %12 = vector.load %arg1[%c0_1, %c0_2] : memref<50x32xf32, #tpu.memory_space<vmem>>, vector<50x32xf32>
    %cst = arith.constant dense<0.000000e+00> : vector<16x32xf32>
    %13 = tpu.matmul %6, %12, %cst {dimension_numbers = #tpu.dot_dimension_numbers<[1], [0], [0], [1], [0, 0, 1, 1], [], []>} : vector<16x50xf32>, vector<50x32xf32>, vector<16x32xf32> -> vector<16x32xf32>
    %cst_3 = arith.constant dense<0.000000e+00> : vector<16x32xf32>
    %14 = tpu.matmul %11, %12, %cst_3 {dimension_numbers = #tpu.dot_dimension_numbers<[1], [0], [0], [1], [0, 0, 1, 1], [], []>} : vector<16x50xf32>, vector<50x32xf32>, vector<16x32xf32> -> vector<16x32xf32>
    %c0_4 = arith.constant 0 : index
    %c0_5 = arith.constant 0 : index
    %15 = vector.load %arg2[%c0_4, %c0_5] : memref<32x256xf32, #tpu.memory_space<vmem>>, vector<32x256xf32>
    %cst_6 = arith.constant dense<0.000000e+00> : vector<16x256xf32>
    %16 = tpu.matmul %13, %15, %cst_6 {dimension_numbers = #tpu.dot_dimension_numbers<[1], [0], [0], [1], [0, 0, 1, 1], [], []>} : vector<16x32xf32>, vector<32x256xf32>, vector<16x256xf32> -> vector<16x256xf32>
    %c0_7 = arith.constant 0 : index
    %c0_8 = arith.constant 0 : index
    %17 = vector.load %arg3[%c0_7, %c0_8] : memref<32x256xf32, #tpu.memory_space<vmem>>, vector<32x256xf32>
    %cst_9 = arith.constant dense<0.000000e+00> : vector<16x256xf32>
    %18 = tpu.matmul %14, %17, %cst_9 {dimension_numbers = #tpu.dot_dimension_numbers<[1], [0], [0], [1], [0, 0, 1, 1], [], []>} : vector<16x32xf32>, vector<32x256xf32>, vector<16x256xf32> -> vector<16x256xf32>
    %19 = arith.addf %16, %18 : vector<16x256xf32>
    %c0_10 = arith.constant 0 : index
    %c0_11 = arith.constant 0 : index
    %20 = vector.load %arg5[%c0_10, %c0_11] : memref<1x256xf32, #tpu.memory_space<vmem>>, vector<1x256xf32>
    %21 = vector.broadcast %20 : vector<1x256xf32> to vector<16x256xf32>
    %22 = arith.addf %19, %21 : vector<16x256xf32>
    %c0_12 = arith.constant 0 : index
    %c0_13 = arith.constant 0 : index
    %23 = vector.load %arg4[%c0_12, %c0_13] : memref<64x256xf32, #tpu.memory_space<vmem>>, vector<64x256xf32>
    %cst_14 = arith.constant 0.000000e+00 : f32
    %24 = vector.broadcast %cst_14 : f32 to vector<2x64xf32>
    %cst_15 = arith.constant 0.000000e+00 : f32
    %25 = vector.broadcast %cst_15 : f32 to vector<2x64xf32>
    %26 = vector.extract_strided_slice %22 {offsets = [0, 0], sizes = [2, 256], strides = [1, 1]} : vector<16x256xf32> to vector<2x256xf32>
    %cst_16 = arith.constant dense<0.000000e+00> : vector<2x256xf32>
    %27 = tpu.matmul %24, %23, %cst_16 {dimension_numbers = #tpu.dot_dimension_numbers<[1], [0], [0], [1], [0, 0, 1, 1], [], []>} : vector<2x64xf32>, vector<64x256xf32>, vector<2x256xf32> -> vector<2x256xf32>
    %28 = arith.addf %26, %27 : vector<2x256xf32>
    %29 = arith.negf %28 : vector<2x256xf32>
    %30 = math.exp %29 : vector<2x256xf32>
    %cst_17 = arith.constant 1.000000e+00 : f32
    %31 = vector.broadcast %cst_17 : f32 to vector<2x256xf32>
    %32 = arith.addf %31, %30 : vector<2x256xf32>
    %33 = arith.divf %31, %32 : vector<2x256xf32>
    %34 = math.tanh %28 : vector<2x256xf32>
    %35 = vector.extract_strided_slice %33 {offsets = [0, 0], sizes = [2, 64], strides = [1, 1]} : vector<2x256xf32> to vector<2x64xf32>
    %36 = vector.extract_strided_slice %33 {offsets = [0, 64], sizes = [2, 64], strides = [1, 1]} : vector<2x256xf32> to vector<2x64xf32>
    %37 = vector.extract_strided_slice %34 {offsets = [0, 128], sizes = [2, 64], strides = [1, 1]} : vector<2x256xf32> to vector<2x64xf32>
    %38 = vector.extract_strided_slice %33 {offsets = [0, 192], sizes = [2, 64], strides = [1, 1]} : vector<2x256xf32> to vector<2x64xf32>
    %39 = arith.mulf %36, %25 : vector<2x64xf32>
    %40 = arith.mulf %35, %37 : vector<2x64xf32>
    %41 = arith.addf %39, %40 : vector<2x64xf32>
    %42 = math.tanh %41 : vector<2x64xf32>
    %43 = arith.mulf %38, %42 : vector<2x64xf32>
    %c0_18 = arith.constant 0 : index
    %c0_19 = arith.constant 0 : index
    %44 = vector.load %arg13[%c0_18, %c0_19] : memref<16x128xf32, #tpu.memory_space<vmem>>, vector<2x64xf32>
    tpu.vector_store %arg13[%c0_18, %c0_19], %43 {strides = array<i32>} : memref<16x128xf32, #tpu.memory_space<vmem>>, vector<2x64xf32>,
    %c14 = arith.constant 14 : index
    %c64 = arith.constant 64 : index
    %45 = vector.load %arg13[%c14, %c64] : memref<16x128xf32, #tpu.memory_space<vmem>>, vector<2x64xf32>
    tpu.vector_store %arg13[%c14, %c64], %43 {strides = array<i32>} : memref<16x128xf32, #tpu.memory_space<vmem>>, vector<2x64xf32>,
    %46 = vector.extract_strided_slice %22 {offsets = [2, 0], sizes = [2, 256], strides = [1, 1]} : vector<16x256xf32> to vector<2x256xf32>
    %cst_20 = arith.constant dense<0.000000e+00> : vector<2x256xf32>
    %47 = tpu.matmul %43, %23, %cst_20 {dimension_numbers = #tpu.dot_dimension_numbers<[1], [0], [0], [1], [0, 0, 1, 1], [], []>} : vector<2x64xf32>, vector<64x256xf32>, vector<2x256xf32> -> vector<2x256xf32>
    %48 = arith.addf %46, %47 : vector<2x256xf32>
    %49 = arith.negf %48 : vector<2x256xf32>
    %50 = math.exp %49 : vector<2x256xf32>
    %cst_21 = arith.constant 1.000000e+00 : f32
    %51 = vector.broadcast %cst_21 : f32 to vector<2x256xf32>
    %52 = arith.addf %51, %50 : vector<2x256xf32>
    %53 = arith.divf %51, %52 : vector<2x256xf32>
    %54 = math.tanh %48 : vector<2x256xf32>
    %55 = vector.extract_strided_slice %53 {offsets = [0, 0], sizes = [2, 64], strides = [1, 1]} : vector<2x256xf32> to vector<2x64xf32>
    %56 = vector.extract_strided_slice %53 {offsets = [0, 64], sizes = [2, 64], strides = [1, 1]} : vector<2x256xf32> to vector<2x64xf32>
    %57 = vector.extract_strided_slice %54 {offsets = [0, 128], sizes = [2, 64], strides = [1, 1]} : vector<2x256xf32> to vector<2x64xf32>
    %58 = vector.extract_strided_slice %53 {offsets = [0, 192], sizes = [2, 64], strides = [1, 1]} : vector<2x256xf32> to vector<2x64xf32>
    %59 = arith.mulf %56, %41 : vector<2x64xf32>
    %60 = arith.mulf %55, %57 : vector<2x64xf32>
    %61 = arith.addf %59, %60 : vector<2x64xf32>
    %62 = math.tanh %61 : vector<2x64xf32>
    %63 = arith.mulf %58, %62 : vector<2x64xf32>
    %c2 = arith.constant 2 : index
    %c0_22 = arith.constant 0 : index
    %64 = vector.load %arg13[%c2, %c0_22] : memref<16x128xf32, #tpu.memory_space<vmem>>, vector<2x64xf32>
    tpu.vector_store %arg13[%c2, %c0_22], %63 {strides = array<i32>} : memref<16x128xf32, #tpu.memory_space<vmem>>, vector<2x64xf32>,
    %c12 = arith.constant 12 : index
    %c64_23 = arith.constant 64 : index
    %65 = vector.load %arg13[%c12, %c64_23] : memref<16x128xf32, #tpu.memory_space<vmem>>, vector<2x64xf32>
    tpu.vector_store %arg13[%c12, %c64_23], %63 {strides = array<i32>} : memref<16x128xf32, #tpu.memory_space<vmem>>, vector<2x64xf32>,
    %66 = vector.extract_strided_slice %22 {offsets = [4, 0], sizes = [2, 256], strides = [1, 1]} : vector<16x256xf32> to vector<2x256xf32>
    %cst_24 = arith.constant dense<0.000000e+00> : vector<2x256xf32>
    %67 = tpu.matmul %63, %23, %cst_24 {dimension_numbers = #tpu.dot_dimension_numbers<[1], [0], [0], [1], [0, 0, 1, 1], [], []>} : vector<2x64xf32>, vector<64x256xf32>, vector<2x256xf32> -> vector<2x256xf32>
    %68 = arith.addf %66, %67 : vector<2x256xf32>
    %69 = arith.negf %68 : vector<2x256xf32>
    %70 = math.exp %69 : vector<2x256xf32>
    %cst_25 = arith.constant 1.000000e+00 : f32
    %71 = vector.broadcast %cst_25 : f32 to vector<2x256xf32>
    %72 = arith.addf %71, %70 : vector<2x256xf32>
    %73 = arith.divf %71, %72 : vector<2x256xf32>
    %74 = math.tanh %68 : vector<2x256xf32>
    %75 = vector.extract_strided_slice %73 {offsets = [0, 0], sizes = [2, 64], strides = [1, 1]} : vector<2x256xf32> to vector<2x64xf32>
    %76 = vector.extract_strided_slice %73 {offsets = [0, 64], sizes = [2, 64], strides = [1, 1]} : vector<2x256xf32> to vector<2x64xf32>
    %77 = vector.extract_strided_slice %74 {offsets = [0, 128], sizes = [2, 64], strides = [1, 1]} : vector<2x256xf32> to vector<2x64xf32>
    %78 = vector.extract_strided_slice %73 {offsets = [0, 192], sizes = [2, 64], strides = [1, 1]} : vector<2x256xf32> to vector<2x64xf32>
    %79 = arith.mulf %76, %61 : vector<2x64xf32>
    %80 = arith.mulf %75, %77 : vector<2x64xf32>
    %81 = arith.addf %79, %80 : vector<2x64xf32>
    %82 = math.tanh %81 : vector<2x64xf32>
    %83 = arith.mulf %78, %82 : vector<2x64xf32>
    %c4 = arith.constant 4 : index
    %c0_26 = arith.constant 0 : index
    %84 = vector.load %arg13[%c4, %c0_26] : memref<16x128xf32, #tpu.memory_space<vmem>>, vector<2x64xf32>
    tpu.vector_store %arg13[%c4, %c0_26], %83 {strides = array<i32>} : memref<16x128xf32, #tpu.memory_space<vmem>>, vector<2x64xf32>,
    %c10 = arith.constant 10 : index
    %c64_27 = arith.constant 64 : index
    %85 = vector.load %arg13[%c10, %c64_27] : memref<16x128xf32, #tpu.memory_space<vmem>>, vector<2x64xf32>
    tpu.vector_store %arg13[%c10, %c64_27], %83 {strides = array<i32>} : memref<16x128xf32, #tpu.memory_space<vmem>>, vector<2x64xf32>,
    %86 = vector.extract_strided_slice %22 {offsets = [6, 0], sizes = [2, 256], strides = [1, 1]} : vector<16x256xf32> to vector<2x256xf32>
    %cst_28 = arith.constant dense<0.000000e+00> : vector<2x256xf32>
    %87 = tpu.matmul %83, %23, %cst_28 {dimension_numbers = #tpu.dot_dimension_numbers<[1], [0], [0], [1], [0, 0, 1, 1], [], []>} : vector<2x64xf32>, vector<64x256xf32>, vector<2x256xf32> -> vector<2x256xf32>
    %88 = arith.addf %86, %87 : vector<2x256xf32>
    %89 = arith.negf %88 : vector<2x256xf32>
    %90 = math.exp %89 : vector<2x256xf32>
    %cst_29 = arith.constant 1.000000e+00 : f32
    %91 = vector.broadcast %cst_29 : f32 to vector<2x256xf32>
    %92 = arith.addf %91, %90 : vector<2x256xf32>
    %93 = arith.divf %91, %92 : vector<2x256xf32>
    %94 = math.tanh %88 : vector<2x256xf32>
    %95 = vector.extract_strided_slice %93 {offsets = [0, 0], sizes = [2, 64], strides = [1, 1]} : vector<2x256xf32> to vector<2x64xf32>
    %96 = vector.extract_strided_slice %93 {offsets = [0, 64], sizes = [2, 64], strides = [1, 1]} : vector<2x256xf32> to vector<2x64xf32>
    %97 = vector.extract_strided_slice %94 {offsets = [0, 128], sizes = [2, 64], strides = [1, 1]} : vector<2x256xf32> to vector<2x64xf32>
    %98 = vector.extract_strided_slice %93 {offsets = [0, 192], sizes = [2, 64], strides = [1, 1]} : vector<2x256xf32> to vector<2x64xf32>
    %99 = arith.mulf %96, %81 : vector<2x64xf32>
    %100 = arith.mulf %95, %97 : vector<2x64xf32>
    %101 = arith.addf %99, %100 : vector<2x64xf32>
    %102 = math.tanh %101 : vector<2x64xf32>
    %103 = arith.mulf %98, %102 : vector<2x64xf32>
    %c6 = arith.constant 6 : index
    %c0_30 = arith.constant 0 : index
    %104 = vector.load %arg13[%c6, %c0_30] : memref<16x128xf32, #tpu.memory_space<vmem>>, vector<2x64xf32>
    tpu.vector_store %arg13[%c6, %c0_30], %103 {strides = array<i32>} : memref<16x128xf32, #tpu.memory_space<vmem>>, vector<2x64xf32>,
    %c8 = arith.constant 8 : index
    %c64_31 = arith.constant 64 : index
    %105 = vector.load %arg13[%c8, %c64_31] : memref<16x128xf32, #tpu.memory_space<vmem>>, vector<2x64xf32>
    tpu.vector_store %arg13[%c8, %c64_31], %103 {strides = array<i32>} : memref<16x128xf32, #tpu.memory_space<vmem>>, vector<2x64xf32>,
    %106 = vector.extract_strided_slice %22 {offsets = [8, 0], sizes = [2, 256], strides = [1, 1]} : vector<16x256xf32> to vector<2x256xf32>
    %cst_32 = arith.constant dense<0.000000e+00> : vector<2x256xf32>
    %107 = tpu.matmul %103, %23, %cst_32 {dimension_numbers = #tpu.dot_dimension_numbers<[1], [0], [0], [1], [0, 0, 1, 1], [], []>} : vector<2x64xf32>, vector<64x256xf32>, vector<2x256xf32> -> vector<2x256xf32>
    %108 = arith.addf %106, %107 : vector<2x256xf32>
    %109 = arith.negf %108 : vector<2x256xf32>
    %110 = math.exp %109 : vector<2x256xf32>
    %cst_33 = arith.constant 1.000000e+00 : f32
    %111 = vector.broadcast %cst_33 : f32 to vector<2x256xf32>
    %112 = arith.addf %111, %110 : vector<2x256xf32>
    %113 = arith.divf %111, %112 : vector<2x256xf32>
    %114 = math.tanh %108 : vector<2x256xf32>
    %115 = vector.extract_strided_slice %113 {offsets = [0, 0], sizes = [2, 64], strides = [1, 1]} : vector<2x256xf32> to vector<2x64xf32>
    %116 = vector.extract_strided_slice %113 {offsets = [0, 64], sizes = [2, 64], strides = [1, 1]} : vector<2x256xf32> to vector<2x64xf32>
    %117 = vector.extract_strided_slice %114 {offsets = [0, 128], sizes = [2, 64], strides = [1, 1]} : vector<2x256xf32> to vector<2x64xf32>
    %118 = vector.extract_strided_slice %113 {offsets = [0, 192], sizes = [2, 64], strides = [1, 1]} : vector<2x256xf32> to vector<2x64xf32>
    %119 = arith.mulf %116, %101 : vector<2x64xf32>
    %120 = arith.mulf %115, %117 : vector<2x64xf32>
    %121 = arith.addf %119, %120 : vector<2x64xf32>
    %122 = math.tanh %121 : vector<2x64xf32>
    %123 = arith.mulf %118, %122 : vector<2x64xf32>
    %c8_34 = arith.constant 8 : index
    %c0_35 = arith.constant 0 : index
    %124 = vector.load %arg13[%c8_34, %c0_35] : memref<16x128xf32, #tpu.memory_space<vmem>>, vector<2x64xf32>
    tpu.vector_store %arg13[%c8_34, %c0_35], %123 {strides = array<i32>} : memref<16x128xf32, #tpu.memory_space<vmem>>, vector<2x64xf32>,
    %c6_36 = arith.constant 6 : index
    %c64_37 = arith.constant 64 : index
    %125 = vector.load %arg13[%c6_36, %c64_37] : memref<16x128xf32, #tpu.memory_space<vmem>>, vector<2x64xf32>
    tpu.vector_store %arg13[%c6_36, %c64_37], %123 {strides = array<i32>} : memref<16x128xf32, #tpu.memory_space<vmem>>, vector<2x64xf32>,
    %126 = vector.extract_strided_slice %22 {offsets = [10, 0], sizes = [2, 256], strides = [1, 1]} : vector<16x256xf32> to vector<2x256xf32>
    %cst_38 = arith.constant dense<0.000000e+00> : vector<2x256xf32>
    %127 = tpu.matmul %123, %23, %cst_38 {dimension_numbers = #tpu.dot_dimension_numbers<[1], [0], [0], [1], [0, 0, 1, 1], [], []>} : vector<2x64xf32>, vector<64x256xf32>, vector<2x256xf32> -> vector<2x256xf32>
    %128 = arith.addf %126, %127 : vector<2x256xf32>
    %129 = arith.negf %128 : vector<2x256xf32>
    %130 = math.exp %129 : vector<2x256xf32>
    %cst_39 = arith.constant 1.000000e+00 : f32
    %131 = vector.broadcast %cst_39 : f32 to vector<2x256xf32>
    %132 = arith.addf %131, %130 : vector<2x256xf32>
    %133 = arith.divf %131, %132 : vector<2x256xf32>
    %134 = math.tanh %128 : vector<2x256xf32>
    %135 = vector.extract_strided_slice %133 {offsets = [0, 0], sizes = [2, 64], strides = [1, 1]} : vector<2x256xf32> to vector<2x64xf32>
    %136 = vector.extract_strided_slice %133 {offsets = [0, 64], sizes = [2, 64], strides = [1, 1]} : vector<2x256xf32> to vector<2x64xf32>
    %137 = vector.extract_strided_slice %134 {offsets = [0, 128], sizes = [2, 64], strides = [1, 1]} : vector<2x256xf32> to vector<2x64xf32>
    %138 = vector.extract_strided_slice %133 {offsets = [0, 192], sizes = [2, 64], strides = [1, 1]} : vector<2x256xf32> to vector<2x64xf32>
    %139 = arith.mulf %136, %121 : vector<2x64xf32>
    %140 = arith.mulf %135, %137 : vector<2x64xf32>
    %141 = arith.addf %139, %140 : vector<2x64xf32>
    %142 = math.tanh %141 : vector<2x64xf32>
    %143 = arith.mulf %138, %142 : vector<2x64xf32>
    %c10_40 = arith.constant 10 : index
    %c0_41 = arith.constant 0 : index
    %144 = vector.load %arg13[%c10_40, %c0_41] : memref<16x128xf32, #tpu.memory_space<vmem>>, vector<2x64xf32>
    tpu.vector_store %arg13[%c10_40, %c0_41], %143 {strides = array<i32>} : memref<16x128xf32, #tpu.memory_space<vmem>>, vector<2x64xf32>,
    %c4_42 = arith.constant 4 : index
    %c64_43 = arith.constant 64 : index
    %145 = vector.load %arg13[%c4_42, %c64_43] : memref<16x128xf32, #tpu.memory_space<vmem>>, vector<2x64xf32>
    tpu.vector_store %arg13[%c4_42, %c64_43], %143 {strides = array<i32>} : memref<16x128xf32, #tpu.memory_space<vmem>>, vector<2x64xf32>,
    %146 = vector.extract_strided_slice %22 {offsets = [12, 0], sizes = [2, 256], strides = [1, 1]} : vector<16x256xf32> to vector<2x256xf32>
    %cst_44 = arith.constant dense<0.000000e+00> : vector<2x256xf32>
    %147 = tpu.matmul %143, %23, %cst_44 {dimension_numbers = #tpu.dot_dimension_numbers<[1], [0], [0], [1], [0, 0, 1, 1], [], []>} : vector<2x64xf32>, vector<64x256xf32>, vector<2x256xf32> -> vector<2x256xf32>
    %148 = arith.addf %146, %147 : vector<2x256xf32>
    %149 = arith.negf %148 : vector<2x256xf32>
    %150 = math.exp %149 : vector<2x256xf32>
    %cst_45 = arith.constant 1.000000e+00 : f32
    %151 = vector.broadcast %cst_45 : f32 to vector<2x256xf32>
    %152 = arith.addf %151, %150 : vector<2x256xf32>
    %153 = arith.divf %151, %152 : vector<2x256xf32>
    %154 = math.tanh %148 : vector<2x256xf32>
    %155 = vector.extract_strided_slice %153 {offsets = [0, 0], sizes = [2, 64], strides = [1, 1]} : vector<2x256xf32> to vector<2x64xf32>
    %156 = vector.extract_strided_slice %153 {offsets = [0, 64], sizes = [2, 64], strides = [1, 1]} : vector<2x256xf32> to vector<2x64xf32>
    %157 = vector.extract_strided_slice %154 {offsets = [0, 128], sizes = [2, 64], strides = [1, 1]} : vector<2x256xf32> to vector<2x64xf32>
    %158 = vector.extract_strided_slice %153 {offsets = [0, 192], sizes = [2, 64], strides = [1, 1]} : vector<2x256xf32> to vector<2x64xf32>
    %159 = arith.mulf %156, %141 : vector<2x64xf32>
    %160 = arith.mulf %155, %157 : vector<2x64xf32>
    %161 = arith.addf %159, %160 : vector<2x64xf32>
    %162 = math.tanh %161 : vector<2x64xf32>
    %163 = arith.mulf %158, %162 : vector<2x64xf32>
    %c12_46 = arith.constant 12 : index
    %c0_47 = arith.constant 0 : index
    %164 = vector.load %arg13[%c12_46, %c0_47] : memref<16x128xf32, #tpu.memory_space<vmem>>, vector<2x64xf32>
    tpu.vector_store %arg13[%c12_46, %c0_47], %163 {strides = array<i32>} : memref<16x128xf32, #tpu.memory_space<vmem>>, vector<2x64xf32>,
    %c2_48 = arith.constant 2 : index
    %c64_49 = arith.constant 64 : index
    %165 = vector.load %arg13[%c2_48, %c64_49] : memref<16x128xf32, #tpu.memory_space<vmem>>, vector<2x64xf32>
    tpu.vector_store %arg13[%c2_48, %c64_49], %163 {strides = array<i32>} : memref<16x128xf32, #tpu.memory_space<vmem>>, vector<2x64xf32>,
    %166 = vector.extract_strided_slice %22 {offsets = [14, 0], sizes = [2, 256], strides = [1, 1]} : vector<16x256xf32> to vector<2x256xf32>
    %cst_50 = arith.constant dense<0.000000e+00> : vector<2x256xf32>
    %167 = tpu.matmul %163, %23, %cst_50 {dimension_numbers = #tpu.dot_dimension_numbers<[1], [0], [0], [1], [0, 0, 1, 1], [], []>} : vector<2x64xf32>, vector<64x256xf32>, vector<2x256xf32> -> vector<2x256xf32>
    %168 = arith.addf %166, %167 : vector<2x256xf32>
    %169 = arith.negf %168 : vector<2x256xf32>
    %170 = math.exp %169 : vector<2x256xf32>
    %cst_51 = arith.constant 1.000000e+00 : f32
    %171 = vector.broadcast %cst_51 : f32 to vector<2x256xf32>
    %172 = arith.addf %171, %170 : vector<2x256xf32>
    %173 = arith.divf %171, %172 : vector<2x256xf32>
    %174 = math.tanh %168 : vector<2x256xf32>
    %175 = vector.extract_strided_slice %173 {offsets = [0, 0], sizes = [2, 64], strides = [1, 1]} : vector<2x256xf32> to vector<2x64xf32>
    %176 = vector.extract_strided_slice %173 {offsets = [0, 64], sizes = [2, 64], strides = [1, 1]} : vector<2x256xf32> to vector<2x64xf32>
    %177 = vector.extract_strided_slice %174 {offsets = [0, 128], sizes = [2, 64], strides = [1, 1]} : vector<2x256xf32> to vector<2x64xf32>
    %178 = vector.extract_strided_slice %173 {offsets = [0, 192], sizes = [2, 64], strides = [1, 1]} : vector<2x256xf32> to vector<2x64xf32>
    %179 = arith.mulf %176, %161 : vector<2x64xf32>
    %180 = arith.mulf %175, %177 : vector<2x64xf32>
    %181 = arith.addf %179, %180 : vector<2x64xf32>
    %182 = math.tanh %181 : vector<2x64xf32>
    %183 = arith.mulf %178, %182 : vector<2x64xf32>
    %c14_52 = arith.constant 14 : index
    %c0_53 = arith.constant 0 : index
    %184 = vector.load %arg13[%c14_52, %c0_53] : memref<16x128xf32, #tpu.memory_space<vmem>>, vector<2x64xf32>
    tpu.vector_store %arg13[%c14_52, %c0_53], %183 {strides = array<i32>} : memref<16x128xf32, #tpu.memory_space<vmem>>, vector<2x64xf32>,
    %c0_54 = arith.constant 0 : index
    %c64_55 = arith.constant 64 : index
    %185 = vector.load %arg13[%c0_54, %c64_55] : memref<16x128xf32, #tpu.memory_space<vmem>>, vector<2x64xf32>
    tpu.vector_store %arg13[%c0_54, %c64_55], %183 {strides = array<i32>} : memref<16x128xf32, #tpu.memory_space<vmem>>, vector<2x64xf32>,
    %c0_56 = arith.constant 0 : index
    %c0_57 = arith.constant 0 : index
    %186 = vector.load %arg13[%c0_56, %c0_57] : memref<16x128xf32, #tpu.memory_space<vmem>>, vector<16x128xf32>
    %c0_58 = arith.constant 0 : index
    %c0_59 = arith.constant 0 : index
    %187 = vector.load %arg6[%c0_58, %c0_59] : memref<128x256xf32, #tpu.memory_space<vmem>>, vector<128x256xf32>
    %cst_60 = arith.constant dense<0.000000e+00> : vector<16x256xf32>
    %188 = tpu.matmul %186, %187, %cst_60 {dimension_numbers = #tpu.dot_dimension_numbers<[1], [0], [0], [1], [0, 0, 1, 1], [], []>} : vector<16x128xf32>, vector<128x256xf32>, vector<16x256xf32> -> vector<16x256xf32>
    %c0_61 = arith.constant 0 : index
    %c0_62 = arith.constant 0 : index
    %189 = vector.load %arg8[%c0_61, %c0_62] : memref<1x256xf32, #tpu.memory_space<vmem>>, vector<1x256xf32>
    %190 = vector.broadcast %189 : vector<1x256xf32> to vector<16x256xf32>
    %191 = arith.addf %188, %190 : vector<16x256xf32>
    %c0_63 = arith.constant 0 : index
    %c0_64 = arith.constant 0 : index
    %192 = vector.load %arg7[%c0_63, %c0_64] : memref<64x256xf32, #tpu.memory_space<vmem>>, vector<64x256xf32>
    %cst_65 = arith.constant 0.000000e+00 : f32
    %193 = vector.broadcast %cst_65 : f32 to vector<2x64xf32>
    %cst_66 = arith.constant 0.000000e+00 : f32
    %194 = vector.broadcast %cst_66 : f32 to vector<2x64xf32>
    %195 = vector.extract_strided_slice %191 {offsets = [0, 0], sizes = [2, 256], strides = [1, 1]} : vector<16x256xf32> to vector<2x256xf32>
    %cst_67 = arith.constant dense<0.000000e+00> : vector<2x256xf32>
    %196 = tpu.matmul %193, %192, %cst_67 {dimension_numbers = #tpu.dot_dimension_numbers<[1], [0], [0], [1], [0, 0, 1, 1], [], []>} : vector<2x64xf32>, vector<64x256xf32>, vector<2x256xf32> -> vector<2x256xf32>
    %197 = arith.addf %195, %196 : vector<2x256xf32>
    %198 = arith.negf %197 : vector<2x256xf32>
    %199 = math.exp %198 : vector<2x256xf32>
    %cst_68 = arith.constant 1.000000e+00 : f32
    %200 = vector.broadcast %cst_68 : f32 to vector<2x256xf32>
    %201 = arith.addf %200, %199 : vector<2x256xf32>
    %202 = arith.divf %200, %201 : vector<2x256xf32>
    %203 = math.tanh %197 : vector<2x256xf32>
    %204 = vector.extract_strided_slice %202 {offsets = [0, 0], sizes = [2, 64], strides = [1, 1]} : vector<2x256xf32> to vector<2x64xf32>
    %205 = vector.extract_strided_slice %202 {offsets = [0, 64], sizes = [2, 64], strides = [1, 1]} : vector<2x256xf32> to vector<2x64xf32>
    %206 = vector.extract_strided_slice %203 {offsets = [0, 128], sizes = [2, 64], strides = [1, 1]} : vector<2x256xf32> to vector<2x64xf32>
    %207 = vector.extract_strided_slice %202 {offsets = [0, 192], sizes = [2, 64], strides = [1, 1]} : vector<2x256xf32> to vector<2x64xf32>
    %208 = arith.mulf %205, %194 : vector<2x64xf32>
    %209 = arith.mulf %204, %206 : vector<2x64xf32>
    %210 = arith.addf %208, %209 : vector<2x64xf32>
    %211 = math.tanh %210 : vector<2x64xf32>
    %212 = arith.mulf %207, %211 : vector<2x64xf32>
    %c0_69 = arith.constant 0 : index
    %c0_70 = arith.constant 0 : index
    %213 = vector.load %arg14[%c0_69, %c0_70] : memref<16x128xf32, #tpu.memory_space<vmem>>, vector<2x64xf32>
    tpu.vector_store %arg14[%c0_69, %c0_70], %212 {strides = array<i32>} : memref<16x128xf32, #tpu.memory_space<vmem>>, vector<2x64xf32>,
    %c14_71 = arith.constant 14 : index
    %c64_72 = arith.constant 64 : index
    %214 = vector.load %arg14[%c14_71, %c64_72] : memref<16x128xf32, #tpu.memory_space<vmem>>, vector<2x64xf32>
    tpu.vector_store %arg14[%c14_71, %c64_72], %212 {strides = array<i32>} : memref<16x128xf32, #tpu.memory_space<vmem>>, vector<2x64xf32>,
    %215 = vector.extract_strided_slice %191 {offsets = [2, 0], sizes = [2, 256], strides = [1, 1]} : vector<16x256xf32> to vector<2x256xf32>
    %cst_73 = arith.constant dense<0.000000e+00> : vector<2x256xf32>
    %216 = tpu.matmul %212, %192, %cst_73 {dimension_numbers = #tpu.dot_dimension_numbers<[1], [0], [0], [1], [0, 0, 1, 1], [], []>} : vector<2x64xf32>, vector<64x256xf32>, vector<2x256xf32> -> vector<2x256xf32>
    %217 = arith.addf %215, %216 : vector<2x256xf32>
    %218 = arith.negf %217 : vector<2x256xf32>
    %219 = math.exp %218 : vector<2x256xf32>
    %cst_74 = arith.constant 1.000000e+00 : f32
    %220 = vector.broadcast %cst_74 : f32 to vector<2x256xf32>
    %221 = arith.addf %220, %219 : vector<2x256xf32>
    %222 = arith.divf %220, %221 : vector<2x256xf32>
    %223 = math.tanh %217 : vector<2x256xf32>
    %224 = vector.extract_strided_slice %222 {offsets = [0, 0], sizes = [2, 64], strides = [1, 1]} : vector<2x256xf32> to vector<2x64xf32>
    %225 = vector.extract_strided_slice %222 {offsets = [0, 64], sizes = [2, 64], strides = [1, 1]} : vector<2x256xf32> to vector<2x64xf32>
    %226 = vector.extract_strided_slice %223 {offsets = [0, 128], sizes = [2, 64], strides = [1, 1]} : vector<2x256xf32> to vector<2x64xf32>
    %227 = vector.extract_strided_slice %222 {offsets = [0, 192], sizes = [2, 64], strides = [1, 1]} : vector<2x256xf32> to vector<2x64xf32>
    %228 = arith.mulf %225, %210 : vector<2x64xf32>
    %229 = arith.mulf %224, %226 : vector<2x64xf32>
    %230 = arith.addf %228, %229 : vector<2x64xf32>
    %231 = math.tanh %230 : vector<2x64xf32>
    %232 = arith.mulf %227, %231 : vector<2x64xf32>
    %c2_75 = arith.constant 2 : index
    %c0_76 = arith.constant 0 : index
    %233 = vector.load %arg14[%c2_75, %c0_76] : memref<16x128xf32, #tpu.memory_space<vmem>>, vector<2x64xf32>
    tpu.vector_store %arg14[%c2_75, %c0_76], %232 {strides = array<i32>} : memref<16x128xf32, #tpu.memory_space<vmem>>, vector<2x64xf32>,
    %c12_77 = arith.constant 12 : index
    %c64_78 = arith.constant 64 : index
    %234 = vector.load %arg14[%c12_77, %c64_78] : memref<16x128xf32, #tpu.memory_space<vmem>>, vector<2x64xf32>
    tpu.vector_store %arg14[%c12_77, %c64_78], %232 {strides = array<i32>} : memref<16x128xf32, #tpu.memory_space<vmem>>, vector<2x64xf32>,
    %235 = vector.extract_strided_slice %191 {offsets = [4, 0], sizes = [2, 256], strides = [1, 1]} : vector<16x256xf32> to vector<2x256xf32>
    %cst_79 = arith.constant dense<0.000000e+00> : vector<2x256xf32>
    %236 = tpu.matmul %232, %192, %cst_79 {dimension_numbers = #tpu.dot_dimension_numbers<[1], [0], [0], [1], [0, 0, 1, 1], [], []>} : vector<2x64xf32>, vector<64x256xf32>, vector<2x256xf32> -> vector<2x256xf32>
    %237 = arith.addf %235, %236 : vector<2x256xf32>
    %238 = arith.negf %237 : vector<2x256xf32>
    %239 = math.exp %238 : vector<2x256xf32>
    %cst_80 = arith.constant 1.000000e+00 : f32
    %240 = vector.broadcast %cst_80 : f32 to vector<2x256xf32>
    %241 = arith.addf %240, %239 : vector<2x256xf32>
    %242 = arith.divf %240, %241 : vector<2x256xf32>
    %243 = math.tanh %237 : vector<2x256xf32>
    %244 = vector.extract_strided_slice %242 {offsets = [0, 0], sizes = [2, 64], strides = [1, 1]} : vector<2x256xf32> to vector<2x64xf32>
    %245 = vector.extract_strided_slice %242 {offsets = [0, 64], sizes = [2, 64], strides = [1, 1]} : vector<2x256xf32> to vector<2x64xf32>
    %246 = vector.extract_strided_slice %243 {offsets = [0, 128], sizes = [2, 64], strides = [1, 1]} : vector<2x256xf32> to vector<2x64xf32>
    %247 = vector.extract_strided_slice %242 {offsets = [0, 192], sizes = [2, 64], strides = [1, 1]} : vector<2x256xf32> to vector<2x64xf32>
    %248 = arith.mulf %245, %230 : vector<2x64xf32>
    %249 = arith.mulf %244, %246 : vector<2x64xf32>
    %250 = arith.addf %248, %249 : vector<2x64xf32>
    %251 = math.tanh %250 : vector<2x64xf32>
    %252 = arith.mulf %247, %251 : vector<2x64xf32>
    %c4_81 = arith.constant 4 : index
    %c0_82 = arith.constant 0 : index
    %253 = vector.load %arg14[%c4_81, %c0_82] : memref<16x128xf32, #tpu.memory_space<vmem>>, vector<2x64xf32>
    tpu.vector_store %arg14[%c4_81, %c0_82], %252 {strides = array<i32>} : memref<16x128xf32, #tpu.memory_space<vmem>>, vector<2x64xf32>,
    %c10_83 = arith.constant 10 : index
    %c64_84 = arith.constant 64 : index
    %254 = vector.load %arg14[%c10_83, %c64_84] : memref<16x128xf32, #tpu.memory_space<vmem>>, vector<2x64xf32>
    tpu.vector_store %arg14[%c10_83, %c64_84], %252 {strides = array<i32>} : memref<16x128xf32, #tpu.memory_space<vmem>>, vector<2x64xf32>,
    %255 = vector.extract_strided_slice %191 {offsets = [6, 0], sizes = [2, 256], strides = [1, 1]} : vector<16x256xf32> to vector<2x256xf32>
    %cst_85 = arith.constant dense<0.000000e+00> : vector<2x256xf32>
    %256 = tpu.matmul %252, %192, %cst_85 {dimension_numbers = #tpu.dot_dimension_numbers<[1], [0], [0], [1], [0, 0, 1, 1], [], []>} : vector<2x64xf32>, vector<64x256xf32>, vector<2x256xf32> -> vector<2x256xf32>
    %257 = arith.addf %255, %256 : vector<2x256xf32>
    %258 = arith.negf %257 : vector<2x256xf32>
    %259 = math.exp %258 : vector<2x256xf32>
    %cst_86 = arith.constant 1.000000e+00 : f32
    %260 = vector.broadcast %cst_86 : f32 to vector<2x256xf32>
    %261 = arith.addf %260, %259 : vector<2x256xf32>
    %262 = arith.divf %260, %261 : vector<2x256xf32>
    %263 = math.tanh %257 : vector<2x256xf32>
    %264 = vector.extract_strided_slice %262 {offsets = [0, 0], sizes = [2, 64], strides = [1, 1]} : vector<2x256xf32> to vector<2x64xf32>
    %265 = vector.extract_strided_slice %262 {offsets = [0, 64], sizes = [2, 64], strides = [1, 1]} : vector<2x256xf32> to vector<2x64xf32>
    %266 = vector.extract_strided_slice %263 {offsets = [0, 128], sizes = [2, 64], strides = [1, 1]} : vector<2x256xf32> to vector<2x64xf32>
    %267 = vector.extract_strided_slice %262 {offsets = [0, 192], sizes = [2, 64], strides = [1, 1]} : vector<2x256xf32> to vector<2x64xf32>
    %268 = arith.mulf %265, %250 : vector<2x64xf32>
    %269 = arith.mulf %264, %266 : vector<2x64xf32>
    %270 = arith.addf %268, %269 : vector<2x64xf32>
    %271 = math.tanh %270 : vector<2x64xf32>
    %272 = arith.mulf %267, %271 : vector<2x64xf32>
    %c6_87 = arith.constant 6 : index
    %c0_88 = arith.constant 0 : index
    %273 = vector.load %arg14[%c6_87, %c0_88] : memref<16x128xf32, #tpu.memory_space<vmem>>, vector<2x64xf32>
    tpu.vector_store %arg14[%c6_87, %c0_88], %272 {strides = array<i32>} : memref<16x128xf32, #tpu.memory_space<vmem>>, vector<2x64xf32>,
    %c8_89 = arith.constant 8 : index
    %c64_90 = arith.constant 64 : index
    %274 = vector.load %arg14[%c8_89, %c64_90] : memref<16x128xf32, #tpu.memory_space<vmem>>, vector<2x64xf32>
    tpu.vector_store %arg14[%c8_89, %c64_90], %272 {strides = array<i32>} : memref<16x128xf32, #tpu.memory_space<vmem>>, vector<2x64xf32>,
    %275 = vector.extract_strided_slice %191 {offsets = [8, 0], sizes = [2, 256], strides = [1, 1]} : vector<16x256xf32> to vector<2x256xf32>
    %cst_91 = arith.constant dense<0.000000e+00> : vector<2x256xf32>
    %276 = tpu.matmul %272, %192, %cst_91 {dimension_numbers = #tpu.dot_dimension_numbers<[1], [0], [0], [1], [0, 0, 1, 1], [], []>} : vector<2x64xf32>, vector<64x256xf32>, vector<2x256xf32> -> vector<2x256xf32>
    %277 = arith.addf %275, %276 : vector<2x256xf32>
    %278 = arith.negf %277 : vector<2x256xf32>
    %279 = math.exp %278 : vector<2x256xf32>
    %cst_92 = arith.constant 1.000000e+00 : f32
    %280 = vector.broadcast %cst_92 : f32 to vector<2x256xf32>
    %281 = arith.addf %280, %279 : vector<2x256xf32>
    %282 = arith.divf %280, %281 : vector<2x256xf32>
    %283 = math.tanh %277 : vector<2x256xf32>
    %284 = vector.extract_strided_slice %282 {offsets = [0, 0], sizes = [2, 64], strides = [1, 1]} : vector<2x256xf32> to vector<2x64xf32>
    %285 = vector.extract_strided_slice %282 {offsets = [0, 64], sizes = [2, 64], strides = [1, 1]} : vector<2x256xf32> to vector<2x64xf32>
    %286 = vector.extract_strided_slice %283 {offsets = [0, 128], sizes = [2, 64], strides = [1, 1]} : vector<2x256xf32> to vector<2x64xf32>
    %287 = vector.extract_strided_slice %282 {offsets = [0, 192], sizes = [2, 64], strides = [1, 1]} : vector<2x256xf32> to vector<2x64xf32>
    %288 = arith.mulf %285, %270 : vector<2x64xf32>
    %289 = arith.mulf %284, %286 : vector<2x64xf32>
    %290 = arith.addf %288, %289 : vector<2x64xf32>
    %291 = math.tanh %290 : vector<2x64xf32>
    %292 = arith.mulf %287, %291 : vector<2x64xf32>
    %c8_93 = arith.constant 8 : index
    %c0_94 = arith.constant 0 : index
    %293 = vector.load %arg14[%c8_93, %c0_94] : memref<16x128xf32, #tpu.memory_space<vmem>>, vector<2x64xf32>
    tpu.vector_store %arg14[%c8_93, %c0_94], %292 {strides = array<i32>} : memref<16x128xf32, #tpu.memory_space<vmem>>, vector<2x64xf32>,
    %c6_95 = arith.constant 6 : index
    %c64_96 = arith.constant 64 : index
    %294 = vector.load %arg14[%c6_95, %c64_96] : memref<16x128xf32, #tpu.memory_space<vmem>>, vector<2x64xf32>
    tpu.vector_store %arg14[%c6_95, %c64_96], %292 {strides = array<i32>} : memref<16x128xf32, #tpu.memory_space<vmem>>, vector<2x64xf32>,
    %295 = vector.extract_strided_slice %191 {offsets = [10, 0], sizes = [2, 256], strides = [1, 1]} : vector<16x256xf32> to vector<2x256xf32>
    %cst_97 = arith.constant dense<0.000000e+00> : vector<2x256xf32>
    %296 = tpu.matmul %292, %192, %cst_97 {dimension_numbers = #tpu.dot_dimension_numbers<[1], [0], [0], [1], [0, 0, 1, 1], [], []>} : vector<2x64xf32>, vector<64x256xf32>, vector<2x256xf32> -> vector<2x256xf32>
    %297 = arith.addf %295, %296 : vector<2x256xf32>
    %298 = arith.negf %297 : vector<2x256xf32>
    %299 = math.exp %298 : vector<2x256xf32>
    %cst_98 = arith.constant 1.000000e+00 : f32
    %300 = vector.broadcast %cst_98 : f32 to vector<2x256xf32>
    %301 = arith.addf %300, %299 : vector<2x256xf32>
    %302 = arith.divf %300, %301 : vector<2x256xf32>
    %303 = math.tanh %297 : vector<2x256xf32>
    %304 = vector.extract_strided_slice %302 {offsets = [0, 0], sizes = [2, 64], strides = [1, 1]} : vector<2x256xf32> to vector<2x64xf32>
    %305 = vector.extract_strided_slice %302 {offsets = [0, 64], sizes = [2, 64], strides = [1, 1]} : vector<2x256xf32> to vector<2x64xf32>
    %306 = vector.extract_strided_slice %303 {offsets = [0, 128], sizes = [2, 64], strides = [1, 1]} : vector<2x256xf32> to vector<2x64xf32>
    %307 = vector.extract_strided_slice %302 {offsets = [0, 192], sizes = [2, 64], strides = [1, 1]} : vector<2x256xf32> to vector<2x64xf32>
    %308 = arith.mulf %305, %290 : vector<2x64xf32>
    %309 = arith.mulf %304, %306 : vector<2x64xf32>
    %310 = arith.addf %308, %309 : vector<2x64xf32>
    %311 = math.tanh %310 : vector<2x64xf32>
    %312 = arith.mulf %307, %311 : vector<2x64xf32>
    %c10_99 = arith.constant 10 : index
    %c0_100 = arith.constant 0 : index
    %313 = vector.load %arg14[%c10_99, %c0_100] : memref<16x128xf32, #tpu.memory_space<vmem>>, vector<2x64xf32>
    tpu.vector_store %arg14[%c10_99, %c0_100], %312 {strides = array<i32>} : memref<16x128xf32, #tpu.memory_space<vmem>>, vector<2x64xf32>,
    %c4_101 = arith.constant 4 : index
    %c64_102 = arith.constant 64 : index
    %314 = vector.load %arg14[%c4_101, %c64_102] : memref<16x128xf32, #tpu.memory_space<vmem>>, vector<2x64xf32>
    tpu.vector_store %arg14[%c4_101, %c64_102], %312 {strides = array<i32>} : memref<16x128xf32, #tpu.memory_space<vmem>>, vector<2x64xf32>,
    %315 = vector.extract_strided_slice %191 {offsets = [12, 0], sizes = [2, 256], strides = [1, 1]} : vector<16x256xf32> to vector<2x256xf32>
    %cst_103 = arith.constant dense<0.000000e+00> : vector<2x256xf32>
    %316 = tpu.matmul %312, %192, %cst_103 {dimension_numbers = #tpu.dot_dimension_numbers<[1], [0], [0], [1], [0, 0, 1, 1], [], []>} : vector<2x64xf32>, vector<64x256xf32>, vector<2x256xf32> -> vector<2x256xf32>
    %317 = arith.addf %315, %316 : vector<2x256xf32>
    %318 = arith.negf %317 : vector<2x256xf32>
    %319 = math.exp %318 : vector<2x256xf32>
    %cst_104 = arith.constant 1.000000e+00 : f32
    %320 = vector.broadcast %cst_104 : f32 to vector<2x256xf32>
    %321 = arith.addf %320, %319 : vector<2x256xf32>
    %322 = arith.divf %320, %321 : vector<2x256xf32>
    %323 = math.tanh %317 : vector<2x256xf32>
    %324 = vector.extract_strided_slice %322 {offsets = [0, 0], sizes = [2, 64], strides = [1, 1]} : vector<2x256xf32> to vector<2x64xf32>
    %325 = vector.extract_strided_slice %322 {offsets = [0, 64], sizes = [2, 64], strides = [1, 1]} : vector<2x256xf32> to vector<2x64xf32>
    %326 = vector.extract_strided_slice %323 {offsets = [0, 128], sizes = [2, 64], strides = [1, 1]} : vector<2x256xf32> to vector<2x64xf32>
    %327 = vector.extract_strided_slice %322 {offsets = [0, 192], sizes = [2, 64], strides = [1, 1]} : vector<2x256xf32> to vector<2x64xf32>
    %328 = arith.mulf %325, %310 : vector<2x64xf32>
    %329 = arith.mulf %324, %326 : vector<2x64xf32>
    %330 = arith.addf %328, %329 : vector<2x64xf32>
    %331 = math.tanh %330 : vector<2x64xf32>
    %332 = arith.mulf %327, %331 : vector<2x64xf32>
    %c12_105 = arith.constant 12 : index
    %c0_106 = arith.constant 0 : index
    %333 = vector.load %arg14[%c12_105, %c0_106] : memref<16x128xf32, #tpu.memory_space<vmem>>, vector<2x64xf32>
    tpu.vector_store %arg14[%c12_105, %c0_106], %332 {strides = array<i32>} : memref<16x128xf32, #tpu.memory_space<vmem>>, vector<2x64xf32>,
    %c2_107 = arith.constant 2 : index
    %c64_108 = arith.constant 64 : index
    %334 = vector.load %arg14[%c2_107, %c64_108] : memref<16x128xf32, #tpu.memory_space<vmem>>, vector<2x64xf32>
    tpu.vector_store %arg14[%c2_107, %c64_108], %332 {strides = array<i32>} : memref<16x128xf32, #tpu.memory_space<vmem>>, vector<2x64xf32>,
    %335 = vector.extract_strided_slice %191 {offsets = [14, 0], sizes = [2, 256], strides = [1, 1]} : vector<16x256xf32> to vector<2x256xf32>
    %cst_109 = arith.constant dense<0.000000e+00> : vector<2x256xf32>
    %336 = tpu.matmul %332, %192, %cst_109 {dimension_numbers = #tpu.dot_dimension_numbers<[1], [0], [0], [1], [0, 0, 1, 1], [], []>} : vector<2x64xf32>, vector<64x256xf32>, vector<2x256xf32> -> vector<2x256xf32>
    %337 = arith.addf %335, %336 : vector<2x256xf32>
    %338 = arith.negf %337 : vector<2x256xf32>
    %339 = math.exp %338 : vector<2x256xf32>
    %cst_110 = arith.constant 1.000000e+00 : f32
    %340 = vector.broadcast %cst_110 : f32 to vector<2x256xf32>
    %341 = arith.addf %340, %339 : vector<2x256xf32>
    %342 = arith.divf %340, %341 : vector<2x256xf32>
    %343 = math.tanh %337 : vector<2x256xf32>
    %344 = vector.extract_strided_slice %342 {offsets = [0, 0], sizes = [2, 64], strides = [1, 1]} : vector<2x256xf32> to vector<2x64xf32>
    %345 = vector.extract_strided_slice %342 {offsets = [0, 64], sizes = [2, 64], strides = [1, 1]} : vector<2x256xf32> to vector<2x64xf32>
    %346 = vector.extract_strided_slice %343 {offsets = [0, 128], sizes = [2, 64], strides = [1, 1]} : vector<2x256xf32> to vector<2x64xf32>
    %347 = vector.extract_strided_slice %342 {offsets = [0, 192], sizes = [2, 64], strides = [1, 1]} : vector<2x256xf32> to vector<2x64xf32>
    %348 = arith.mulf %345, %330 : vector<2x64xf32>
    %349 = arith.mulf %344, %346 : vector<2x64xf32>
    %350 = arith.addf %348, %349 : vector<2x64xf32>
    %351 = math.tanh %350 : vector<2x64xf32>
    %352 = arith.mulf %347, %351 : vector<2x64xf32>
    %c14_111 = arith.constant 14 : index
    %c0_112 = arith.constant 0 : index
    %353 = vector.load %arg14[%c14_111, %c0_112] : memref<16x128xf32, #tpu.memory_space<vmem>>, vector<2x64xf32>
    tpu.vector_store %arg14[%c14_111, %c0_112], %352 {strides = array<i32>} : memref<16x128xf32, #tpu.memory_space<vmem>>, vector<2x64xf32>,
    %c0_113 = arith.constant 0 : index
    %c64_114 = arith.constant 64 : index
    %354 = vector.load %arg14[%c0_113, %c64_114] : memref<16x128xf32, #tpu.memory_space<vmem>>, vector<2x64xf32>
    tpu.vector_store %arg14[%c0_113, %c64_114], %352 {strides = array<i32>} : memref<16x128xf32, #tpu.memory_space<vmem>>, vector<2x64xf32>,
    %c0_115 = arith.constant 0 : index
    %c0_116 = arith.constant 0 : index
    %355 = vector.load %arg14[%c0_115, %c0_116] : memref<16x128xf32, #tpu.memory_space<vmem>>, vector<16x128xf32>
    %356 = vector.extract_strided_slice %352 {offsets = [0, 0], sizes = [2, 32], strides = [1, 1]} : vector<2x64xf32> to vector<2x32xf32>
    %cst_117 = arith.constant 0.000000e+00 : f32
    %357 = vector.broadcast %cst_117 : f32 to vector<2x64xf32>
    %358 = vector.extract_strided_slice %352 {offsets = [0, 32], sizes = [2, 32], strides = [1, 1]} : vector<2x64xf32> to vector<2x32xf32>
    %359 = tpu.concatenate %356, %357, %358 in 1 : vector<2x32xf32>, vector<2x64xf32>, vector<2x32xf32> -> vector<2x128xf32>
    %360 = vector.extract_strided_slice %355 {offsets = [0, 0], sizes = [2, 128], strides = [1, 1]} : vector<16x128xf32> to vector<2x128xf32>
    %361 = arith.mulf %360, %359 : vector<2x128xf32>
    %cst_118 = arith.constant dense<0.000000e+00> : vector<2xf32>
    %362 = vector.multi_reduction <add>, %361, %cst_118 [1] : vector<2x128xf32> to vector<2xf32>
    %363 = vector.shape_cast %362 : vector<2xf32> to vector<2x1xf32>
    %364 = vector.extract_strided_slice %355 {offsets = [2, 0], sizes = [2, 128], strides = [1, 1]} : vector<16x128xf32> to vector<2x128xf32>
    %365 = arith.mulf %364, %359 : vector<2x128xf32>
    %cst_119 = arith.constant dense<0.000000e+00> : vector<2xf32>
    %366 = vector.multi_reduction <add>, %365, %cst_119 [1] : vector<2x128xf32> to vector<2xf32>
    %367 = vector.shape_cast %366 : vector<2xf32> to vector<2x1xf32>
    %368 = vector.extract_strided_slice %355 {offsets = [4, 0], sizes = [2, 128], strides = [1, 1]} : vector<16x128xf32> to vector<2x128xf32>
    %369 = arith.mulf %368, %359 : vector<2x128xf32>
    %cst_120 = arith.constant dense<0.000000e+00> : vector<2xf32>
    %370 = vector.multi_reduction <add>, %369, %cst_120 [1] : vector<2x128xf32> to vector<2xf32>
    %371 = vector.shape_cast %370 : vector<2xf32> to vector<2x1xf32>
    %372 = vector.extract_strided_slice %355 {offsets = [6, 0], sizes = [2, 128], strides = [1, 1]} : vector<16x128xf32> to vector<2x128xf32>
    %373 = arith.mulf %372, %359 : vector<2x128xf32>
    %cst_121 = arith.constant dense<0.000000e+00> : vector<2xf32>
    %374 = vector.multi_reduction <add>, %373, %cst_121 [1] : vector<2x128xf32> to vector<2xf32>
    %375 = vector.shape_cast %374 : vector<2xf32> to vector<2x1xf32>
    %376 = vector.extract_strided_slice %355 {offsets = [8, 0], sizes = [2, 128], strides = [1, 1]} : vector<16x128xf32> to vector<2x128xf32>
    %377 = arith.mulf %376, %359 : vector<2x128xf32>
    %cst_122 = arith.constant dense<0.000000e+00> : vector<2xf32>
    %378 = vector.multi_reduction <add>, %377, %cst_122 [1] : vector<2x128xf32> to vector<2xf32>
    %379 = vector.shape_cast %378 : vector<2xf32> to vector<2x1xf32>
    %380 = vector.extract_strided_slice %355 {offsets = [10, 0], sizes = [2, 128], strides = [1, 1]} : vector<16x128xf32> to vector<2x128xf32>
    %381 = arith.mulf %380, %359 : vector<2x128xf32>
    %cst_123 = arith.constant dense<0.000000e+00> : vector<2xf32>
    %382 = vector.multi_reduction <add>, %381, %cst_123 [1] : vector<2x128xf32> to vector<2xf32>
    %383 = vector.shape_cast %382 : vector<2xf32> to vector<2x1xf32>
    %384 = vector.extract_strided_slice %355 {offsets = [12, 0], sizes = [2, 128], strides = [1, 1]} : vector<16x128xf32> to vector<2x128xf32>
    %385 = arith.mulf %384, %359 : vector<2x128xf32>
    %cst_124 = arith.constant dense<0.000000e+00> : vector<2xf32>
    %386 = vector.multi_reduction <add>, %385, %cst_124 [1] : vector<2x128xf32> to vector<2xf32>
    %387 = vector.shape_cast %386 : vector<2xf32> to vector<2x1xf32>
    %388 = vector.extract_strided_slice %355 {offsets = [14, 0], sizes = [2, 128], strides = [1, 1]} : vector<16x128xf32> to vector<2x128xf32>
    %389 = arith.mulf %388, %359 : vector<2x128xf32>
    %cst_125 = arith.constant dense<0.000000e+00> : vector<2xf32>
    %390 = vector.multi_reduction <add>, %389, %cst_125 [1] : vector<2x128xf32> to vector<2xf32>
    %391 = vector.shape_cast %390 : vector<2xf32> to vector<2x1xf32>
    %392 = arith.maximumf %363, %367 : vector<2x1xf32>
    %393 = arith.maximumf %392, %371 : vector<2x1xf32>
    %394 = arith.maximumf %393, %375 : vector<2x1xf32>
    %395 = arith.maximumf %394, %379 : vector<2x1xf32>
    %396 = arith.maximumf %395, %383 : vector<2x1xf32>
    %397 = arith.maximumf %396, %387 : vector<2x1xf32>
    %398 = arith.maximumf %397, %391 : vector<2x1xf32>
    %399 = arith.subf %363, %398 : vector<2x1xf32>
    %400 = math.exp %399 : vector<2x1xf32>
    %401 = arith.subf %367, %398 : vector<2x1xf32>
    %402 = math.exp %401 : vector<2x1xf32>
    %403 = arith.subf %371, %398 : vector<2x1xf32>
    %404 = math.exp %403 : vector<2x1xf32>
    %405 = arith.subf %375, %398 : vector<2x1xf32>
    %406 = math.exp %405 : vector<2x1xf32>
    %407 = arith.subf %379, %398 : vector<2x1xf32>
    %408 = math.exp %407 : vector<2x1xf32>
    %409 = arith.subf %383, %398 : vector<2x1xf32>
    %410 = math.exp %409 : vector<2x1xf32>
    %411 = arith.subf %387, %398 : vector<2x1xf32>
    %412 = math.exp %411 : vector<2x1xf32>
    %413 = arith.subf %391, %398 : vector<2x1xf32>
    %414 = math.exp %413 : vector<2x1xf32>
    %415 = arith.addf %400, %402 : vector<2x1xf32>
    %416 = arith.addf %415, %404 : vector<2x1xf32>
    %417 = arith.addf %416, %406 : vector<2x1xf32>
    %418 = arith.addf %417, %408 : vector<2x1xf32>
    %419 = arith.addf %418, %410 : vector<2x1xf32>
    %420 = arith.addf %419, %412 : vector<2x1xf32>
    %421 = arith.addf %420, %414 : vector<2x1xf32>
    %422 = tpu.reciprocal %421 {approx = true} : vector<2x1xf32> -> vector<2x1xf32>
    %423 = vector.extract_strided_slice %355 {offsets = [0, 0], sizes = [2, 128], strides = [1, 1]} : vector<16x128xf32> to vector<2x128xf32>
    %424 = vector.broadcast %400 : vector<2x1xf32> to vector<2x128xf32>
    %425 = arith.mulf %424, %423 : vector<2x128xf32>
    %426 = vector.extract_strided_slice %355 {offsets = [2, 0], sizes = [2, 128], strides = [1, 1]} : vector<16x128xf32> to vector<2x128xf32>
    %427 = vector.broadcast %402 : vector<2x1xf32> to vector<2x128xf32>
    %428 = arith.mulf %427, %426 : vector<2x128xf32>
    %429 = arith.addf %425, %428 : vector<2x128xf32>
    %430 = vector.extract_strided_slice %355 {offsets = [4, 0], sizes = [2, 128], strides = [1, 1]} : vector<16x128xf32> to vector<2x128xf32>
    %431 = vector.broadcast %404 : vector<2x1xf32> to vector<2x128xf32>
    %432 = arith.mulf %431, %430 : vector<2x128xf32>
    %433 = arith.addf %429, %432 : vector<2x128xf32>
    %434 = vector.extract_strided_slice %355 {offsets = [6, 0], sizes = [2, 128], strides = [1, 1]} : vector<16x128xf32> to vector<2x128xf32>
    %435 = vector.broadcast %406 : vector<2x1xf32> to vector<2x128xf32>
    %436 = arith.mulf %435, %434 : vector<2x128xf32>
    %437 = arith.addf %433, %436 : vector<2x128xf32>
    %438 = vector.extract_strided_slice %355 {offsets = [8, 0], sizes = [2, 128], strides = [1, 1]} : vector<16x128xf32> to vector<2x128xf32>
    %439 = vector.broadcast %408 : vector<2x1xf32> to vector<2x128xf32>
    %440 = arith.mulf %439, %438 : vector<2x128xf32>
    %441 = arith.addf %437, %440 : vector<2x128xf32>
    %442 = vector.extract_strided_slice %355 {offsets = [10, 0], sizes = [2, 128], strides = [1, 1]} : vector<16x128xf32> to vector<2x128xf32>
    %443 = vector.broadcast %410 : vector<2x1xf32> to vector<2x128xf32>
    %444 = arith.mulf %443, %442 : vector<2x128xf32>
    %445 = arith.addf %441, %444 : vector<2x128xf32>
    %446 = vector.extract_strided_slice %355 {offsets = [12, 0], sizes = [2, 128], strides = [1, 1]} : vector<16x128xf32> to vector<2x128xf32>
    %447 = vector.broadcast %412 : vector<2x1xf32> to vector<2x128xf32>
    %448 = arith.mulf %447, %446 : vector<2x128xf32>
    %449 = arith.addf %445, %448 : vector<2x128xf32>
    %450 = vector.extract_strided_slice %355 {offsets = [14, 0], sizes = [2, 128], strides = [1, 1]} : vector<16x128xf32> to vector<2x128xf32>
    %451 = vector.broadcast %414 : vector<2x1xf32> to vector<2x128xf32>
    %452 = arith.mulf %451, %450 : vector<2x128xf32>
    %453 = arith.addf %449, %452 : vector<2x128xf32>
    %454 = vector.broadcast %422 : vector<2x1xf32> to vector<2x128xf32>
    %455 = arith.mulf %453, %454 : vector<2x128xf32>
    %c0_126 = arith.constant 0 : index
    %c0_127 = arith.constant 0 : index
    %456 = vector.load %arg9[%c0_126, %c0_127] : memref<64x4xf32, #tpu.memory_space<vmem>>, vector<64x4xf32>
    %cst_128 = arith.constant dense<0.000000e+00> : vector<2x4xf32>
    %457 = tpu.matmul %352, %456, %cst_128 {dimension_numbers = #tpu.dot_dimension_numbers<[1], [0], [0], [1], [0, 0, 1, 1], [], []>} : vector<2x64xf32>, vector<64x4xf32>, vector<2x4xf32> -> vector<2x4xf32>
    %c0_129 = arith.constant 0 : index
    %c0_130 = arith.constant 0 : index
    %458 = vector.load %arg10[%c0_129, %c0_130] : memref<128x4xf32, #tpu.memory_space<vmem>>, vector<128x4xf32>
    %cst_131 = arith.constant dense<0.000000e+00> : vector<2x4xf32>
    %459 = tpu.matmul %455, %458, %cst_131 {dimension_numbers = #tpu.dot_dimension_numbers<[1], [0], [0], [1], [0, 0, 1, 1], [], []>} : vector<2x128xf32>, vector<128x4xf32>, vector<2x4xf32> -> vector<2x4xf32>
    %460 = arith.addf %457, %459 : vector<2x4xf32>
    %c0_132 = arith.constant 0 : index
    %c0_133 = arith.constant 0 : index
    %461 = vector.load %arg11[%c0_132, %c0_133] : memref<1x4xf32, #tpu.memory_space<vmem>>, vector<1x4xf32>
    %462 = vector.broadcast %461 : vector<1x4xf32> to vector<2x4xf32>
    %463 = arith.addf %460, %462 : vector<2x4xf32>
    %cst_134 = arith.constant dense<0xFF800000> : vector<2xf32>
    %464 = vector.multi_reduction <maximumf>, %463, %cst_134 [1] : vector<2x4xf32> to vector<2xf32>
    %465 = vector.shape_cast %464 : vector<2xf32> to vector<2x1xf32>
    %466 = vector.broadcast %465 : vector<2x1xf32> to vector<2x4xf32>
    %467 = arith.subf %463, %466 : vector<2x4xf32>
    %468 = math.exp %467 : vector<2x4xf32>
    %cst_135 = arith.constant dense<0.000000e+00> : vector<2xf32>
    %469 = vector.multi_reduction <add>, %468, %cst_135 [1] : vector<2x4xf32> to vector<2xf32>
    %470 = vector.shape_cast %469 : vector<2xf32> to vector<2x1xf32>
    %471 = vector.broadcast %470 : vector<2x1xf32> to vector<2x4xf32>
    %472 = arith.divf %468, %471 : vector<2x4xf32>
    %c0_136 = arith.constant 0 : index
    %c0_137 = arith.constant 0 : index
    %473 = vector.load %arg12[%c0_136, %c0_137] : memref<2x4xf32, #tpu.memory_space<vmem>>, vector<2x4xf32>
    tpu.vector_store %arg12[%c0_136, %c0_137], %472 {strides = array<i32>} : memref<2x4xf32, #tpu.memory_space<vmem>>, vector<2x4xf32>,
    return
  }
}

</mosaic_0001>

<llo_original>
// kernel: seq2seq_attention_forward.1
$region0: #{seq2seq_attention_forward.1}
  #allocation0 [shape = 'u32[]', space=smem, size = 0x4, offset = 0x4, fixed_abs, tag = 'smem constant byte address 0x4 - core index']
  #allocation1 [shape = 'u32[144,128]{1,0:T(1,128)}', space=vmem, size = 0x12000, scoped, tag = 'internal scratch']
  #allocation2 [shape = 'f32[16,128]{1,0:T(8,128)}', space=vmem, size = 0x2000, scoped, tag = 'scratch operand']
  #allocation3 [shape = 'f32[16,128]{1,0:T(8,128)}', space=vmem, size = 0x2000, scoped, tag = 'scratch operand']
  %s0 = inlined_call_operand.vmem [shape: s32[16,2], index: 0, kind: input, shape index: {}]
  %s1 = inlined_call_operand.vmem [shape: f32[50,32], index: 1, kind: input, shape index: {}]
  %s2 = inlined_call_operand.hbm [shape: f32[32,256], index: 2, kind: input, shape index: {}]
  %s3 = inlined_call_operand.hbm [shape: f32[32,256], index: 3, kind: input, shape index: {}]
  %s4 = inlined_call_operand.vmem [shape: f32[64,256], index: 4, kind: input, shape index: {}]
  %s5 = inlined_call_operand.vmem [shape: f32[1,256], index: 5, kind: input, shape index: {}]
  %s6 = inlined_call_operand.vmem [shape: f32[128,256], index: 6, kind: input, shape index: {}]
  %s7 = inlined_call_operand.hbm [shape: f32[64,256], index: 7, kind: input, shape index: {}]
  %s8 = inlined_call_operand.vmem [shape: f32[1,256], index: 8, kind: input, shape index: {}]
  %s9 = inlined_call_operand.vmem [shape: f32[64,4], index: 9, kind: input, shape index: {}]
  %s10 = inlined_call_operand.vmem [shape: f32[128,4], index: 10, kind: input, shape index: {}]
  %s11 = inlined_call_operand.vmem [shape: f32[1,4], index: 11, kind: input, shape index: {}]
  %s12 = inlined_call_operand.hbm [shape: f32[2,4], index: 12, kind: output, shape index: {}]
  %s13 = sld [smem:[#allocation0]]
  $region70: #{seq2seq_attention_forward.1} parent=0
    _
  %s15 = ssub.s32 1, %s13
  %s16 = scalar_select 0, %s15, %s13
  $region1: #{seq2seq_attention_forward.1} parent=0
    #allocation4 [shape = 'u8[32768]{0}', space=vmem, size = 0x8000, scoped, tag = 'input window, operand 2, single buffered']
    #allocation5 [shape = 's32[1]{0}', space=sflag, size = 0x4, scoped, tag = 'scoped memory for seq2seq_attention_forward.1']
    #allocation6 [shape = 's32[1]{0}', space=sflag, size = 0x4, scoped, tag = 'scoped memory for seq2seq_attention_forward.1']
    #allocation7 [shape = 'u8[32768]{0}', space=vmem, size = 0x8000, scoped, tag = 'input window, operand 3, single buffered']
    #allocation8 [shape = 's32[1]{0}', space=sflag, size = 0x4, scoped, tag = 'scoped memory for seq2seq_attention_forward.1']
    #allocation9 [shape = 'u8[65536]{0}', space=vmem, size = 0x10000, scoped, tag = 'input window, operand 7, single buffered']
    #allocation10 [shape = 'u8[1024]{0}', space=vmem, size = 0x400, scoped, tag = 'output window, operand 0, single buffered']
    %17 = vsyncpa [#allocation5], 0
    %18 = vsyncpa [#allocation8], 0
    %19 = vsyncpa [#allocation6], 0
    // Predicated region
    $region2: #{seq2seq_attention_forward.1} parent=1 // pred_check
      _
    $region3: #{seq2seq_attention_forward.1} parent=1 // pred_check_branch
      %21 = sbr.rel (0) target = $region5
    $region4: #{seq2seq_attention_forward.1} parent=1 // pred_region
      _
    $region5: #{seq2seq_attention_forward.1} parent=1 // pred_fallthru
      _
    // Predicated region
    $region6: #{seq2seq_attention_forward.1} parent=1 // pred_check
      _
    $region7: #{seq2seq_attention_forward.1} parent=1 // pred_check_branch
      %23 = sbr.rel (0) target = $region9
    $region8: #{seq2seq_attention_forward.1} parent=1 // pred_region
      _
    $region9: #{seq2seq_attention_forward.1} parent=1 // pred_fallthru
      _
    // Predicated region
    $region10: #{seq2seq_attention_forward.1} parent=1 // pred_check
      _
    $region11: #{seq2seq_attention_forward.1} parent=1 // pred_check_branch
      %25 = sbr.rel (0) target = $region13
    $region12: #{seq2seq_attention_forward.1} parent=1 // pred_region
      %s27 = ssub.s32 1024, 1024
      %28 = vsyncadd [#allocation5], %s27
      %s29 = sshll.u32 [#allocation4], 4
      %s30 = int_to_ptr.vmem [resolvable:$true] %s29
      %35 = dma.hbm_to_vmem [thread:$0]  %s2, 1024, %s30, [#allocation5], 256, 256, 16
    $region13: #{seq2seq_attention_forward.1} parent=1 // pred_fallthru
      _
    // Predicated region
    $region14: #{seq2seq_attention_forward.1} parent=1 // pred_check
      _
    $region15: #{seq2seq_attention_forward.1} parent=1 // pred_check_branch
      %37 = sbr.rel (0) target = $region17
    $region16: #{seq2seq_attention_forward.1} parent=1 // pred_region
      %s39 = ssub.s32 1024, 1024
      %40 = vsyncadd [#allocation8], %s39
      %s41 = sshll.u32 [#allocation7], 4
      %s42 = int_to_ptr.vmem [resolvable:$true] %s41
      %47 = dma.hbm_to_vmem [thread:$0]  %s3, 1024, %s42, [#allocation8], 256, 256, 16
    $region17: #{seq2seq_attention_forward.1} parent=1 // pred_fallthru
      _
    // Predicated region
    $region18: #{seq2seq_attention_forward.1} parent=1 // pred_check
      _
    $region19: #{seq2seq_attention_forward.1} parent=1 // pred_check_branch
      %49 = sbr.rel (0) target = $region21
    $region20: #{seq2seq_attention_forward.1} parent=1 // pred_region
      _
    $region21: #{seq2seq_attention_forward.1} parent=1 // pred_fallthru
      _
    // Predicated region
    $region22: #{seq2seq_attention_forward.1} parent=1 // pred_check
      _
    $region23: #{seq2seq_attention_forward.1} parent=1 // pred_check_branch
      %51 = sbr.rel (0) target = $region25
    $region24: #{seq2seq_attention_forward.1} parent=1 // pred_region
      _
    $region25: #{seq2seq_attention_forward.1} parent=1 // pred_fallthru
      _
    // Predicated region
    $region26: #{seq2seq_attention_forward.1} parent=1 // pred_check
      _
    $region27: #{seq2seq_attention_forward.1} parent=1 // pred_check_branch
      %53 = sbr.rel (0) target = $region29
    $region28: #{seq2seq_attention_forward.1} parent=1 // pred_region
      _
    $region29: #{seq2seq_attention_forward.1} parent=1 // pred_fallthru
      _
    // Predicated region
    $region30: #{seq2seq_attention_forward.1} parent=1 // pred_check
      _
    $region31: #{seq2seq_attention_forward.1} parent=1 // pred_check_branch
      %55 = sbr.rel (0) target = $region33
    $region32: #{seq2seq_attention_forward.1} parent=1 // pred_region
      %s57 = ssub.s32 2048, 2048
      %58 = vsyncadd [#allocation8], %s57
      %s59 = sshll.u32 [#allocation9], 4
      %s60 = int_to_ptr.vmem [resolvable:$true] %s59
      %65 = dma.hbm_to_vmem [thread:$0]  %s7, 2048, %s60, [#allocation8], 256, 256, 16
    $region33: #{seq2seq_attention_forward.1} parent=1 // pred_fallthru
      _
    // Predicated region
    $region34: #{seq2seq_attention_forward.1} parent=1 // pred_check
      _
    $region35: #{seq2seq_attention_forward.1} parent=1 // pred_check_branch
      %67 = sbr.rel (0) target = $region37
    $region36: #{seq2seq_attention_forward.1} parent=1 // pred_region
      _
    $region37: #{seq2seq_attention_forward.1} parent=1 // pred_fallthru
      _
    // Predicated region
    $region38: #{seq2seq_attention_forward.1} parent=1 // pred_check
      _
    $region39: #{seq2seq_attention_forward.1} parent=1 // pred_check_branch
      %69 = sbr.rel (0) target = $region41
    $region40: #{seq2seq_attention_forward.1} parent=1 // pred_region
      _
    $region41: #{seq2seq_attention_forward.1} parent=1 // pred_fallthru
      _
    // Predicated region
    $region42: #{seq2seq_attention_forward.1} parent=1 // pred_check
      _
    $region43: #{seq2seq_attention_forward.1} parent=1 // pred_check_branch
      %71 = sbr.rel (0) target = $region45
    $region44: #{seq2seq_attention_forward.1} parent=1 // pred_region
      _
    $region45: #{seq2seq_attention_forward.1} parent=1 // pred_fallthru
      _
    // Predicated region
    $region46: #{seq2seq_attention_forward.1} parent=1 // pred_check
      _
    $region47: #{seq2seq_attention_forward.1} parent=1 // pred_check_branch
      %73 = sbr.rel (0) target = $region49
    $region48: #{seq2seq_attention_forward.1} parent=1 // pred_region
      _
    $region49: #{seq2seq_attention_forward.1} parent=1 // pred_fallthru
      _
    // Predicated region
    $region50: #{seq2seq_attention_forward.1} parent=1 // pred_check
      _
    $region51: #{seq2seq_attention_forward.1} parent=1 // pred_check_branch
      %75 = sbr.rel (0) target = $region53
    $region52: #{seq2seq_attention_forward.1} parent=1 // pred_region
      %76 = dma.done [#allocation5], 1024
    $region53: #{seq2seq_attention_forward.1} parent=1 // pred_fallthru
      _
    // Predicated region
    $region54: #{seq2seq_attention_forward.1} parent=1 // pred_check
      _
    $region55: #{seq2seq_attention_forward.1} parent=1 // pred_check_branch
      %78 = sbr.rel (0) target = $region57
    $region56: #{seq2seq_attention_forward.1} parent=1 // pred_region
      %79 = dma.done [#allocation8], 1024
    $region57: #{seq2seq_attention_forward.1} parent=1 // pred_fallthru
      _
    // Predicated region
    $region58: #{seq2seq_attention_forward.1} parent=1 // pred_check
      _
    $region59: #{seq2seq_attention_forward.1} parent=1 // pred_check_branch
      %81 = sbr.rel (0) target = $region61
    $region60: #{seq2seq_attention_forward.1} parent=1 // pred_region
      %82 = dma.done [#allocation8], 2048
    $region61: #{seq2seq_attention_forward.1} parent=1 // pred_fallthru
      _
    %v83 = vld [vmem:[%s0] sm:$0xff]
    %v84 = vld [vmem:[%s0 + $0x8] sm:$0xff]
    %v85 = vlaneseq
    %v86 = vand.u32 %v85, 127
    %87 = vset.pattern.permute.xlu0 0
    %88 = vperm.xlu0 %87, %v83
    %v89 = vpop.permute.xlu0 %88
    %90 = vset.pattern.permute.xlu0 0
    %91 = vperm.xlu0 %90, %v84
    %v92 = vpop.permute.xlu0 %91
    %vm93 = vcmp.eq.s32.totalorder %v86, %v89
    %vm94 = vcmp.eq.s32.totalorder %v86, %v92
    %v95 = vsel %vm93, 1, 0
    %v96 = vsel %vm94, 1, 0
    %v97 = vcvt.s32.f32 %v95
    %v98 = vcvt.s32.f32 %v96
    %99 = vset.pattern.permute.xlu0 1
    %100 = vperm.xlu0 %99, %v83
    %v101 = vpop.permute.xlu0 %100
    %102 = vset.pattern.permute.xlu0 1
    %103 = vperm.xlu0 %102, %v84
    %v104 = vpop.permute.xlu0 %103
    %vm105 = vcmp.eq.s32.totalorder %v86, %v101
    %vm106 = vcmp.eq.s32.totalorder %v86, %v104
    %v107 = vsel %vm105, 1, 0
    %v108 = vsel %vm106, 1, 0
    %v109 = vcvt.s32.f32 %v107
    %v110 = vcvt.s32.f32 %v108
    %v111 = vld [vmem:[%s1] sm:$0xff]
    %v112 = vld [vmem:[%s1 + $0x8] sm:$0xff]
    %v113 = vld [vmem:[%s1 + $0x10] sm:$0xff]
    %v114 = vld [vmem:[%s1 + $0x18] sm:$0xff]
    %v115 = vld [vmem:[%s1 + $0x20] sm:$0xff]
    %v116 = vld [vmem:[%s1 + $0x28] sm:$0xff]
    %v117 = vld [vmem:[%s1 + $0x30] sm:$0x3]
    %vm118 = vcmask 408576
    %v120 = vsel %vm118, %v97, 0
    %v123 = vsel %vm118, %v98, 0
    %vm125 = vcmask 1041408
    %v127 = vsel %vm125, %v117, 0
    %129 = vmatprep.subr.mxu0 0.0
    %130 = vmatpush1.msra.mxu0 %v111
    %131 = vmatprep.subr.mxu0 0.0
    %132 = vmatpush1.msra.mxu0 %v112
    %133 = vmatprep.subr.mxu0 0.0
    %134 = vmatpush1.msra.mxu0 %v113
    %135 = vmatprep.subr.mxu0 0.0
    %136 = vmatpush1.msra.mxu0 %v114
    %137 = vmatprep.subr.mxu0 0.0
    %138 = vmatpush1.msra.mxu0 %v115
    %139 = vmatprep.subr.mxu0 0.0
    %140 = vmatpush1.msra.mxu0 %v116
    %141 = vmatprep.subr.mxu0 0.0
    %142 = vmatpush1.msra.mxu0 %v127
    %143 = vmatprep.subr.mxu0 0.0
    %144 = vmatpush1.msra.mxu0 0.0
    %145 = vmatprep.subr.mxu0 0.0
    %146 = vmatpush1.msra.mxu0 0.0
    %147 = vmatprep.subr.mxu0 0.0
    %148 = vmatpush1.msra.mxu0 0.0
    %149 = vmatprep.subr.mxu0 0.0
    %150 = vmatpush1.msra.mxu0 0.0
    %151 = vmatprep.subr.mxu0 0.0
    %152 = vmatpush1.msra.mxu0 0.0
    %153 = vmatprep.subr.mxu0 0.0
    %154 = vmatpush1.msra.mxu0 0.0
    %155 = vmatprep.subr.mxu0 0.0
    %156 = vmatpush1.msra.mxu0 0.0
    %157 = vmatprep.subr.mxu0 0.0
    %158 = vmatpush1.msra.mxu0 0.0
    %159 = vmatprep.subr.mxu0 0.0
    %160 = vmatpush1.msra.mxu0 0.0
    %161 = vmatprep.subr.mxu0 0.0
    %162 = vmatpush1.msra.mxu0 0.0
    %163 = vmatprep.subr.mxu0 0.0
    %164 = vmatpush1.msra.mxu0 0.0
    %165 = vmatprep.subr.mxu0 0.0
    %166 = vmatpush1.msra.mxu0 0.0
    %167 = vmatprep.subr.mxu0 0.0
    %168 = vmatpush1.msra.mxu0 0.0
    %169 = vmatprep.subr.mxu0 0.0
    %170 = vmatpush1.msra.mxu0 0.0
    %171 = vmatprep.subr.mxu0 0.0
    %172 = vmatpush1.msra.mxu0 0.0
    %173 = vmatprep.subr.mxu0 0.0
    %174 = vmatpush1.msra.mxu0 0.0
    %175 = vmatprep.subr.mxu0 0.0
    %176 = vmatpush1.msra.mxu0 0.0
    %177 = vmatprep.subr.mxu0 0.0
    %178 = vmatpush1.msra.mxu0 0.0
    %179 = vmatprep.subr.mxu0 0.0
    %180 = vmatpush1.msra.mxu0 0.0
    %181 = vmatprep.subr.mxu0 0.0
    %182 = vmatpush1.msra.mxu0 0.0
    %183 = vmatprep.subr.mxu0 0.0
    %184 = vmatpush1.msra.mxu0 0.0
    %185 = vmatprep.subr.mxu0 0.0
    %186 = vmatpush1.msra.mxu0 0.0
    %187 = vmatprep.subr.mxu0 0.0
    %188 = vmatpush1.msra.mxu0 0.0
    %189 = vmatprep.subr.mxu0 0.0
    %190 = vmatpush1.msra.mxu0 0.0
    %191 = vmatprep.subr.mxu0 0.0
    %192 = vmatpush1.msra.mxu0 0.0
    %193 = vmatprep.mubr.f32.mxu0 0.0
    %194 = vmatmul.mubr.f32.gmra.mrb[0].mxu0 %v120
    %v195 = vpop.f32.mrb[0].mxu0
    %v196 = vadd.f32 0.0, %v195
    %v197 = vpop.f32.mrb[0].mxu0
    %198 = vmatprep.mubr.f32.mxu0 0.0
    %199 = vmatmul.mubr.f32.gmra.mrb[0].mxu0 %v123
    %v200 = vpop.f32.mrb[0].mxu0
    %v201 = vadd.f32 0.0, %v200
    %v202 = vpop.f32.mrb[0].mxu0
    %203 = vdwg.mxu0
    %v205 = vsel %vm118, %v109, 0
    %v208 = vsel %vm118, %v110, 0
    %210 = vmatprep.subr.mxu0 0.0
    %211 = vmatpush1.msra.mxu0 %v111
    %212 = vmatprep.subr.mxu0 0.0
    %213 = vmatpush1.msra.mxu0 %v112
    %214 = vmatprep.subr.mxu0 0.0
    %215 = vmatpush1.msra.mxu0 %v113
    %216 = vmatprep.subr.mxu0 0.0
    %217 = vmatpush1.msra.mxu0 %v114
    %218 = vmatprep.subr.mxu0 0.0
    %219 = vmatpush1.msra.mxu0 %v115
    %220 = vmatprep.subr.mxu0 0.0
    %221 = vmatpush1.msra.mxu0 %v116
    %222 = vmatprep.subr.mxu0 0.0
    %223 = vmatpush1.msra.mxu0 %v127
    %224 = vmatprep.subr.mxu0 0.0
    %225 = vmatpush1.msra.mxu0 0.0
    %226 = vmatprep.subr.mxu0 0.0
    %227 = vmatpush1.msra.mxu0 0.0
    %228 = vmatprep.subr.mxu0 0.0
    %229 = vmatpush1.msra.mxu0 0.0
    %230 = vmatprep.subr.mxu0 0.0
    %231 = vmatpush1.msra.mxu0 0.0
    %232 = vmatprep.subr.mxu0 0.0
    %233 = vmatpush1.msra.mxu0 0.0
    %234 = vmatprep.subr.mxu0 0.0
    %235 = vmatpush1.msra.mxu0 0.0
    %236 = vmatprep.subr.mxu0 0.0
    %237 = vmatpush1.msra.mxu0 0.0
    %238 = vmatprep.subr.mxu0 0.0
    %239 = vmatpush1.msra.mxu0 0.0
    %240 = vmatprep.subr.mxu0 0.0
    %241 = vmatpush1.msra.mxu0 0.0
    %242 = vmatprep.subr.mxu0 0.0
    %243 = vmatpush1.msra.mxu0 0.0
    %244 = vmatprep.subr.mxu0 0.0
    %245 = vmatpush1.msra.mxu0 0.0
    %246 = vmatprep.subr.mxu0 0.0
    %247 = vmatpush1.msra.mxu0 0.0
    %248 = vmatprep.subr.mxu0 0.0
    %249 = vmatpush1.msra.mxu0 0.0
    %250 = vmatprep.subr.mxu0 0.0
    %251 = vmatpush1.msra.mxu0 0.0
    %252 = vmatprep.subr.mxu0 0.0
    %253 = vmatpush1.msra.mxu0 0.0
    %254 = vmatprep.subr.mxu0 0.0
    %255 = vmatpush1.msra.mxu0 0.0
    %256 = vmatprep.subr.mxu0 0.0
    %257 = vmatpush1.msra.mxu0 0.0
    %258 = vmatprep.subr.mxu0 0.0
    %259 = vmatpush1.msra.mxu0 0.0
    %260 = vmatprep.subr.mxu0 0.0
    %261 = vmatpush1.msra.mxu0 0.0
    %262 = vmatprep.subr.mxu0 0.0
    %263 = vmatpush1.msra.mxu0 0.0
    %264 = vmatprep.subr.mxu0 0.0
    %265 = vmatpush1.msra.mxu0 0.0
    %266 = vmatprep.subr.mxu0 0.0
    %267 = vmatpush1.msra.mxu0 0.0
    %268 = vmatprep.subr.mxu0 0.0
    %269 = vmatpush1.msra.mxu0 0.0
    %270 = vmatprep.subr.mxu0 0.0
    %271 = vmatpush1.msra.mxu0 0.0
    %272 = vmatprep.subr.mxu0 0.0
    %273 = vmatpush1.msra.mxu0 0.0
    %274 = vmatprep.mubr.f32.mxu0 0.0
    %275 = vmatmul.mubr.f32.gmra.mrb[0].mxu0 %v205
    %v276 = vpop.f32.mrb[0].mxu0
    %v277 = vadd.f32 0.0, %v276
    %v278 = vpop.f32.mrb[0].mxu0
    %279 = vmatprep.mubr.f32.mxu0 0.0
    %280 = vmatmul.mubr.f32.gmra.mrb[0].mxu0 %v208
    %v281 = vpop.f32.mrb[0].mxu0
    %v282 = vadd.f32 0.0, %v281
    %v283 = vpop.f32.mrb[0].mxu0
    %284 = vdwg.mxu0
    %v285 = vld [vmem:[#allocation4] sm:$0xff]
    %v286 = vld [vmem:[#allocation4 + $0x8] sm:$0xff]
    %v287 = vld [vmem:[#allocation4 + $0x10] sm:$0xff]
    %v288 = vld [vmem:[#allocation4 + $0x18] sm:$0xff]
    %v289 = vld [vmem:[#allocation4 + $0x20] sm:$0xff]
    %v290 = vld [vmem:[#allocation4 + $0x28] sm:$0xff]
    %v291 = vld [vmem:[#allocation4 + $0x30] sm:$0xff]
    %v292 = vld [vmem:[#allocation4 + $0x38] sm:$0xff]
    %v293 = vld [vmem:[#allocation7] sm:$0xff]
    %v294 = vld [vmem:[#allocation7 + $0x8] sm:$0xff]
    %v295 = vld [vmem:[#allocation7 + $0x10] sm:$0xff]
    %v296 = vld [vmem:[#allocation7 + $0x18] sm:$0xff]
    %v297 = vld [vmem:[#allocation7 + $0x20] sm:$0xff]
    %v298 = vld [vmem:[#allocation7 + $0x28] sm:$0xff]
    %v299 = vld [vmem:[#allocation7 + $0x30] sm:$0xff]
    %v300 = vld [vmem:[#allocation7 + $0x38] sm:$0xff]
    %vm301 = vcmask 261120
    %v303 = vsel %vm301, %v277, 0
    %v306 = vsel %vm301, %v282, 0
    %308 = vmatprep.subr.mxu0 %v294
    %309 = vmatpush1.msra.mxu0 %v293
    %310 = vmatprep.subr.mxu0 %v296
    %311 = vmatpush1.msra.mxu0 %v295
    %312 = vmatprep.subr.mxu0 %v298
    %313 = vmatpush1.msra.mxu0 %v297
    %314 = vmatprep.subr.mxu0 %v300
    %315 = vmatpush1.msra.mxu0 %v299
    %316 = vmatprep.subr.mxu0 0.0
    %317 = vmatpush1.msra.mxu0 0.0
    %318 = vmatprep.subr.mxu0 0.0
    %319 = vmatpush1.msra.mxu0 0.0
    %320 = vmatprep.subr.mxu0 0.0
    %321 = vmatpush1.msra.mxu0 0.0
    %322 = vmatprep.subr.mxu0 0.0
    %323 = vmatpush1.msra.mxu0 0.0
    %324 = vmatprep.subr.mxu0 0.0
    %325 = vmatpush1.msra.mxu0 0.0
    %326 = vmatprep.subr.mxu0 0.0
    %327 = vmatpush1.msra.mxu0 0.0
    %328 = vmatprep.subr.mxu0 0.0
    %329 = vmatpush1.msra.mxu0 0.0
    %330 = vmatprep.subr.mxu0 0.0
    %331 = vmatpush1.msra.mxu0 0.0
    %332 = vmatprep.subr.mxu0 0.0
    %333 = vmatpush1.msra.mxu0 0.0
    %334 = vmatprep.subr.mxu0 0.0
    %335 = vmatpush1.msra.mxu0 0.0
    %336 = vmatprep.subr.mxu0 0.0
    %337 = vmatpush1.msra.mxu0 0.0
    %338 = vmatprep.subr.mxu0 0.0
    %339 = vmatpush1.msra.mxu0 0.0
    %340 = vmatprep.subr.mxu0 0.0
    %341 = vmatpush1.msra.mxu0 0.0
    %342 = vmatprep.subr.mxu0 0.0
    %343 = vmatpush1.msra.mxu0 0.0
    %344 = vmatprep.subr.mxu0 0.0
    %345 = vmatpush1.msra.mxu0 0.0
    %346 = vmatprep.subr.mxu0 0.0
    %347 = vmatpush1.msra.mxu0 0.0
    %348 = vmatprep.subr.mxu0 0.0
    %349 = vmatpush1.msra.mxu0 0.0
    %350 = vmatprep.subr.mxu0 0.0
    %351 = vmatpush1.msra.mxu0 0.0
    %352 = vmatprep.subr.mxu0 0.0
    %353 = vmatpush1.msra.mxu0 0.0
    %354 = vmatprep.subr.mxu0 0.0
    %355 = vmatpush1.msra.mxu0 0.0
    %356 = vmatprep.subr.mxu0 0.0
    %357 = vmatpush1.msra.mxu0 0.0
    %358 = vmatprep.subr.mxu0 0.0
    %359 = vmatpush1.msra.mxu0 0.0
    %360 = vmatprep.subr.mxu0 0.0
    %361 = vmatpush1.msra.mxu0 0.0
    %362 = vmatprep.subr.mxu0 0.0
    %363 = vmatpush1.msra.mxu0 0.0
    %364 = vmatprep.subr.mxu0 0.0
    %365 = vmatpush1.msra.mxu0 0.0
    %366 = vmatprep.subr.mxu0 0.0
    %367 = vmatpush1.msra.mxu0 0.0
    %368 = vmatprep.subr.mxu0 0.0
    %369 = vmatpush1.msra.mxu0 0.0
    %370 = vmatprep.subr.mxu0 0.0
    %371 = vmatpush1.msra.mxu0 0.0
    %372 = vmatprep.mubr.f32.mxu0 0.0
    %373 = vmatmul.mubr.f32.gmra.mrb[0].mxu0 %v303
    %v374 = vpop.f32.mrb[0].mxu0
    %v375 = vadd.f32 0.0, %v374
    %v376 = vpop.f32.mrb[0].mxu0
    %v377 = vadd.f32 0.0, %v376
    %378 = vmatprep.mubr.f32.mxu0 0.0
    %379 = vmatmul.mubr.f32.gmra.mrb[0].mxu0 %v306
    %v380 = vpop.f32.mrb[0].mxu0
    %v381 = vadd.f32 0.0, %v380
    %v382 = vpop.f32.mrb[0].mxu0
    %v383 = vadd.f32 0.0, %v382
    %384 = vdwg.mxu0
    %v386 = vsel %vm301, %v196, 0
    %v389 = vsel %vm301, %v201, 0
    %391 = vmatprep.subr.mxu0 %v286
    %392 = vmatpush1.msra.mxu0 %v285
    %393 = vmatprep.subr.mxu0 %v288
    %394 = vmatpush1.msra.mxu0 %v287
    %395 = vmatprep.subr.mxu0 %v290
    %396 = vmatpush1.msra.mxu0 %v289
    %397 = vmatprep.subr.mxu0 %v292
    %398 = vmatpush1.msra.mxu0 %v291
    %399 = vmatprep.subr.mxu0 0.0
    %400 = vmatpush1.msra.mxu0 0.0
    %401 = vmatprep.subr.mxu0 0.0
    %402 = vmatpush1.msra.mxu0 0.0
    %403 = vmatprep.subr.mxu0 0.0
    %404 = vmatpush1.msra.mxu0 0.0
    %405 = vmatprep.subr.mxu0 0.0
    %406 = vmatpush1.msra.mxu0 0.0
    %407 = vmatprep.subr.mxu0 0.0
    %408 = vmatpush1.msra.mxu0 0.0
    %409 = vmatprep.subr.mxu0 0.0
    %410 = vmatpush1.msra.mxu0 0.0
    %411 = vmatprep.subr.mxu0 0.0
    %412 = vmatpush1.msra.mxu0 0.0
    %413 = vmatprep.subr.mxu0 0.0
    %414 = vmatpush1.msra.mxu0 0.0
    %415 = vmatprep.subr.mxu0 0.0
    %416 = vmatpush1.msra.mxu0 0.0
    %417 = vmatprep.subr.mxu0 0.0
    %418 = vmatpush1.msra.mxu0 0.0
    %419 = vmatprep.subr.mxu0 0.0
    %420 = vmatpush1.msra.mxu0 0.0
    %421 = vmatprep.subr.mxu0 0.0
    %422 = vmatpush1.msra.mxu0 0.0
    %423 = vmatprep.subr.mxu0 0.0
    %424 = vmatpush1.msra.mxu0 0.0
    %425 = vmatprep.subr.mxu0 0.0
    %426 = vmatpush1.msra.mxu0 0.0
    %427 = vmatprep.subr.mxu0 0.0
    %428 = vmatpush1.msra.mxu0 0.0
    %429 = vmatprep.subr.mxu0 0.0
    %430 = vmatpush1.msra.mxu0 0.0
    %431 = vmatprep.subr.mxu0 0.0
    %432 = vmatpush1.msra.mxu0 0.0
    %433 = vmatprep.subr.mxu0 0.0
    %434 = vmatpush1.msra.mxu0 0.0
    %435 = vmatprep.subr.mxu0 0.0
    %436 = vmatpush1.msra.mxu0 0.0
    %437 = vmatprep.subr.mxu0 0.0
    %438 = vmatpush1.msra.mxu0 0.0
    %439 = vmatprep.subr.mxu0 0.0
    %440 = vmatpush1.msra.mxu0 0.0
    %441 = vmatprep.subr.mxu0 0.0
    %442 = vmatpush1.msra.mxu0 0.0
    %443 = vmatprep.subr.mxu0 0.0
    %444 = vmatpush1.msra.mxu0 0.0
    %445 = vmatprep.subr.mxu0 0.0
    %446 = vmatpush1.msra.mxu0 0.0
    %447 = vmatprep.subr.mxu0 0.0
    %448 = vmatpush1.msra.mxu0 0.0
    %449 = vmatprep.subr.mxu0 0.0
    %450 = vmatpush1.msra.mxu0 0.0
    %451 = vmatprep.subr.mxu0 0.0
    %452 = vmatpush1.msra.mxu0 0.0
    %453 = vmatprep.subr.mxu0 0.0
    %454 = vmatpush1.msra.mxu0 0.0
    %455 = vmatprep.mubr.f32.mxu0 0.0
    %456 = vmatmul.mubr.f32.gmra.mrb[0].mxu0 %v386
    %v457 = vpop.f32.mrb[0].mxu0
    %v458 = vadd.f32 %v375, %v457
    %v459 = vpop.f32.mrb[0].mxu0
    %v460 = vadd.f32 %v377, %v459
    %461 = vmatprep.mubr.f32.mxu0 0.0
    %462 = vmatmul.mubr.f32.gmra.mrb[0].mxu0 %v389
    %v463 = vpop.f32.mrb[0].mxu0
    %v464 = vadd.f32 %v381, %v463
    %v465 = vpop.f32.mrb[0].mxu0
    %v466 = vadd.f32 %v383, %v465
    %467 = vdwg.mxu0
    %v468 = vld [vmem:[%s5] sm:$0x3]
    %v470 = vlaneseq
    %v471 = vshrl.u32 %v470, 7
    %v472 = vsub.s32 0, %v471
    %v473 = vrot.slane %v468, %v472
    %v474 = vlaneseq
    %v475 = vshrl.u32 %v474, 7
    %v476 = vsub.s32 1, %v475
    %v477 = vrot.slane %v468, %v476
    %v480 = vadd.f32 %v458, %v473
    %v481 = vadd.f32 %v460, %v477
    %v482 = vadd.f32 %v464, %v473
    %v483 = vadd.f32 %v466, %v477
    %v484 = vld [vmem:[%s4] sm:$0xff]
    %v485 = vld [vmem:[%s4 + $0x8] sm:$0xff]
    %v486 = vld [vmem:[%s4 + $0x10] sm:$0xff]
    %v487 = vld [vmem:[%s4 + $0x18] sm:$0xff]
    %v488 = vld [vmem:[%s4 + $0x20] sm:$0xff]
    %v489 = vld [vmem:[%s4 + $0x28] sm:$0xff]
    %v490 = vld [vmem:[%s4 + $0x30] sm:$0xff]
    %v491 = vld [vmem:[%s4 + $0x38] sm:$0xff]
    %v492 = vld [vmem:[%s4 + $0x40] sm:$0xff]
    %v493 = vld [vmem:[%s4 + $0x48] sm:$0xff]
    %v494 = vld [vmem:[%s4 + $0x50] sm:$0xff]
    %v495 = vld [vmem:[%s4 + $0x58] sm:$0xff]
    %v496 = vld [vmem:[%s4 + $0x60] sm:$0xff]
    %v497 = vld [vmem:[%s4 + $0x68] sm:$0xff]
    %v498 = vld [vmem:[%s4 + $0x70] sm:$0xff]
    %v499 = vld [vmem:[%s4 + $0x78] sm:$0xff]
    %vm500 = vcmask 523264
    %v502 = vsel %vm500, 0.0, 0
    %504 = vmatprep.subr.mxu0 %v485
    %505 = vmatpush1.msra.mxu0 %v484
    %506 = vmatprep.subr.mxu0 %v487
    %507 = vmatpush1.msra.mxu0 %v486
    %508 = vmatprep.subr.mxu0 %v489
    %509 = vmatpush1.msra.mxu0 %v488
    %510 = vmatprep.subr.mxu0 %v491
    %511 = vmatpush1.msra.mxu0 %v490
    %512 = vmatprep.subr.mxu0 %v493
    %513 = vmatpush1.msra.mxu0 %v492
    %514 = vmatprep.subr.mxu0 %v495
    %515 = vmatpush1.msra.mxu0 %v494
    %516 = vmatprep.subr.mxu0 %v497
    %517 = vmatpush1.msra.mxu0 %v496
    %518 = vmatprep.subr.mxu0 %v499
    %519 = vmatpush1.msra.mxu0 %v498
    %520 = vmatprep.subr.mxu0 0.0
    %521 = vmatpush1.msra.mxu0 0.0
    %522 = vmatprep.subr.mxu0 0.0
    %523 = vmatpush1.msra.mxu0 0.0
    %524 = vmatprep.subr.mxu0 0.0
    %525 = vmatpush1.msra.mxu0 0.0
    %526 = vmatprep.subr.mxu0 0.0
    %527 = vmatpush1.msra.mxu0 0.0
    %528 = vmatprep.subr.mxu0 0.0
    %529 = vmatpush1.msra.mxu0 0.0
    %530 = vmatprep.subr.mxu0 0.0
    %531 = vmatpush1.msra.mxu0 0.0
    %532 = vmatprep.subr.mxu0 0.0
    %533 = vmatpush1.msra.mxu0 0.0
    %534 = vmatprep.subr.mxu0 0.0
    %535 = vmatpush1.msra.mxu0 0.0
    %536 = vmatprep.subr.mxu0 0.0
    %537 = vmatpush1.msra.mxu0 0.0
    %538 = vmatprep.subr.mxu0 0.0
    %539 = vmatpush1.msra.mxu0 0.0
    %540 = vmatprep.subr.mxu0 0.0
    %541 = vmatpush1.msra.mxu0 0.0
    %542 = vmatprep.subr.mxu0 0.0
    %543 = vmatpush1.msra.mxu0 0.0
    %544 = vmatprep.subr.mxu0 0.0
    %545 = vmatpush1.msra.mxu0 0.0
    %546 = vmatprep.subr.mxu0 0.0
    %547 = vmatpush1.msra.mxu0 0.0
    %548 = vmatprep.subr.mxu0 0.0
    %549 = vmatpush1.msra.mxu0 0.0
    %550 = vmatprep.subr.mxu0 0.0
    %551 = vmatpush1.msra.mxu0 0.0
    %552 = vmatprep.subr.mxu0 0.0
    %553 = vmatpush1.msra.mxu0 0.0
    %554 = vmatprep.subr.mxu0 0.0
    %555 = vmatpush1.msra.mxu0 0.0
    %556 = vmatprep.subr.mxu0 0.0
    %557 = vmatpush1.msra.mxu0 0.0
    %558 = vmatprep.subr.mxu0 0.0
    %559 = vmatpush1.msra.mxu0 0.0
    %560 = vmatprep.subr.mxu0 0.0
    %561 = vmatpush1.msra.mxu0 0.0
    %562 = vmatprep.subr.mxu0 0.0
    %563 = vmatpush1.msra.mxu0 0.0
    %564 = vmatprep.subr.mxu0 0.0
    %565 = vmatpush1.msra.mxu0 0.0
    %566 = vmatprep.subr.mxu0 0.0
    %567 = vmatpush1.msra.mxu0 0.0
    %568 = vmatprep.mubr.f32.mxu0 0.0
    %569 = vmatmul.mubr.f32.gmra.mrb[0].mxu0 %v502
    %v570 = vpop.f32.mrb[0].mxu0
    %v571 = vadd.f32 0.0, %v570
    %v572 = vpop.f32.mrb[0].mxu0
    %v573 = vadd.f32 0.0, %v572
    %574 = vdwg.mxu0
    %v575 = vadd.f32 %v480, %v571
    %v576 = vadd.f32 %v481, %v573
    %v577 = vxor.u32 %v575, 2147483648
    %v578 = vxor.u32 %v576, 2147483648
    %v579 = vmul.f32 %v577, 1.442695
    %v580 = vpow.pop %v579
    %v581 = vmul.f32 %v578, 1.442695
    %v582 = vpow.pop %v581
    %v583 = vadd.f32 %v580, 1.0
    %v584 = vadd.f32 %v582, 1.0
    %v585 = vrcp.pop %v583
    %v586 = vmul.f32 1.0, %v585
    %v587 = vrcp.pop %v584
    %v588 = vmul.f32 1.0, %v587
    %v589 = vtanh.pop %v576
    %v590 = vmul.f32 %v586, 0.0
    %v591 = vmul.f32 %v586, %v589
    %593 = vrot.lane.b32.xlu0 %v591, 64
    %v594 = vpop.permute.xlu0 %593
    %v596 = vadd.f32 %v590, %v594
    %v597 = vtanh.pop %v596
    %v598 = vmul.f32 %v588, %v597
    %600 = vrot.lane.b32.xlu0 %v598, 64
    %v601 = vpop.permute.xlu0 %600
    %vm603 = vcmask 517120
    %604 = vst.msk [vmem:[#allocation2] sm:$0x3] %vm603, %v601
    %vm605 = vcmask 1041920
    %606 = vst.msk [vmem:[#allocation2 + $0xe] sm:$0x3] %vm605, %v598
    %v607 = vsel %vm500, %v601, 0
    %609 = vmatprep.subr.mxu0 %v485
    %610 = vmatpush1.msra.mxu0 %v484
    %611 = vmatprep.subr.mxu0 %v487
    %612 = vmatpush1.msra.mxu0 %v486
    %613 = vmatprep.subr.mxu0 %v489
    %614 = vmatpush1.msra.mxu0 %v488
    %615 = vmatprep.subr.mxu0 %v491
    %616 = vmatpush1.msra.mxu0 %v490
    %617 = vmatprep.subr.mxu0 %v493
    %618 = vmatpush1.msra.mxu0 %v492
    %619 = vmatprep.subr.mxu0 %v495
    %620 = vmatpush1.msra.mxu0 %v494
    %621 = vmatprep.subr.mxu0 %v497
    %622 = vmatpush1.msra.mxu0 %v496
    %623 = vmatprep.subr.mxu0 %v499
    %624 = vmatpush1.msra.mxu0 %v498
    %625 = vmatprep.subr.mxu0 0.0
    %626 = vmatpush1.msra.mxu0 0.0
    %627 = vmatprep.subr.mxu0 0.0
    %628 = vmatpush1.msra.mxu0 0.0
    %629 = vmatprep.subr.mxu0 0.0
    %630 = vmatpush1.msra.mxu0 0.0
    %631 = vmatprep.subr.mxu0 0.0
    %632 = vmatpush1.msra.mxu0 0.0
    %633 = vmatprep.subr.mxu0 0.0
    %634 = vmatpush1.msra.mxu0 0.0
    %635 = vmatprep.subr.mxu0 0.0
    %636 = vmatpush1.msra.mxu0 0.0
    %637 = vmatprep.subr.mxu0 0.0
    %638 = vmatpush1.msra.mxu0 0.0
    %639 = vmatprep.subr.mxu0 0.0
    %640 = vmatpush1.msra.mxu0 0.0
    %641 = vmatprep.subr.mxu0 0.0
    %642 = vmatpush1.msra.mxu0 0.0
    %643 = vmatprep.subr.mxu0 0.0
    %644 = vmatpush1.msra.mxu0 0.0
    %645 = vmatprep.subr.mxu0 0.0
    %646 = vmatpush1.msra.mxu0 0.0
    %647 = vmatprep.subr.mxu0 0.0
    %648 = vmatpush1.msra.mxu0 0.0
    %649 = vmatprep.subr.mxu0 0.0
    %650 = vmatpush1.msra.mxu0 0.0
    %651 = vmatprep.subr.mxu0 0.0
    %652 = vmatpush1.msra.mxu0 0.0
    %653 = vmatprep.subr.mxu0 0.0
    %654 = vmatpush1.msra.mxu0 0.0
    %655 = vmatprep.subr.mxu0 0.0
    %656 = vmatpush1.msra.mxu0 0.0
    %657 = vmatprep.subr.mxu0 0.0
    %658 = vmatpush1.msra.mxu0 0.0
    %659 = vmatprep.subr.mxu0 0.0
    %660 = vmatpush1.msra.mxu0 0.0
    %661 = vmatprep.subr.mxu0 0.0
    %662 = vmatpush1.msra.mxu0 0.0
    %663 = vmatprep.subr.mxu0 0.0
    %664 = vmatpush1.msra.mxu0 0.0
    %665 = vmatprep.subr.mxu0 0.0
    %666 = vmatpush1.msra.mxu0 0.0
    %667 = vmatprep.subr.mxu0 0.0
    %668 = vmatpush1.msra.mxu0 0.0
    %669 = vmatprep.subr.mxu0 0.0
    %670 = vmatpush1.msra.mxu0 0.0
    %671 = vmatprep.subr.mxu0 0.0
    %672 = vmatpush1.msra.mxu0 0.0
    %673 = vmatprep.mubr.f32.mxu0 0.0
    %674 = vmatmul.mubr.f32.gmra.mrb[0].mxu0 %v607
    %v675 = vpop.f32.mrb[0].mxu0
    %v676 = vadd.f32 0.0, %v675
    %v677 = vpop.f32.mrb[0].mxu0
    %v678 = vadd.f32 0.0, %v677
    %679 = vdwg.mxu0
    %v682 = vrot.slane %v676, 6
    %v683 = vrot.slane %v678, 6
    %v686 = vadd.f32 %v480, %v682
    %v687 = vadd.f32 %v481, %v683
    %v688 = vxor.u32 %v686, 2147483648
    %v689 = vxor.u32 %v687, 2147483648
    %v690 = vmul.f32 %v688, 1.442695
    %v691 = vpow.pop %v690
    %v692 = vmul.f32 %v689, 1.442695
    %v693 = vpow.pop %v692
    %v694 = vadd.f32 %v691, 1.0
    %v695 = vadd.f32 %v693, 1.0
    %v696 = vrcp.pop %v694
    %v697 = vmul.f32 1.0, %v696
    %v698 = vrcp.pop %v695
    %v699 = vmul.f32 1.0, %v698
    %v700 = vtanh.pop %v687
    %v702 = vrot.slane %v596, 6
    %v704 = vmul.f32 %v697, %v702
    %v705 = vmul.f32 %v697, %v700
    %707 = vrot.lane.b32.xlu0 %v705, 64
    %v708 = vpop.permute.xlu0 %707
    %v710 = vadd.f32 %v704, %v708
    %v711 = vtanh.pop %v710
    %v712 = vmul.f32 %v699, %v711
    %714 = vrot.lane.b32.xlu0 %v712, 64
    %v715 = vpop.permute.xlu0 %714
    %vm717 = vcmask 519170
    %718 = vst.msk [vmem:[#allocation2] sm:$0xc] %vm717, %v715
    %vm719 = vcmask 1043970
    %720 = vst.msk [vmem:[#allocation2 + $0xa] sm:$0xc] %vm719, %v712
    %v721 = vrot.slane %v712, 2
    %722 = vrot.lane.b32.xlu0 %v721, 64
    %v723 = vpop.permute.xlu0 %722
    %v724 = vsel %vm500, %v723, 0
    %726 = vmatprep.subr.mxu0 %v485
    %727 = vmatpush1.msra.mxu0 %v484
    %728 = vmatprep.subr.mxu0 %v487
    %729 = vmatpush1.msra.mxu0 %v486
    %730 = vmatprep.subr.mxu0 %v489
    %731 = vmatpush1.msra.mxu0 %v488
    %732 = vmatprep.subr.mxu0 %v491
    %733 = vmatpush1.msra.mxu0 %v490
    %734 = vmatprep.subr.mxu0 %v493
    %735 = vmatpush1.msra.mxu0 %v492
    %736 = vmatprep.subr.mxu0 %v495
    %737 = vmatpush1.msra.mxu0 %v494
    %738 = vmatprep.subr.mxu0 %v497
    %739 = vmatpush1.msra.mxu0 %v496
    %740 = vmatprep.subr.mxu0 %v499
    %741 = vmatpush1.msra.mxu0 %v498
    %742 = vmatprep.subr.mxu0 0.0
    %743 = vmatpush1.msra.mxu0 0.0
    %744 = vmatprep.subr.mxu0 0.0
    %745 = vmatpush1.msra.mxu0 0.0
    %746 = vmatprep.subr.mxu0 0.0
    %747 = vmatpush1.msra.mxu0 0.0
    %748 = vmatprep.subr.mxu0 0.0
    %749 = vmatpush1.msra.mxu0 0.0
    %750 = vmatprep.subr.mxu0 0.0
    %751 = vmatpush1.msra.mxu0 0.0
    %752 = vmatprep.subr.mxu0 0.0
    %753 = vmatpush1.msra.mxu0 0.0
    %754 = vmatprep.subr.mxu0 0.0
    %755 = vmatpush1.msra.mxu0 0.0
    %756 = vmatprep.subr.mxu0 0.0
    %757 = vmatpush1.msra.mxu0 0.0
    %758 = vmatprep.subr.mxu0 0.0
    %759 = vmatpush1.msra.mxu0 0.0
    %760 = vmatprep.subr.mxu0 0.0
    %761 = vmatpush1.msra.mxu0 0.0
    %762 = vmatprep.subr.mxu0 0.0
    %763 = vmatpush1.msra.mxu0 0.0
    %764 = vmatprep.subr.mxu0 0.0
    %765 = vmatpush1.msra.mxu0 0.0
    %766 = vmatprep.subr.mxu0 0.0
    %767 = vmatpush1.msra.mxu0 0.0
    %768 = vmatprep.subr.mxu0 0.0
    %769 = vmatpush1.msra.mxu0 0.0
    %770 = vmatprep.subr.mxu0 0.0
    %771 = vmatpush1.msra.mxu0 0.0
    %772 = vmatprep.subr.mxu0 0.0
    %773 = vmatpush1.msra.mxu0 0.0
    %774 = vmatprep.subr.mxu0 0.0
    %775 = vmatpush1.msra.mxu0 0.0
    %776 = vmatprep.subr.mxu0 0.0
    %777 = vmatpush1.msra.mxu0 0.0
    %778 = vmatprep.subr.mxu0 0.0
    %779 = vmatpush1.msra.mxu0 0.0
    %780 = vmatprep.subr.mxu0 0.0
    %781 = vmatpush1.msra.mxu0 0.0
    %782 = vmatprep.subr.mxu0 0.0
    %783 = vmatpush1.msra.mxu0 0.0
    %784 = vmatprep.subr.mxu0 0.0
    %785 = vmatpush1.msra.mxu0 0.0
    %786 = vmatprep.subr.mxu0 0.0
    %787 = vmatpush1.msra.mxu0 0.0
    %788 = vmatprep.subr.mxu0 0.0
    %789 = vmatpush1.msra.mxu0 0.0
    %790 = vmatprep.mubr.f32.mxu0 0.0
    %791 = vmatmul.mubr.f32.gmra.mrb[0].mxu0 %v724
    %v792 = vpop.f32.mrb[0].mxu0
    %v793 = vadd.f32 0.0, %v792
    %v794 = vpop.f32.mrb[0].mxu0
    %v795 = vadd.f32 0.0, %v794
    %796 = vdwg.mxu0
    %v799 = vrot.slane %v793, 4
    %v800 = vrot.slane %v795, 4
    %v803 = vadd.f32 %v480, %v799
    %v804 = vadd.f32 %v481, %v800
    %v805 = vxor.u32 %v803, 2147483648
    %v806 = vxor.u32 %v804, 2147483648
    %v807 = vmul.f32 %v805, 1.442695
    %v808 = vpow.pop %v807
    %v809 = vmul.f32 %v806, 1.442695
    %v810 = vpow.pop %v809
    %v811 = vadd.f32 %v808, 1.0
    %v812 = vadd.f32 %v810, 1.0
    %v813 = vrcp.pop %v811
    %v814 = vmul.f32 1.0, %v813
    %v815 = vrcp.pop %v812
    %v816 = vmul.f32 1.0, %v815
    %v817 = vtanh.pop %v804
    %v819 = vrot.slane %v710, 6
    %v821 = vmul.f32 %v814, %v819
    %v822 = vmul.f32 %v814, %v817
    %824 = vrot.lane.b32.xlu0 %v822, 64
    %v825 = vpop.permute.xlu0 %824
    %v827 = vadd.f32 %v821, %v825
    %v828 = vtanh.pop %v827
    %v829 = vmul.f32 %v816, %v828
    %831 = vrot.lane.b32.xlu0 %v829, 64
    %v832 = vpop.permute.xlu0 %831
    %vm834 = vcmask 521220
    %835 = vst.msk [vmem:[#allocation2] sm:$0x30] %vm834, %v832
    %vm836 = vcmask 1046020
    %837 = vst.msk [vmem:[#allocation2 + $0x6] sm:$0x30] %vm836, %v829
    %v838 = vrot.slane %v829, 4
    %839 = vrot.lane.b32.xlu0 %v838, 64
    %v840 = vpop.permute.xlu0 %839
    %v841 = vsel %vm500, %v840, 0
    %843 = vmatprep.subr.mxu0 %v485
    %844 = vmatpush1.msra.mxu0 %v484
    %845 = vmatprep.subr.mxu0 %v487
    %846 = vmatpush1.msra.mxu0 %v486
    %847 = vmatprep.subr.mxu0 %v489
    %848 = vmatpush1.msra.mxu0 %v488
    %849 = vmatprep.subr.mxu0 %v491
    %850 = vmatpush1.msra.mxu0 %v490
    %851 = vmatprep.subr.mxu0 %v493
    %852 = vmatpush1.msra.mxu0 %v492
    %853 = vmatprep.subr.mxu0 %v495
    %854 = vmatpush1.msra.mxu0 %v494
    %855 = vmatprep.subr.mxu0 %v497
    %856 = vmatpush1.msra.mxu0 %v496
    %857 = vmatprep.subr.mxu0 %v499
    %858 = vmatpush1.msra.mxu0 %v498
    %859 = vmatprep.subr.mxu0 0.0
    %860 = vmatpush1.msra.mxu0 0.0
    %861 = vmatprep.subr.mxu0 0.0
    %862 = vmatpush1.msra.mxu0 0.0
    %863 = vmatprep.subr.mxu0 0.0
    %864 = vmatpush1.msra.mxu0 0.0
    %865 = vmatprep.subr.mxu0 0.0
    %866 = vmatpush1.msra.mxu0 0.0
    %867 = vmatprep.subr.mxu0 0.0
    %868 = vmatpush1.msra.mxu0 0.0
    %869 = vmatprep.subr.mxu0 0.0
    %870 = vmatpush1.msra.mxu0 0.0
    %871 = vmatprep.subr.mxu0 0.0
    %872 = vmatpush1.msra.mxu0 0.0
    %873 = vmatprep.subr.mxu0 0.0
    %874 = vmatpush1.msra.mxu0 0.0
    %875 = vmatprep.subr.mxu0 0.0
    %876 = vmatpush1.msra.mxu0 0.0
    %877 = vmatprep.subr.mxu0 0.0
    %878 = vmatpush1.msra.mxu0 0.0
    %879 = vmatprep.subr.mxu0 0.0
    %880 = vmatpush1.msra.mxu0 0.0
    %881 = vmatprep.subr.mxu0 0.0
    %882 = vmatpush1.msra.mxu0 0.0
    %883 = vmatprep.subr.mxu0 0.0
    %884 = vmatpush1.msra.mxu0 0.0
    %885 = vmatprep.subr.mxu0 0.0
    %886 = vmatpush1.msra.mxu0 0.0
    %887 = vmatprep.subr.mxu0 0.0
    %888 = vmatpush1.msra.mxu0 0.0
    %889 = vmatprep.subr.mxu0 0.0
    %890 = vmatpush1.msra.mxu0 0.0
    %891 = vmatprep.subr.mxu0 0.0
    %892 = vmatpush1.msra.mxu0 0.0
    %893 = vmatprep.subr.mxu0 0.0
    %894 = vmatpush1.msra.mxu0 0.0
    %895 = vmatprep.subr.mxu0 0.0
    %896 = vmatpush1.msra.mxu0 0.0
    %897 = vmatprep.subr.mxu0 0.0
    %898 = vmatpush1.msra.mxu0 0.0
    %899 = vmatprep.subr.mxu0 0.0
    %900 = vmatpush1.msra.mxu0 0.0
    %901 = vmatprep.subr.mxu0 0.0
    %902 = vmatpush1.msra.mxu0 0.0
    %903 = vmatprep.subr.mxu0 0.0
    %904 = vmatpush1.msra.mxu0 0.0
    %905 = vmatprep.subr.mxu0 0.0
    %906 = vmatpush1.msra.mxu0 0.0
    %907 = vmatprep.mubr.f32.mxu0 0.0
    %908 = vmatmul.mubr.f32.gmra.mrb[0].mxu0 %v841
    %v909 = vpop.f32.mrb[0].mxu0
    %v910 = vadd.f32 0.0, %v909
    %v911 = vpop.f32.mrb[0].mxu0
    %v912 = vadd.f32 0.0, %v911
    %913 = vdwg.mxu0
    %v916 = vrot.slane %v910, 2
    %v917 = vrot.slane %v912, 2
    %v920 = vadd.f32 %v480, %v916
    %v921 = vadd.f32 %v481, %v917
    %v922 = vxor.u32 %v920, 2147483648
    %v923 = vxor.u32 %v921, 2147483648
    %v924 = vmul.f32 %v922, 1.442695
    %v925 = vpow.pop %v924
    %v926 = vmul.f32 %v923, 1.442695
    %v927 = vpow.pop %v926
    %v928 = vadd.f32 %v925, 1.0
    %v929 = vadd.f32 %v927, 1.0
    %v930 = vrcp.pop %v928
    %v931 = vmul.f32 1.0, %v930
    %v932 = vrcp.pop %v929
    %v933 = vmul.f32 1.0, %v932
    %v934 = vtanh.pop %v921
    %v936 = vrot.slane %v827, 6
    %v938 = vmul.f32 %v931, %v936
    %v939 = vmul.f32 %v931, %v934
    %941 = vrot.lane.b32.xlu0 %v939, 64
    %v942 = vpop.permute.xlu0 %941
    %v944 = vadd.f32 %v938, %v942
    %v945 = vtanh.pop %v944
    %v946 = vmul.f32 %v933, %v945
    %948 = vrot.lane.b32.xlu0 %v946, 64
    %v949 = vpop.permute.xlu0 %948
    %vm951 = vcmask 523270
    %952 = vst.msk [vmem:[#allocation2] sm:$0xc0] %vm951, %v949
    %vm953 = vcmask 1048070
    %954 = vst.msk [vmem:[#allocation2 + $0x2] sm:$0xc0] %vm953, %v946
    %v955 = vrot.slane %v946, 6
    %956 = vrot.lane.b32.xlu0 %v955, 64
    %v957 = vpop.permute.xlu0 %956
    %v958 = vsel %vm500, %v957, 0
    %960 = vmatprep.subr.mxu0 %v485
    %961 = vmatpush1.msra.mxu0 %v484
    %962 = vmatprep.subr.mxu0 %v487
    %963 = vmatpush1.msra.mxu0 %v486
    %964 = vmatprep.subr.mxu0 %v489
    %965 = vmatpush1.msra.mxu0 %v488
    %966 = vmatprep.subr.mxu0 %v491
    %967 = vmatpush1.msra.mxu0 %v490
    %968 = vmatprep.subr.mxu0 %v493
    %969 = vmatpush1.msra.mxu0 %v492
    %970 = vmatprep.subr.mxu0 %v495
    %971 = vmatpush1.msra.mxu0 %v494
    %972 = vmatprep.subr.mxu0 %v497
    %973 = vmatpush1.msra.mxu0 %v496
    %974 = vmatprep.subr.mxu0 %v499
    %975 = vmatpush1.msra.mxu0 %v498
    %976 = vmatprep.subr.mxu0 0.0
    %977 = vmatpush1.msra.mxu0 0.0
    %978 = vmatprep.subr.mxu0 0.0
    %979 = vmatpush1.msra.mxu0 0.0
    %980 = vmatprep.subr.mxu0 0.0
    %981 = vmatpush1.msra.mxu0 0.0
    %982 = vmatprep.subr.mxu0 0.0
    %983 = vmatpush1.msra.mxu0 0.0
    %984 = vmatprep.subr.mxu0 0.0
    %985 = vmatpush1.msra.mxu0 0.0
    %986 = vmatprep.subr.mxu0 0.0
    %987 = vmatpush1.msra.mxu0 0.0
    %988 = vmatprep.subr.mxu0 0.0
    %989 = vmatpush1.msra.mxu0 0.0
    %990 = vmatprep.subr.mxu0 0.0
    %991 = vmatpush1.msra.mxu0 0.0
    %992 = vmatprep.subr.mxu0 0.0
    %993 = vmatpush1.msra.mxu0 0.0
    %994 = vmatprep.subr.mxu0 0.0
    %995 = vmatpush1.msra.mxu0 0.0
    %996 = vmatprep.subr.mxu0 0.0
    %997 = vmatpush1.msra.mxu0 0.0
    %998 = vmatprep.subr.mxu0 0.0
    %999 = vmatpush1.msra.mxu0 0.0
    %1000 = vmatprep.subr.mxu0 0.0
    %1001 = vmatpush1.msra.mxu0 0.0
    %1002 = vmatprep.subr.mxu0 0.0
    %1003 = vmatpush1.msra.mxu0 0.0
    %1004 = vmatprep.subr.mxu0 0.0
    %1005 = vmatpush1.msra.mxu0 0.0
    %1006 = vmatprep.subr.mxu0 0.0
    %1007 = vmatpush1.msra.mxu0 0.0
    %1008 = vmatprep.subr.mxu0 0.0
    %1009 = vmatpush1.msra.mxu0 0.0
    %1010 = vmatprep.subr.mxu0 0.0
    %1011 = vmatpush1.msra.mxu0 0.0
    %1012 = vmatprep.subr.mxu0 0.0
    %1013 = vmatpush1.msra.mxu0 0.0
    %1014 = vmatprep.subr.mxu0 0.0
    %1015 = vmatpush1.msra.mxu0 0.0
    %1016 = vmatprep.subr.mxu0 0.0
    %1017 = vmatpush1.msra.mxu0 0.0
    %1018 = vmatprep.subr.mxu0 0.0
    %1019 = vmatpush1.msra.mxu0 0.0
    %1020 = vmatprep.subr.mxu0 0.0
    %1021 = vmatpush1.msra.mxu0 0.0
    %1022 = vmatprep.subr.mxu0 0.0
    %1023 = vmatpush1.msra.mxu0 0.0
    %1024 = vmatprep.mubr.f32.mxu0 0.0
    %1025 = vmatmul.mubr.f32.gmra.mrb[0].mxu0 %v958
    %v1026 = vpop.f32.mrb[0].mxu0
    %v1027 = vadd.f32 0.0, %v1026
    %v1028 = vpop.f32.mrb[0].mxu0
    %v1029 = vadd.f32 0.0, %v1028
    %1030 = vdwg.mxu0
    %v1031 = vadd.f32 %v482, %v1027
    %v1032 = vadd.f32 %v483, %v1029
    %v1033 = vxor.u32 %v1031, 2147483648
    %v1034 = vxor.u32 %v1032, 2147483648
    %v1035 = vmul.f32 %v1033, 1.442695
    %v1036 = vpow.pop %v1035
    %v1037 = vmul.f32 %v1034, 1.442695
    %v1038 = vpow.pop %v1037
    %v1039 = vadd.f32 %v1036, 1.0
    %v1040 = vadd.f32 %v1038, 1.0
    %v1041 = vrcp.pop %v1039
    %v1042 = vmul.f32 1.0, %v1041
    %v1043 = vrcp.pop %v1040
    %v1044 = vmul.f32 1.0, %v1043
    %v1045 = vtanh.pop %v1032
    %v1047 = vrot.slane %v944, 6
    %v1049 = vmul.f32 %v1042, %v1047
    %v1050 = vmul.f32 %v1042, %v1045
    %1052 = vrot.lane.b32.xlu0 %v1050, 64
    %v1053 = vpop.permute.xlu0 %1052
    %v1055 = vadd.f32 %v1049, %v1053
    %v1056 = vtanh.pop %v1055
    %v1057 = vmul.f32 %v1044, %v1056
    %1059 = vrot.lane.b32.xlu0 %v1057, 64
    %v1060 = vpop.permute.xlu0 %1059
    %1062 = vst.msk [vmem:[#allocation2 + $0x8] sm:$0x3] %vm603, %v1060
    %1063 = vst.msk [vmem:[#allocation2 + $0x6] sm:$0x3] %vm605, %v1057
    %v1064 = vsel %vm500, %v1060, 0
    %1066 = vmatprep.subr.mxu0 %v485
    %1067 = vmatpush1.msra.mxu0 %v484
    %1068 = vmatprep.subr.mxu0 %v487
    %1069 = vmatpush1.msra.mxu0 %v486
    %1070 = vmatprep.subr.mxu0 %v489
    %1071 = vmatpush1.msra.mxu0 %v488
    %1072 = vmatprep.subr.mxu0 %v491
    %1073 = vmatpush1.msra.mxu0 %v490
    %1074 = vmatprep.subr.mxu0 %v493
    %1075 = vmatpush1.msra.mxu0 %v492
    %1076 = vmatprep.subr.mxu0 %v495
    %1077 = vmatpush1.msra.mxu0 %v494
    %1078 = vmatprep.subr.mxu0 %v497
    %1079 = vmatpush1.msra.mxu0 %v496
    %1080 = vmatprep.subr.mxu0 %v499
    %1081 = vmatpush1.msra.mxu0 %v498
    %1082 = vmatprep.subr.mxu0 0.0
    %1083 = vmatpush1.msra.mxu0 0.0
    %1084 = vmatprep.subr.mxu0 0.0
    %1085 = vmatpush1.msra.mxu0 0.0
    %1086 = vmatprep.subr.mxu0 0.0
    %1087 = vmatpush1.msra.mxu0 0.0
    %1088 = vmatprep.subr.mxu0 0.0
    %1089 = vmatpush1.msra.mxu0 0.0
    %1090 = vmatprep.subr.mxu0 0.0
    %1091 = vmatpush1.msra.mxu0 0.0
    %1092 = vmatprep.subr.mxu0 0.0
    %1093 = vmatpush1.msra.mxu0 0.0
    %1094 = vmatprep.subr.mxu0 0.0
    %1095 = vmatpush1.msra.mxu0 0.0
    %1096 = vmatprep.subr.mxu0 0.0
    %1097 = vmatpush1.msra.mxu0 0.0
    %1098 = vmatprep.subr.mxu0 0.0
    %1099 = vmatpush1.msra.mxu0 0.0
    %1100 = vmatprep.subr.mxu0 0.0
    %1101 = vmatpush1.msra.mxu0 0.0
    %1102 = vmatprep.subr.mxu0 0.0
    %1103 = vmatpush1.msra.mxu0 0.0
    %1104 = vmatprep.subr.mxu0 0.0
    %1105 = vmatpush1.msra.mxu0 0.0
    %1106 = vmatprep.subr.mxu0 0.0
    %1107 = vmatpush1.msra.mxu0 0.0
    %1108 = vmatprep.subr.mxu0 0.0
    %1109 = vmatpush1.msra.mxu0 0.0
    %1110 = vmatprep.subr.mxu0 0.0
    %1111 = vmatpush1.msra.mxu0 0.0
    %1112 = vmatprep.subr.mxu0 0.0
    %1113 = vmatpush1.msra.mxu0 0.0
    %1114 = vmatprep.subr.mxu0 0.0
    %1115 = vmatpush1.msra.mxu0 0.0
    %1116 = vmatprep.subr.mxu0 0.0
    %1117 = vmatpush1.msra.mxu0 0.0
    %1118 = vmatprep.subr.mxu0 0.0
    %1119 = vmatpush1.msra.mxu0 0.0
    %1120 = vmatprep.subr.mxu0 0.0
    %1121 = vmatpush1.msra.mxu0 0.0
    %1122 = vmatprep.subr.mxu0 0.0
    %1123 = vmatpush1.msra.mxu0 0.0
    %1124 = vmatprep.subr.mxu0 0.0
    %1125 = vmatpush1.msra.mxu0 0.0
    %1126 = vmatprep.subr.mxu0 0.0
    %1127 = vmatpush1.msra.mxu0 0.0
    %1128 = vmatprep.subr.mxu0 0.0
    %1129 = vmatpush1.msra.mxu0 0.0
    %1130 = vmatprep.mubr.f32.mxu0 0.0
    %1131 = vmatmul.mubr.f32.gmra.mrb[0].mxu0 %v1064
    %v1132 = vpop.f32.mrb[0].mxu0
    %v1133 = vadd.f32 0.0, %v1132
    %v1134 = vpop.f32.mrb[0].mxu0
    %v1135 = vadd.f32 0.0, %v1134
    %1136 = vdwg.mxu0
    %v1139 = vrot.slane %v1133, 6
    %v1140 = vrot.slane %v1135, 6
    %v1143 = vadd.f32 %v482, %v1139
    %v1144 = vadd.f32 %v483, %v1140
    %v1145 = vxor.u32 %v1143, 2147483648
    %v1146 = vxor.u32 %v1144, 2147483648
    %v1147 = vmul.f32 %v1145, 1.442695
    %v1148 = vpow.pop %v1147
    %v1149 = vmul.f32 %v1146, 1.442695
    %v1150 = vpow.pop %v1149
    %v1151 = vadd.f32 %v1148, 1.0
    %v1152 = vadd.f32 %v1150, 1.0
    %v1153 = vrcp.pop %v1151
    %v1154 = vmul.f32 1.0, %v1153
    %v1155 = vrcp.pop %v1152
    %v1156 = vmul.f32 1.0, %v1155
    %v1157 = vtanh.pop %v1144
    %v1159 = vrot.slane %v1055, 6
    %v1161 = vmul.f32 %v1154, %v1159
    %v1162 = vmul.f32 %v1154, %v1157
    %1164 = vrot.lane.b32.xlu0 %v1162, 64
    %v1165 = vpop.permute.xlu0 %1164
    %v1167 = vadd.f32 %v1161, %v1165
    %v1168 = vtanh.pop %v1167
    %v1169 = vmul.f32 %v1156, %v1168
    %1171 = vrot.lane.b32.xlu0 %v1169, 64
    %v1172 = vpop.permute.xlu0 %1171
    %1174 = vst.msk [vmem:[#allocation2 + $0x8] sm:$0xc] %vm717, %v1172
    %1175 = vst.msk [vmem:[#allocation2 + $0x2] sm:$0xc] %vm719, %v1169
    %v1176 = vrot.slane %v1169, 2
    %1177 = vrot.lane.b32.xlu0 %v1176, 64
    %v1178 = vpop.permute.xlu0 %1177
    %v1179 = vsel %vm500, %v1178, 0
    %1181 = vmatprep.subr.mxu0 %v485
    %1182 = vmatpush1.msra.mxu0 %v484
    %1183 = vmatprep.subr.mxu0 %v487
    %1184 = vmatpush1.msra.mxu0 %v486
    %1185 = vmatprep.subr.mxu0 %v489
    %1186 = vmatpush1.msra.mxu0 %v488
    %1187 = vmatprep.subr.mxu0 %v491
    %1188 = vmatpush1.msra.mxu0 %v490
    %1189 = vmatprep.subr.mxu0 %v493
    %1190 = vmatpush1.msra.mxu0 %v492
    %1191 = vmatprep.subr.mxu0 %v495
    %1192 = vmatpush1.msra.mxu0 %v494
    %1193 = vmatprep.subr.mxu0 %v497
    %1194 = vmatpush1.msra.mxu0 %v496
    %1195 = vmatprep.subr.mxu0 %v499
    %1196 = vmatpush1.msra.mxu0 %v498
    %1197 = vmatprep.subr.mxu0 0.0
    %1198 = vmatpush1.msra.mxu0 0.0
    %1199 = vmatprep.subr.mxu0 0.0
    %1200 = vmatpush1.msra.mxu0 0.0
    %1201 = vmatprep.subr.mxu0 0.0
    %1202 = vmatpush1.msra.mxu0 0.0
    %1203 = vmatprep.subr.mxu0 0.0
    %1204 = vmatpush1.msra.mxu0 0.0
    %1205 = vmatprep.subr.mxu0 0.0
    %1206 = vmatpush1.msra.mxu0 0.0
    %1207 = vmatprep.subr.mxu0 0.0
    %1208 = vmatpush1.msra.mxu0 0.0
    %1209 = vmatprep.subr.mxu0 0.0
    %1210 = vmatpush1.msra.mxu0 0.0
    %1211 = vmatprep.subr.mxu0 0.0
    %1212 = vmatpush1.msra.mxu0 0.0
    %1213 = vmatprep.subr.mxu0 0.0
    %1214 = vmatpush1.msra.mxu0 0.0
    %1215 = vmatprep.subr.mxu0 0.0
    %1216 = vmatpush1.msra.mxu0 0.0
    %1217 = vmatprep.subr.mxu0 0.0
    %1218 = vmatpush1.msra.mxu0 0.0
    %1219 = vmatprep.subr.mxu0 0.0
    %1220 = vmatpush1.msra.mxu0 0.0
    %1221 = vmatprep.subr.mxu0 0.0
    %1222 = vmatpush1.msra.mxu0 0.0
    %1223 = vmatprep.subr.mxu0 0.0
    %1224 = vmatpush1.msra.mxu0 0.0
    %1225 = vmatprep.subr.mxu0 0.0
    %1226 = vmatpush1.msra.mxu0 0.0
    %1227 = vmatprep.subr.mxu0 0.0
    %1228 = vmatpush1.msra.mxu0 0.0
    %1229 = vmatprep.subr.mxu0 0.0
    %1230 = vmatpush1.msra.mxu0 0.0
    %1231 = vmatprep.subr.mxu0 0.0
    %1232 = vmatpush1.msra.mxu0 0.0
    %1233 = vmatprep.subr.mxu0 0.0
    %1234 = vmatpush1.msra.mxu0 0.0
    %1235 = vmatprep.subr.mxu0 0.0
    %1236 = vmatpush1.msra.mxu0 0.0
    %1237 = vmatprep.subr.mxu0 0.0
    %1238 = vmatpush1.msra.mxu0 0.0
    %1239 = vmatprep.subr.mxu0 0.0
    %1240 = vmatpush1.msra.mxu0 0.0
    %1241 = vmatprep.subr.mxu0 0.0
    %1242 = vmatpush1.msra.mxu0 0.0
    %1243 = vmatprep.subr.mxu0 0.0
    %1244 = vmatpush1.msra.mxu0 0.0
    %1245 = vmatprep.mubr.f32.mxu0 0.0
    %1246 = vmatmul.mubr.f32.gmra.mrb[0].mxu0 %v1179
    %v1247 = vpop.f32.mrb[0].mxu0
    %v1248 = vadd.f32 0.0, %v1247
    %v1249 = vpop.f32.mrb[0].mxu0
    %v1250 = vadd.f32 0.0, %v1249
    %1251 = vdwg.mxu0
    %v1254 = vrot.slane %v1248, 4
    %v1255 = vrot.slane %v1250, 4
    %v1258 = vadd.f32 %v482, %v1254
    %v1259 = vadd.f32 %v483, %v1255
    %v1260 = vxor.u32 %v1258, 2147483648
    %v1261 = vxor.u32 %v1259, 2147483648
    %v1262 = vmul.f32 %v1260, 1.442695
    %v1263 = vpow.pop %v1262
    %v1264 = vmul.f32 %v1261, 1.442695
    %v1265 = vpow.pop %v1264
    %v1266 = vadd.f32 %v1263, 1.0
    %v1267 = vadd.f32 %v1265, 1.0
    %v1268 = vrcp.pop %v1266
    %v1269 = vmul.f32 1.0, %v1268
    %v1270 = vrcp.pop %v1267
    %v1271 = vmul.f32 1.0, %v1270
    %v1272 = vtanh.pop %v1259
    %v1274 = vrot.slane %v1167, 6
    %v1276 = vmul.f32 %v1269, %v1274
    %v1277 = vmul.f32 %v1269, %v1272
    %1279 = vrot.lane.b32.xlu0 %v1277, 64
    %v1280 = vpop.permute.xlu0 %1279
    %v1282 = vadd.f32 %v1276, %v1280
    %v1283 = vtanh.pop %v1282
    %v1284 = vmul.f32 %v1271, %v1283
    %1286 = vrot.lane.b32.xlu0 %v1284, 64
    %v1287 = vpop.permute.xlu0 %1286
    %1289 = vst.msk [vmem:[#allocation2 + $0x8] sm:$0x30] %vm834, %v1287
    %1290 = vst.msk [vmem:[#allocation2 - $0x2] sm:$0x30] %vm836, %v1284
    %v1291 = vrot.slane %v1284, 4
    %1292 = vrot.lane.b32.xlu0 %v1291, 64
    %v1293 = vpop.permute.xlu0 %1292
    %v1294 = vsel %vm500, %v1293, 0
    %1296 = vmatprep.subr.mxu0 %v485
    %1297 = vmatpush1.msra.mxu0 %v484
    %1298 = vmatprep.subr.mxu0 %v487
    %1299 = vmatpush1.msra.mxu0 %v486
    %1300 = vmatprep.subr.mxu0 %v489
    %1301 = vmatpush1.msra.mxu0 %v488
    %1302 = vmatprep.subr.mxu0 %v491
    %1303 = vmatpush1.msra.mxu0 %v490
    %1304 = vmatprep.subr.mxu0 %v493
    %1305 = vmatpush1.msra.mxu0 %v492
    %1306 = vmatprep.subr.mxu0 %v495
    %1307 = vmatpush1.msra.mxu0 %v494
    %1308 = vmatprep.subr.mxu0 %v497
    %1309 = vmatpush1.msra.mxu0 %v496
    %1310 = vmatprep.subr.mxu0 %v499
    %1311 = vmatpush1.msra.mxu0 %v498
    %1312 = vmatprep.subr.mxu0 0.0
    %1313 = vmatpush1.msra.mxu0 0.0
    %1314 = vmatprep.subr.mxu0 0.0
    %1315 = vmatpush1.msra.mxu0 0.0
    %1316 = vmatprep.subr.mxu0 0.0
    %1317 = vmatpush1.msra.mxu0 0.0
    %1318 = vmatprep.subr.mxu0 0.0
    %1319 = vmatpush1.msra.mxu0 0.0
    %1320 = vmatprep.subr.mxu0 0.0
    %1321 = vmatpush1.msra.mxu0 0.0
    %1322 = vmatprep.subr.mxu0 0.0
    %1323 = vmatpush1.msra.mxu0 0.0
    %1324 = vmatprep.subr.mxu0 0.0
    %1325 = vmatpush1.msra.mxu0 0.0
    %1326 = vmatprep.subr.mxu0 0.0
    %1327 = vmatpush1.msra.mxu0 0.0
    %1328 = vmatprep.subr.mxu0 0.0
    %1329 = vmatpush1.msra.mxu0 0.0
    %1330 = vmatprep.subr.mxu0 0.0
    %1331 = vmatpush1.msra.mxu0 0.0
    %1332 = vmatprep.subr.mxu0 0.0
    %1333 = vmatpush1.msra.mxu0 0.0
    %1334 = vmatprep.subr.mxu0 0.0
    %1335 = vmatpush1.msra.mxu0 0.0
    %1336 = vmatprep.subr.mxu0 0.0
    %1337 = vmatpush1.msra.mxu0 0.0
    %1338 = vmatprep.subr.mxu0 0.0
    %1339 = vmatpush1.msra.mxu0 0.0
    %1340 = vmatprep.subr.mxu0 0.0
    %1341 = vmatpush1.msra.mxu0 0.0
    %1342 = vmatprep.subr.mxu0 0.0
    %1343 = vmatpush1.msra.mxu0 0.0
    %1344 = vmatprep.subr.mxu0 0.0
    %1345 = vmatpush1.msra.mxu0 0.0
    %1346 = vmatprep.subr.mxu0 0.0
    %1347 = vmatpush1.msra.mxu0 0.0
    %1348 = vmatprep.subr.mxu0 0.0
    %1349 = vmatpush1.msra.mxu0 0.0
    %1350 = vmatprep.subr.mxu0 0.0
    %1351 = vmatpush1.msra.mxu0 0.0
    %1352 = vmatprep.subr.mxu0 0.0
    %1353 = vmatpush1.msra.mxu0 0.0
    %1354 = vmatprep.subr.mxu0 0.0
    %1355 = vmatpush1.msra.mxu0 0.0
    %1356 = vmatprep.subr.mxu0 0.0
    %1357 = vmatpush1.msra.mxu0 0.0
    %1358 = vmatprep.subr.mxu0 0.0
    %1359 = vmatpush1.msra.mxu0 0.0
    %1360 = vmatprep.mubr.f32.mxu0 0.0
    %1361 = vmatmul.mubr.f32.gmra.mrb[0].mxu0 %v1294
    %v1362 = vpop.f32.mrb[0].mxu0
    %v1363 = vadd.f32 0.0, %v1362
    %v1364 = vpop.f32.mrb[0].mxu0
    %v1365 = vadd.f32 0.0, %v1364
    %1366 = vdwg.mxu0
    %v1369 = vrot.slane %v1363, 2
    %v1370 = vrot.slane %v1365, 2
    %v1373 = vadd.f32 %v482, %v1369
    %v1374 = vadd.f32 %v483, %v1370
    %v1375 = vxor.u32 %v1373, 2147483648
    %v1376 = vxor.u32 %v1374, 2147483648
    %v1377 = vmul.f32 %v1375, 1.442695
    %v1378 = vpow.pop %v1377
    %v1379 = vmul.f32 %v1376, 1.442695
    %v1380 = vpow.pop %v1379
    %v1381 = vadd.f32 %v1378, 1.0
    %v1382 = vadd.f32 %v1380, 1.0
    %v1383 = vrcp.pop %v1381
    %v1384 = vmul.f32 1.0, %v1383
    %v1385 = vrcp.pop %v1382
    %v1386 = vmul.f32 1.0, %v1385
    %v1387 = vtanh.pop %v1374
    %v1389 = vrot.slane %v1282, 6
    %v1391 = vmul.f32 %v1384, %v1389
    %v1392 = vmul.f32 %v1384, %v1387
    %1394 = vrot.lane.b32.xlu0 %v1392, 64
    %v1395 = vpop.permute.xlu0 %1394
    %v1397 = vadd.f32 %v1391, %v1395
    %v1398 = vtanh.pop %v1397
    %v1399 = vmul.f32 %v1386, %v1398
    %1401 = vrot.lane.b32.xlu0 %v1399, 64
    %v1402 = vpop.permute.xlu0 %1401
    %1404 = vst.msk [vmem:[#allocation2 + $0x8] sm:$0xc0] %vm951, %v1402
    %1405 = vst.msk [vmem:[#allocation2 - $0x6] sm:$0xc0] %vm953, %v1399
    %v1406 = vld [vmem:[#allocation2] sm:$0xff]
    %v1407 = vld [vmem:[#allocation2 + $0x8] sm:$0xff]
    %v1408 = vld [vmem:[%s6] sm:$0xff]
    %v1409 = vld [vmem:[%s6 + $0x8] sm:$0xff]
    %v1410 = vld [vmem:[%s6 + $0x10] sm:$0xff]
    %v1411 = vld [vmem:[%s6 + $0x18] sm:$0xff]
    %v1412 = vld [vmem:[%s6 + $0x20] sm:$0xff]
    %v1413 = vld [vmem:[%s6 + $0x28] sm:$0xff]
    %v1414 = vld [vmem:[%s6 + $0x30] sm:$0xff]
    %v1415 = vld [vmem:[%s6 + $0x38] sm:$0xff]
    %v1416 = vld [vmem:[%s6 + $0x40] sm:$0xff]
    %v1417 = vld [vmem:[%s6 + $0x48] sm:$0xff]
    %v1418 = vld [vmem:[%s6 + $0x50] sm:$0xff]
    %v1419 = vld [vmem:[%s6 + $0x58] sm:$0xff]
    %v1420 = vld [vmem:[%s6 + $0x60] sm:$0xff]
    %v1421 = vld [vmem:[%s6 + $0x68] sm:$0xff]
    %v1422 = vld [vmem:[%s6 + $0x70] sm:$0xff]
    %v1423 = vld [vmem:[%s6 + $0x78] sm:$0xff]
    %v1424 = vld [vmem:[%s6 + $0x80] sm:$0xff]
    %v1425 = vld [vmem:[%s6 + $0x88] sm:$0xff]
    %v1426 = vld [vmem:[%s6 + $0x90] sm:$0xff]
    %v1427 = vld [vmem:[%s6 + $0x98] sm:$0xff]
    %v1428 = vld [vmem:[%s6 + $0xa0] sm:$0xff]
    %v1429 = vld [vmem:[%s6 + $0xa8] sm:$0xff]
    %v1430 = vld [vmem:[%s6 + $0xb0] sm:$0xff]
    %v1431 = vld [vmem:[%s6 + $0xb8] sm:$0xff]
    %v1432 = vld [vmem:[%s6 + $0xc0] sm:$0xff]
    %v1433 = vld [vmem:[%s6 + $0xc8] sm:$0xff]
    %v1434 = vld [vmem:[%s6 + $0xd0] sm:$0xff]
    %v1435 = vld [vmem:[%s6 + $0xd8] sm:$0xff]
    %v1436 = vld [vmem:[%s6 + $0xe0] sm:$0xff]
    %v1437 = vld [vmem:[%s6 + $0xe8] sm:$0xff]
    %v1438 = vld [vmem:[%s6 + $0xf0] sm:$0xff]
    %v1439 = vld [vmem:[%s6 + $0xf8] sm:$0xff]
    %v1440 = vld [vmem:[%s8] sm:$0x3]
    %v1442 = vlaneseq
    %v1443 = vshrl.u32 %v1442, 7
    %v1444 = vsub.s32 0, %v1443
    %v1445 = vrot.slane %v1440, %v1444
    %v1446 = vlaneseq
    %v1447 = vshrl.u32 %v1446, 7
    %v1448 = vsub.s32 1, %v1447
    %v1449 = vrot.slane %v1440, %v1448
    %1452 = vmatprep.subr.mxu0 %v1409
    %1453 = vmatpush1.msra.mxu0 %v1408
    %1454 = vmatprep.subr.mxu0 %v1411
    %1455 = vmatpush1.msra.mxu0 %v1410
    %1456 = vmatprep.subr.mxu0 %v1413
    %1457 = vmatpush1.msra.mxu0 %v1412
    %1458 = vmatprep.subr.mxu0 %v1415
    %1459 = vmatpush1.msra.mxu0 %v1414
    %1460 = vmatprep.subr.mxu0 %v1417
    %1461 = vmatpush1.msra.mxu0 %v1416
    %1462 = vmatprep.subr.mxu0 %v1419
    %1463 = vmatpush1.msra.mxu0 %v1418
    %1464 = vmatprep.subr.mxu0 %v1421
    %1465 = vmatpush1.msra.mxu0 %v1420
    %1466 = vmatprep.subr.mxu0 %v1423
    %1467 = vmatpush1.msra.mxu0 %v1422
    %1468 = vmatprep.subr.mxu0 %v1425
    %1469 = vmatpush1.msra.mxu0 %v1424
    %1470 = vmatprep.subr.mxu0 %v1427
    %1471 = vmatpush1.msra.mxu0 %v1426
    %1472 = vmatprep.subr.mxu0 %v1429
    %1473 = vmatpush1.msra.mxu0 %v1428
    %1474 = vmatprep.subr.mxu0 %v1431
    %1475 = vmatpush1.msra.mxu0 %v1430
    %1476 = vmatprep.subr.mxu0 %v1433
    %1477 = vmatpush1.msra.mxu0 %v1432
    %1478 = vmatprep.subr.mxu0 %v1435
    %1479 = vmatpush1.msra.mxu0 %v1434
    %1480 = vmatprep.subr.mxu0 %v1437
    %1481 = vmatpush1.msra.mxu0 %v1436
    %1482 = vmatprep.subr.mxu0 %v1439
    %1483 = vmatpush1.msra.mxu0 %v1438
    %1484 = vmatprep.subr.mxu0 0.0
    %1485 = vmatpush1.msra.mxu0 0.0
    %1486 = vmatprep.subr.mxu0 0.0
    %1487 = vmatpush1.msra.mxu0 0.0
    %1488 = vmatprep.subr.mxu0 0.0
    %1489 = vmatpush1.msra.mxu0 0.0
    %1490 = vmatprep.subr.mxu0 0.0
    %1491 = vmatpush1.msra.mxu0 0.0
    %1492 = vmatprep.subr.mxu0 0.0
    %1493 = vmatpush1.msra.mxu0 0.0
    %1494 = vmatprep.subr.mxu0 0.0
    %1495 = vmatpush1.msra.mxu0 0.0
    %1496 = vmatprep.subr.mxu0 0.0
    %1497 = vmatpush1.msra.mxu0 0.0
    %1498 = vmatprep.subr.mxu0 0.0
    %1499 = vmatpush1.msra.mxu0 0.0
    %1500 = vmatprep.subr.mxu0 0.0
    %1501 = vmatpush1.msra.mxu0 0.0
    %1502 = vmatprep.subr.mxu0 0.0
    %1503 = vmatpush1.msra.mxu0 0.0
    %1504 = vmatprep.subr.mxu0 0.0
    %1505 = vmatpush1.msra.mxu0 0.0
    %1506 = vmatprep.subr.mxu0 0.0
    %1507 = vmatpush1.msra.mxu0 0.0
    %1508 = vmatprep.subr.mxu0 0.0
    %1509 = vmatpush1.msra.mxu0 0.0
    %1510 = vmatprep.subr.mxu0 0.0
    %1511 = vmatpush1.msra.mxu0 0.0
    %1512 = vmatprep.subr.mxu0 0.0
    %1513 = vmatpush1.msra.mxu0 0.0
    %1514 = vmatprep.subr.mxu0 0.0
    %1515 = vmatpush1.msra.mxu0 0.0
    %1516 = vmatprep.mubr.f32.mxu0 0.0
    %1517 = vmatmul.mubr.f32.gmra.mrb[0].mxu0 %v1406
    %v1518 = vpop.f32.mrb[0].mxu0
    %v1519 = vadd.f32 %v1445, %v1518
    %v1520 = vpop.f32.mrb[0].mxu0
    %v1521 = vadd.f32 %v1449, %v1520
    %1522 = vmatprep.mubr.f32.mxu0 0.0
    %1523 = vmatmul.mubr.f32.gmra.mrb[0].mxu0 %v1407
    %v1524 = vpop.f32.mrb[0].mxu0
    %v1525 = vadd.f32 %v1445, %v1524
    %v1526 = vpop.f32.mrb[0].mxu0
    %v1527 = vadd.f32 %v1449, %v1526
    %1528 = vdwg.mxu0
    %v1529 = vld [vmem:[#allocation9] sm:$0xff]
    %v1530 = vld [vmem:[#allocation9 + $0x8] sm:$0xff]
    %v1531 = vld [vmem:[#allocation9 + $0x10] sm:$0xff]
    %v1532 = vld [vmem:[#allocation9 + $0x18] sm:$0xff]
    %v1533 = vld [vmem:[#allocation9 + $0x20] sm:$0xff]
    %v1534 = vld [vmem:[#allocation9 + $0x28] sm:$0xff]
    %v1535 = vld [vmem:[#allocation9 + $0x30] sm:$0xff]
    %v1536 = vld [vmem:[#allocation9 + $0x38] sm:$0xff]
    %v1537 = vld [vmem:[#allocation9 + $0x40] sm:$0xff]
    %v1538 = vld [vmem:[#allocation9 + $0x48] sm:$0xff]
    %v1539 = vld [vmem:[#allocation9 + $0x50] sm:$0xff]
    %v1540 = vld [vmem:[#allocation9 + $0x58] sm:$0xff]
    %v1541 = vld [vmem:[#allocation9 + $0x60] sm:$0xff]
    %v1542 = vld [vmem:[#allocation9 + $0x68] sm:$0xff]
    %v1543 = vld [vmem:[#allocation9 + $0x70] sm:$0xff]
    %v1544 = vld [vmem:[#allocation9 + $0x78] sm:$0xff]
    %1545 = vmatprep.subr.mxu0 %v1530
    %1546 = vmatpush1.msra.mxu0 %v1529
    %1547 = vmatprep.subr.mxu0 %v1532
    %1548 = vmatpush1.msra.mxu0 %v1531
    %1549 = vmatprep.subr.mxu0 %v1534
    %1550 = vmatpush1.msra.mxu0 %v1533
    %1551 = vmatprep.subr.mxu0 %v1536
    %1552 = vmatpush1.msra.mxu0 %v1535
    %1553 = vmatprep.subr.mxu0 %v1538
    %1554 = vmatpush1.msra.mxu0 %v1537
    %1555 = vmatprep.subr.mxu0 %v1540
    %1556 = vmatpush1.msra.mxu0 %v1539
    %1557 = vmatprep.subr.mxu0 %v1542
    %1558 = vmatpush1.msra.mxu0 %v1541
    %1559 = vmatprep.subr.mxu0 %v1544
    %1560 = vmatpush1.msra.mxu0 %v1543
    %1561 = vmatprep.subr.mxu0 0.0
    %1562 = vmatpush1.msra.mxu0 0.0
    %1563 = vmatprep.subr.mxu0 0.0
    %1564 = vmatpush1.msra.mxu0 0.0
    %1565 = vmatprep.subr.mxu0 0.0
    %1566 = vmatpush1.msra.mxu0 0.0
    %1567 = vmatprep.subr.mxu0 0.0
    %1568 = vmatpush1.msra.mxu0 0.0
    %1569 = vmatprep.subr.mxu0 0.0
    %1570 = vmatpush1.msra.mxu0 0.0
    %1571 = vmatprep.subr.mxu0 0.0
    %1572 = vmatpush1.msra.mxu0 0.0
    %1573 = vmatprep.subr.mxu0 0.0
    %1574 = vmatpush1.msra.mxu0 0.0
    %1575 = vmatprep.subr.mxu0 0.0
    %1576 = vmatpush1.msra.mxu0 0.0
    %1577 = vmatprep.subr.mxu0 0.0
    %1578 = vmatpush1.msra.mxu0 0.0
    %1579 = vmatprep.subr.mxu0 0.0
    %1580 = vmatpush1.msra.mxu0 0.0
    %1581 = vmatprep.subr.mxu0 0.0
    %1582 = vmatpush1.msra.mxu0 0.0
    %1583 = vmatprep.subr.mxu0 0.0
    %1584 = vmatpush1.msra.mxu0 0.0
    %1585 = vmatprep.subr.mxu0 0.0
    %1586 = vmatpush1.msra.mxu0 0.0
    %1587 = vmatprep.subr.mxu0 0.0
    %1588 = vmatpush1.msra.mxu0 0.0
    %1589 = vmatprep.subr.mxu0 0.0
    %1590 = vmatpush1.msra.mxu0 0.0
    %1591 = vmatprep.subr.mxu0 0.0
    %1592 = vmatpush1.msra.mxu0 0.0
    %1593 = vmatprep.subr.mxu0 0.0
    %1594 = vmatpush1.msra.mxu0 0.0
    %1595 = vmatprep.subr.mxu0 0.0
    %1596 = vmatpush1.msra.mxu0 0.0
    %1597 = vmatprep.subr.mxu0 0.0
    %1598 = vmatpush1.msra.mxu0 0.0
    %1599 = vmatprep.subr.mxu0 0.0
    %1600 = vmatpush1.msra.mxu0 0.0
    %1601 = vmatprep.subr.mxu0 0.0
    %1602 = vmatpush1.msra.mxu0 0.0
    %1603 = vmatprep.subr.mxu0 0.0
    %1604 = vmatpush1.msra.mxu0 0.0
    %1605 = vmatprep.subr.mxu0 0.0
    %1606 = vmatpush1.msra.mxu0 0.0
    %1607 = vmatprep.subr.mxu0 0.0
    %1608 = vmatpush1.msra.mxu0 0.0
    %1609 = vmatprep.mubr.f32.mxu0 0.0
    %1610 = vmatmul.mubr.f32.gmra.mrb[0].mxu0 %v502
    %v1611 = vpop.f32.mrb[0].mxu0
    %v1612 = vadd.f32 0.0, %v1611
    %v1613 = vpop.f32.mrb[0].mxu0
    %v1614 = vadd.f32 0.0, %v1613
    %1615 = vdwg.mxu0
    %v1616 = vadd.f32 %v1519, %v1612
    %v1617 = vadd.f32 %v1521, %v1614
    %v1618 = vxor.u32 %v1616, 2147483648
    %v1619 = vxor.u32 %v1617, 2147483648
    %v1620 = vmul.f32 %v1618, 1.442695
    %v1621 = vpow.pop %v1620
    %v1622 = vmul.f32 %v1619, 1.442695
    %v1623 = vpow.pop %v1622
    %v1624 = vadd.f32 %v1621, 1.0
    %v1625 = vadd.f32 %v1623, 1.0
    %v1626 = vrcp.pop %v1624
    %v1627 = vmul.f32 1.0, %v1626
    %v1628 = vrcp.pop %v1625
    %v1629 = vmul.f32 1.0, %v1628
    %v1630 = vtanh.pop %v1617
    %v1631 = vmul.f32 %v1627, 0.0
    %v1632 = vmul.f32 %v1627, %v1630
    %1634 = vrot.lane.b32.xlu0 %v1632, 64
    %v1635 = vpop.permute.xlu0 %1634
    %v1637 = vadd.f32 %v1631, %v1635
    %v1638 = vtanh.pop %v1637
    %v1639 = vmul.f32 %v1629, %v1638
    %1641 = vrot.lane.b32.xlu0 %v1639, 64
    %v1642 = vpop.permute.xlu0 %1641
    %1644 = vst.msk [vmem:[#allocation3] sm:$0x3] %vm603, %v1642
    %1645 = vst.msk [vmem:[#allocation3 + $0xe] sm:$0x3] %vm605, %v1639
    %v1646 = vsel %vm500, %v1642, 0
    %1648 = vmatprep.subr.mxu0 %v1530
    %1649 = vmatpush1.msra.mxu0 %v1529
    %1650 = vmatprep.subr.mxu0 %v1532
    %1651 = vmatpush1.msra.mxu0 %v1531
    %1652 = vmatprep.subr.mxu0 %v1534
    %1653 = vmatpush1.msra.mxu0 %v1533
    %1654 = vmatprep.subr.mxu0 %v1536
    %1655 = vmatpush1.msra.mxu0 %v1535
    %1656 = vmatprep.subr.mxu0 %v1538
    %1657 = vmatpush1.msra.mxu0 %v1537
    %1658 = vmatprep.subr.mxu0 %v1540
    %1659 = vmatpush1.msra.mxu0 %v1539
    %1660 = vmatprep.subr.mxu0 %v1542
    %1661 = vmatpush1.msra.mxu0 %v1541
    %1662 = vmatprep.subr.mxu0 %v1544
    %1663 = vmatpush1.msra.mxu0 %v1543
    %1664 = vmatprep.subr.mxu0 0.0
    %1665 = vmatpush1.msra.mxu0 0.0
    %1666 = vmatprep.subr.mxu0 0.0
    %1667 = vmatpush1.msra.mxu0 0.0
    %1668 = vmatprep.subr.mxu0 0.0
    %1669 = vmatpush1.msra.mxu0 0.0
    %1670 = vmatprep.subr.mxu0 0.0
    %1671 = vmatpush1.msra.mxu0 0.0
    %1672 = vmatprep.subr.mxu0 0.0
    %1673 = vmatpush1.msra.mxu0 0.0
    %1674 = vmatprep.subr.mxu0 0.0
    %1675 = vmatpush1.msra.mxu0 0.0
    %1676 = vmatprep.subr.mxu0 0.0
    %1677 = vmatpush1.msra.mxu0 0.0
    %1678 = vmatprep.subr.mxu0 0.0
    %1679 = vmatpush1.msra.mxu0 0.0
    %1680 = vmatprep.subr.mxu0 0.0
    %1681 = vmatpush1.msra.mxu0 0.0
    %1682 = vmatprep.subr.mxu0 0.0
    %1683 = vmatpush1.msra.mxu0 0.0
    %1684 = vmatprep.subr.mxu0 0.0
    %1685 = vmatpush1.msra.mxu0 0.0
    %1686 = vmatprep.subr.mxu0 0.0
    %1687 = vmatpush1.msra.mxu0 0.0
    %1688 = vmatprep.subr.mxu0 0.0
    %1689 = vmatpush1.msra.mxu0 0.0
    %1690 = vmatprep.subr.mxu0 0.0
    %1691 = vmatpush1.msra.mxu0 0.0
    %1692 = vmatprep.subr.mxu0 0.0
    %1693 = vmatpush1.msra.mxu0 0.0
    %1694 = vmatprep.subr.mxu0 0.0
    %1695 = vmatpush1.msra.mxu0 0.0
    %1696 = vmatprep.subr.mxu0 0.0
    %1697 = vmatpush1.msra.mxu0 0.0
    %1698 = vmatprep.subr.mxu0 0.0
    %1699 = vmatpush1.msra.mxu0 0.0
    %1700 = vmatprep.subr.mxu0 0.0
    %1701 = vmatpush1.msra.mxu0 0.0
    %1702 = vmatprep.subr.mxu0 0.0
    %1703 = vmatpush1.msra.mxu0 0.0
    %1704 = vmatprep.subr.mxu0 0.0
    %1705 = vmatpush1.msra.mxu0 0.0
    %1706 = vmatprep.subr.mxu0 0.0
    %1707 = vmatpush1.msra.mxu0 0.0
    %1708 = vmatprep.subr.mxu0 0.0
    %1709 = vmatpush1.msra.mxu0 0.0
    %1710 = vmatprep.subr.mxu0 0.0
    %1711 = vmatpush1.msra.mxu0 0.0
    %1712 = vmatprep.mubr.f32.mxu0 0.0
    %1713 = vmatmul.mubr.f32.gmra.mrb[0].mxu0 %v1646
    %v1714 = vpop.f32.mrb[0].mxu0
    %v1715 = vadd.f32 0.0, %v1714
    %v1716 = vpop.f32.mrb[0].mxu0
    %v1717 = vadd.f32 0.0, %v1716
    %1718 = vdwg.mxu0
    %v1721 = vrot.slane %v1715, 6
    %v1722 = vrot.slane %v1717, 6
    %v1725 = vadd.f32 %v1519, %v1721
    %v1726 = vadd.f32 %v1521, %v1722
    %v1727 = vxor.u32 %v1725, 2147483648
    %v1728 = vxor.u32 %v1726, 2147483648
    %v1729 = vmul.f32 %v1727, 1.442695
    %v1730 = vpow.pop %v1729
    %v1731 = vmul.f32 %v1728, 1.442695
    %v1732 = vpow.pop %v1731
    %v1733 = vadd.f32 %v1730, 1.0
    %v1734 = vadd.f32 %v1732, 1.0
    %v1735 = vrcp.pop %v1733
    %v1736 = vmul.f32 1.0, %v1735
    %v1737 = vrcp.pop %v1734
    %v1738 = vmul.f32 1.0, %v1737
    %v1739 = vtanh.pop %v1726
    %v1741 = vrot.slane %v1637, 6
    %v1743 = vmul.f32 %v1736, %v1741
    %v1744 = vmul.f32 %v1736, %v1739
    %1746 = vrot.lane.b32.xlu0 %v1744, 64
    %v1747 = vpop.permute.xlu0 %1746
    %v1749 = vadd.f32 %v1743, %v1747
    %v1750 = vtanh.pop %v1749
    %v1751 = vmul.f32 %v1738, %v1750
    %1753 = vrot.lane.b32.xlu0 %v1751, 64
    %v1754 = vpop.permute.xlu0 %1753
    %1756 = vst.msk [vmem:[#allocation3] sm:$0xc] %vm717, %v1754
    %1757 = vst.msk [vmem:[#allocation3 + $0xa] sm:$0xc] %vm719, %v1751
    %v1758 = vrot.slane %v1751, 2
    %1759 = vrot.lane.b32.xlu0 %v1758, 64
    %v1760 = vpop.permute.xlu0 %1759
    %v1761 = vsel %vm500, %v1760, 0
    %1763 = vmatprep.subr.mxu0 %v1530
    %1764 = vmatpush1.msra.mxu0 %v1529
    %1765 = vmatprep.subr.mxu0 %v1532
    %1766 = vmatpush1.msra.mxu0 %v1531
    %1767 = vmatprep.subr.mxu0 %v1534
    %1768 = vmatpush1.msra.mxu0 %v1533
    %1769 = vmatprep.subr.mxu0 %v1536
    %1770 = vmatpush1.msra.mxu0 %v1535
    %1771 = vmatprep.subr.mxu0 %v1538
    %1772 = vmatpush1.msra.mxu0 %v1537
    %1773 = vmatprep.subr.mxu0 %v1540
    %1774 = vmatpush1.msra.mxu0 %v1539
    %1775 = vmatprep.subr.mxu0 %v1542
    %1776 = vmatpush1.msra.mxu0 %v1541
    %1777 = vmatprep.subr.mxu0 %v1544
    %1778 = vmatpush1.msra.mxu0 %v1543
    %1779 = vmatprep.subr.mxu0 0.0
    %1780 = vmatpush1.msra.mxu0 0.0
    %1781 = vmatprep.subr.mxu0 0.0
    %1782 = vmatpush1.msra.mxu0 0.0
    %1783 = vmatprep.subr.mxu0 0.0
    %1784 = vmatpush1.msra.mxu0 0.0
    %1785 = vmatprep.subr.mxu0 0.0
    %1786 = vmatpush1.msra.mxu0 0.0
    %1787 = vmatprep.subr.mxu0 0.0
    %1788 = vmatpush1.msra.mxu0 0.0
    %1789 = vmatprep.subr.mxu0 0.0
    %1790 = vmatpush1.msra.mxu0 0.0
    %1791 = vmatprep.subr.mxu0 0.0
    %1792 = vmatpush1.msra.mxu0 0.0
    %1793 = vmatprep.subr.mxu0 0.0
    %1794 = vmatpush1.msra.mxu0 0.0
    %1795 = vmatprep.subr.mxu0 0.0
    %1796 = vmatpush1.msra.mxu0 0.0
    %1797 = vmatprep.subr.mxu0 0.0
    %1798 = vmatpush1.msra.mxu0 0.0
    %1799 = vmatprep.subr.mxu0 0.0
    %1800 = vmatpush1.msra.mxu0 0.0
    %1801 = vmatprep.subr.mxu0 0.0
    %1802 = vmatpush1.msra.mxu0 0.0
    %1803 = vmatprep.subr.mxu0 0.0
    %1804 = vmatpush1.msra.mxu0 0.0
    %1805 = vmatprep.subr.mxu0 0.0
    %1806 = vmatpush1.msra.mxu0 0.0
    %1807 = vmatprep.subr.mxu0 0.0
    %1808 = vmatpush1.msra.mxu0 0.0
    %1809 = vmatprep.subr.mxu0 0.0
    %1810 = vmatpush1.msra.mxu0 0.0
    %1811 = vmatprep.subr.mxu0 0.0
    %1812 = vmatpush1.msra.mxu0 0.0
    %1813 = vmatprep.subr.mxu0 0.0
    %1814 = vmatpush1.msra.mxu0 0.0
    %1815 = vmatprep.subr.mxu0 0.0
    %1816 = vmatpush1.msra.mxu0 0.0
    %1817 = vmatprep.subr.mxu0 0.0
    %1818 = vmatpush1.msra.mxu0 0.0
    %1819 = vmatprep.subr.mxu0 0.0
    %1820 = vmatpush1.msra.mxu0 0.0
    %1821 = vmatprep.subr.mxu0 0.0
    %1822 = vmatpush1.msra.mxu0 0.0
    %1823 = vmatprep.subr.mxu0 0.0
    %1824 = vmatpush1.msra.mxu0 0.0
    %1825 = vmatprep.subr.mxu0 0.0
    %1826 = vmatpush1.msra.mxu0 0.0
    %1827 = vmatprep.mubr.f32.mxu0 0.0
    %1828 = vmatmul.mubr.f32.gmra.mrb[0].mxu0 %v1761
    %v1829 = vpop.f32.mrb[0].mxu0
    %v1830 = vadd.f32 0.0, %v1829
    %v1831 = vpop.f32.mrb[0].mxu0
    %v1832 = vadd.f32 0.0, %v1831
    %1833 = vdwg.mxu0
    %v1836 = vrot.slane %v1830, 4
    %v1837 = vrot.slane %v1832, 4
    %v1840 = vadd.f32 %v1519, %v1836
    %v1841 = vadd.f32 %v1521, %v1837
    %v1842 = vxor.u32 %v1840, 2147483648
    %v1843 = vxor.u32 %v1841, 2147483648
    %v1844 = vmul.f32 %v1842, 1.442695
    %v1845 = vpow.pop %v1844
    %v1846 = vmul.f32 %v1843, 1.442695
    %v1847 = vpow.pop %v1846
    %v1848 = vadd.f32 %v1845, 1.0
    %v1849 = vadd.f32 %v1847, 1.0
    %v1850 = vrcp.pop %v1848
    %v1851 = vmul.f32 1.0, %v1850
    %v1852 = vrcp.pop %v1849
    %v1853 = vmul.f32 1.0, %v1852
    %v1854 = vtanh.pop %v1841
    %v1856 = vrot.slane %v1749, 6
    %v1858 = vmul.f32 %v1851, %v1856
    %v1859 = vmul.f32 %v1851, %v1854
    %1861 = vrot.lane.b32.xlu0 %v1859, 64
    %v1862 = vpop.permute.xlu0 %1861
    %v1864 = vadd.f32 %v1858, %v1862
    %v1865 = vtanh.pop %v1864
    %v1866 = vmul.f32 %v1853, %v1865
    %1868 = vrot.lane.b32.xlu0 %v1866, 64
    %v1869 = vpop.permute.xlu0 %1868
    %1871 = vst.msk [vmem:[#allocation3] sm:$0x30] %vm834, %v1869
    %1872 = vst.msk [vmem:[#allocation3 + $0x6] sm:$0x30] %vm836, %v1866
    %v1873 = vrot.slane %v1866, 4
    %1874 = vrot.lane.b32.xlu0 %v1873, 64
    %v1875 = vpop.permute.xlu0 %1874
    %v1876 = vsel %vm500, %v1875, 0
    %1878 = vmatprep.subr.mxu0 %v1530
    %1879 = vmatpush1.msra.mxu0 %v1529
    %1880 = vmatprep.subr.mxu0 %v1532
    %1881 = vmatpush1.msra.mxu0 %v1531
    %1882 = vmatprep.subr.mxu0 %v1534
    %1883 = vmatpush1.msra.mxu0 %v1533
    %1884 = vmatprep.subr.mxu0 %v1536
    %1885 = vmatpush1.msra.mxu0 %v1535
    %1886 = vmatprep.subr.mxu0 %v1538
    %1887 = vmatpush1.msra.mxu0 %v1537
    %1888 = vmatprep.subr.mxu0 %v1540
    %1889 = vmatpush1.msra.mxu0 %v1539
    %1890 = vmatprep.subr.mxu0 %v1542
    %1891 = vmatpush1.msra.mxu0 %v1541
    %1892 = vmatprep.subr.mxu0 %v1544
    %1893 = vmatpush1.msra.mxu0 %v1543
    %1894 = vmatprep.subr.mxu0 0.0
    %1895 = vmatpush1.msra.mxu0 0.0
    %1896 = vmatprep.subr.mxu0 0.0
    %1897 = vmatpush1.msra.mxu0 0.0
    %1898 = vmatprep.subr.mxu0 0.0
    %1899 = vmatpush1.msra.mxu0 0.0
    %1900 = vmatprep.subr.mxu0 0.0
    %1901 = vmatpush1.msra.mxu0 0.0
    %1902 = vmatprep.subr.mxu0 0.0
    %1903 = vmatpush1.msra.mxu0 0.0
    %1904 = vmatprep.subr.mxu0 0.0
    %1905 = vmatpush1.msra.mxu0 0.0
    %1906 = vmatprep.subr.mxu0 0.0
    %1907 = vmatpush1.msra.mxu0 0.0
    %1908 = vmatprep.subr.mxu0 0.0
    %1909 = vmatpush1.msra.mxu0 0.0
    %1910 = vmatprep.subr.mxu0 0.0
    %1911 = vmatpush1.msra.mxu0 0.0
    %1912 = vmatprep.subr.mxu0 0.0
    %1913 = vmatpush1.msra.mxu0 0.0
    %1914 = vmatprep.subr.mxu0 0.0
    %1915 = vmatpush1.msra.mxu0 0.0
    %1916 = vmatprep.subr.mxu0 0.0
    %1917 = vmatpush1.msra.mxu0 0.0
    %1918 = vmatprep.subr.mxu0 0.0
    %1919 = vmatpush1.msra.mxu0 0.0
    %1920 = vmatprep.subr.mxu0 0.0
    %1921 = vmatpush1.msra.mxu0 0.0
    %1922 = vmatprep.subr.mxu0 0.0
    %1923 = vmatpush1.msra.mxu0 0.0
    %1924 = vmatprep.subr.mxu0 0.0
    %1925 = vmatpush1.msra.mxu0 0.0
    %1926 = vmatprep.subr.mxu0 0.0
    %1927 = vmatpush1.msra.mxu0 0.0
    %1928 = vmatprep.subr.mxu0 0.0
    %1929 = vmatpush1.msra.mxu0 0.0
    %1930 = vmatprep.subr.mxu0 0.0
    %1931 = vmatpush1.msra.mxu0 0.0
    %1932 = vmatprep.subr.mxu0 0.0
    %1933 = vmatpush1.msra.mxu0 0.0
    %1934 = vmatprep.subr.mxu0 0.0
    %1935 = vmatpush1.msra.mxu0 0.0
    %1936 = vmatprep.subr.mxu0 0.0
    %1937 = vmatpush1.msra.mxu0 0.0
    %1938 = vmatprep.subr.mxu0 0.0
    %1939 = vmatpush1.msra.mxu0 0.0
    %1940 = vmatprep.subr.mxu0 0.0
    %1941 = vmatpush1.msra.mxu0 0.0
    %1942 = vmatprep.mubr.f32.mxu0 0.0
    %1943 = vmatmul.mubr.f32.gmra.mrb[0].mxu0 %v1876
    %v1944 = vpop.f32.mrb[0].mxu0
    %v1945 = vadd.f32 0.0, %v1944
    %v1946 = vpop.f32.mrb[0].mxu0
    %v1947 = vadd.f32 0.0, %v1946
    %1948 = vdwg.mxu0
    %v1951 = vrot.slane %v1945, 2
    %v1952 = vrot.slane %v1947, 2
    %v1955 = vadd.f32 %v1519, %v1951
    %v1956 = vadd.f32 %v1521, %v1952
    %v1957 = vxor.u32 %v1955, 2147483648
    %v1958 = vxor.u32 %v1956, 2147483648
    %v1959 = vmul.f32 %v1957, 1.442695
    %v1960 = vpow.pop %v1959
    %v1961 = vmul.f32 %v1958, 1.442695
    %v1962 = vpow.pop %v1961
    %v1963 = vadd.f32 %v1960, 1.0
    %v1964 = vadd.f32 %v1962, 1.0
    %v1965 = vrcp.pop %v1963
    %v1966 = vmul.f32 1.0, %v1965
    %v1967 = vrcp.pop %v1964
    %v1968 = vmul.f32 1.0, %v1967
    %v1969 = vtanh.pop %v1956
    %v1971 = vrot.slane %v1864, 6
    %v1973 = vmul.f32 %v1966, %v1971
    %v1974 = vmul.f32 %v1966, %v1969
    %1976 = vrot.lane.b32.xlu0 %v1974, 64
    %v1977 = vpop.permute.xlu0 %1976
    %v1979 = vadd.f32 %v1973, %v1977
    %v1980 = vtanh.pop %v1979
    %v1981 = vmul.f32 %v1968, %v1980
    %1983 = vrot.lane.b32.xlu0 %v1981, 64
    %v1984 = vpop.permute.xlu0 %1983
    %1986 = vst.msk [vmem:[#allocation3] sm:$0xc0] %vm951, %v1984
    %1987 = vst.msk [vmem:[#allocation3 + $0x2] sm:$0xc0] %vm953, %v1981
    %v1988 = vrot.slane %v1981, 6
    %1989 = vrot.lane.b32.xlu0 %v1988, 64
    %v1990 = vpop.permute.xlu0 %1989
    %v1991 = vsel %vm500, %v1990, 0
    %1993 = vmatprep.subr.mxu0 %v1530
    %1994 = vmatpush1.msra.mxu0 %v1529
    %1995 = vmatprep.subr.mxu0 %v1532
    %1996 = vmatpush1.msra.mxu0 %v1531
    %1997 = vmatprep.subr.mxu0 %v1534
    %1998 = vmatpush1.msra.mxu0 %v1533
    %1999 = vmatprep.subr.mxu0 %v1536
    %2000 = vmatpush1.msra.mxu0 %v1535
    %2001 = vmatprep.subr.mxu0 %v1538
    %2002 = vmatpush1.msra.mxu0 %v1537
    %2003 = vmatprep.subr.mxu0 %v1540
    %2004 = vmatpush1.msra.mxu0 %v1539
    %2005 = vmatprep.subr.mxu0 %v1542
    %2006 = vmatpush1.msra.mxu0 %v1541
    %2007 = vmatprep.subr.mxu0 %v1544
    %2008 = vmatpush1.msra.mxu0 %v1543
    %2009 = vmatprep.subr.mxu0 0.0
    %2010 = vmatpush1.msra.mxu0 0.0
    %2011 = vmatprep.subr.mxu0 0.0
    %2012 = vmatpush1.msra.mxu0 0.0
    %2013 = vmatprep.subr.mxu0 0.0
    %2014 = vmatpush1.msra.mxu0 0.0
    %2015 = vmatprep.subr.mxu0 0.0
    %2016 = vmatpush1.msra.mxu0 0.0
    %2017 = vmatprep.subr.mxu0 0.0
    %2018 = vmatpush1.msra.mxu0 0.0
    %2019 = vmatprep.subr.mxu0 0.0
    %2020 = vmatpush1.msra.mxu0 0.0
    %2021 = vmatprep.subr.mxu0 0.0
    %2022 = vmatpush1.msra.mxu0 0.0
    %2023 = vmatprep.subr.mxu0 0.0
    %2024 = vmatpush1.msra.mxu0 0.0
    %2025 = vmatprep.subr.mxu0 0.0
    %2026 = vmatpush1.msra.mxu0 0.0
    %2027 = vmatprep.subr.mxu0 0.0
    %2028 = vmatpush1.msra.mxu0 0.0
    %2029 = vmatprep.subr.mxu0 0.0
    %2030 = vmatpush1.msra.mxu0 0.0
    %2031 = vmatprep.subr.mxu0 0.0
    %2032 = vmatpush1.msra.mxu0 0.0
    %2033 = vmatprep.subr.mxu0 0.0
    %2034 = vmatpush1.msra.mxu0 0.0
    %2035 = vmatprep.subr.mxu0 0.0
    %2036 = vmatpush1.msra.mxu0 0.0
    %2037 = vmatprep.subr.mxu0 0.0
    %2038 = vmatpush1.msra.mxu0 0.0
    %2039 = vmatprep.subr.mxu0 0.0
    %2040 = vmatpush1.msra.mxu0 0.0
    %2041 = vmatprep.subr.mxu0 0.0
    %2042 = vmatpush1.msra.mxu0 0.0
    %2043 = vmatprep.subr.mxu0 0.0
    %2044 = vmatpush1.msra.mxu0 0.0
    %2045 = vmatprep.subr.mxu0 0.0
    %2046 = vmatpush1.msra.mxu0 0.0
    %2047 = vmatprep.subr.mxu0 0.0
    %2048 = vmatpush1.msra.mxu0 0.0
    %2049 = vmatprep.subr.mxu0 0.0
    %2050 = vmatpush1.msra.mxu0 0.0
    %2051 = vmatprep.subr.mxu0 0.0
    %2052 = vmatpush1.msra.mxu0 0.0
    %2053 = vmatprep.subr.mxu0 0.0
    %2054 = vmatpush1.msra.mxu0 0.0
    %2055 = vmatprep.subr.mxu0 0.0
    %2056 = vmatpush1.msra.mxu0 0.0
    %2057 = vmatprep.mubr.f32.mxu0 0.0
    %2058 = vmatmul.mubr.f32.gmra.mrb[0].mxu0 %v1991
    %v2059 = vpop.f32.mrb[0].mxu0
    %v2060 = vadd.f32 0.0, %v2059
    %v2061 = vpop.f32.mrb[0].mxu0
    %v2062 = vadd.f32 0.0, %v2061
    %2063 = vdwg.mxu0
    %v2064 = vadd.f32 %v1525, %v2060
    %v2065 = vadd.f32 %v1527, %v2062
    %v2066 = vxor.u32 %v2064, 2147483648
    %v2067 = vxor.u32 %v2065, 2147483648
    %v2068 = vmul.f32 %v2066, 1.442695
    %v2069 = vpow.pop %v2068
    %v2070 = vmul.f32 %v2067, 1.442695
    %v2071 = vpow.pop %v2070
    %v2072 = vadd.f32 %v2069, 1.0
    %v2073 = vadd.f32 %v2071, 1.0
    %v2074 = vrcp.pop %v2072
    %v2075 = vmul.f32 1.0, %v2074
    %v2076 = vrcp.pop %v2073
    %v2077 = vmul.f32 1.0, %v2076
    %v2078 = vtanh.pop %v2065
    %v2080 = vrot.slane %v1979, 6
    %v2082 = vmul.f32 %v2075, %v2080
    %v2083 = vmul.f32 %v2075, %v2078
    %2085 = vrot.lane.b32.xlu0 %v2083, 64
    %v2086 = vpop.permute.xlu0 %2085
    %v2088 = vadd.f32 %v2082, %v2086
    %v2089 = vtanh.pop %v2088
    %v2090 = vmul.f32 %v2077, %v2089
    %2092 = vrot.lane.b32.xlu0 %v2090, 64
    %v2093 = vpop.permute.xlu0 %2092
    %2095 = vst.msk [vmem:[#allocation3 + $0x8] sm:$0x3] %vm603, %v2093
    %2096 = vst.msk [vmem:[#allocation3 + $0x6] sm:$0x3] %vm605, %v2090
    %v2097 = vsel %vm500, %v2093, 0
    %2099 = vmatprep.subr.mxu0 %v1530
    %2100 = vmatpush1.msra.mxu0 %v1529
    %2101 = vmatprep.subr.mxu0 %v1532
    %2102 = vmatpush1.msra.mxu0 %v1531
    %2103 = vmatprep.subr.mxu0 %v1534
    %2104 = vmatpush1.msra.mxu0 %v1533
    %2105 = vmatprep.subr.mxu0 %v1536
    %2106 = vmatpush1.msra.mxu0 %v1535
    %2107 = vmatprep.subr.mxu0 %v1538
    %2108 = vmatpush1.msra.mxu0 %v1537
    %2109 = vmatprep.subr.mxu0 %v1540
    %2110 = vmatpush1.msra.mxu0 %v1539
    %2111 = vmatprep.subr.mxu0 %v1542
    %2112 = vmatpush1.msra.mxu0 %v1541
    %2113 = vmatprep.subr.mxu0 %v1544
    %2114 = vmatpush1.msra.mxu0 %v1543
    %2115 = vmatprep.subr.mxu0 0.0
    %2116 = vmatpush1.msra.mxu0 0.0
    %2117 = vmatprep.subr.mxu0 0.0
    %2118 = vmatpush1.msra.mxu0 0.0
    %2119 = vmatprep.subr.mxu0 0.0
    %2120 = vmatpush1.msra.mxu0 0.0
    %2121 = vmatprep.subr.mxu0 0.0
    %2122 = vmatpush1.msra.mxu0 0.0
    %2123 = vmatprep.subr.mxu0 0.0
    %2124 = vmatpush1.msra.mxu0 0.0
    %2125 = vmatprep.subr.mxu0 0.0
    %2126 = vmatpush1.msra.mxu0 0.0
    %2127 = vmatprep.subr.mxu0 0.0
    %2128 = vmatpush1.msra.mxu0 0.0
    %2129 = vmatprep.subr.mxu0 0.0
    %2130 = vmatpush1.msra.mxu0 0.0
    %2131 = vmatprep.subr.mxu0 0.0
    %2132 = vmatpush1.msra.mxu0 0.0
    %2133 = vmatprep.subr.mxu0 0.0
    %2134 = vmatpush1.msra.mxu0 0.0
    %2135 = vmatprep.subr.mxu0 0.0
    %2136 = vmatpush1.msra.mxu0 0.0
    %2137 = vmatprep.subr.mxu0 0.0
    %2138 = vmatpush1.msra.mxu0 0.0
    %2139 = vmatprep.subr.mxu0 0.0
    %2140 = vmatpush1.msra.mxu0 0.0
    %2141 = vmatprep.subr.mxu0 0.0
    %2142 = vmatpush1.msra.mxu0 0.0
    %2143 = vmatprep.subr.mxu0 0.0
    %2144 = vmatpush1.msra.mxu0 0.0
    %2145 = vmatprep.subr.mxu0 0.0
    %2146 = vmatpush1.msra.mxu0 0.0
    %2147 = vmatprep.subr.mxu0 0.0
    %2148 = vmatpush1.msra.mxu0 0.0
    %2149 = vmatprep.subr.mxu0 0.0
    %2150 = vmatpush1.msra.mxu0 0.0
    %2151 = vmatprep.subr.mxu0 0.0
    %2152 = vmatpush1.msra.mxu0 0.0
    %2153 = vmatprep.subr.mxu0 0.0
    %2154 = vmatpush1.msra.mxu0 0.0
    %2155 = vmatprep.subr.mxu0 0.0
    %2156 = vmatpush1.msra.mxu0 0.0
    %2157 = vmatprep.subr.mxu0 0.0
    %2158 = vmatpush1.msra.mxu0 0.0
    %2159 = vmatprep.subr.mxu0 0.0
    %2160 = vmatpush1.msra.mxu0 0.0
    %2161 = vmatprep.subr.mxu0 0.0
    %2162 = vmatpush1.msra.mxu0 0.0
    %2163 = vmatprep.mubr.f32.mxu0 0.0
    %2164 = vmatmul.mubr.f32.gmra.mrb[0].mxu0 %v2097
    %v2165 = vpop.f32.mrb[0].mxu0
    %v2166 = vadd.f32 0.0, %v2165
    %v2167 = vpop.f32.mrb[0].mxu0
    %v2168 = vadd.f32 0.0, %v2167
    %2169 = vdwg.mxu0
    %v2172 = vrot.slane %v2166, 6
    %v2173 = vrot.slane %v2168, 6
    %v2176 = vadd.f32 %v1525, %v2172
    %v2177 = vadd.f32 %v1527, %v2173
    %v2178 = vxor.u32 %v2176, 2147483648
    %v2179 = vxor.u32 %v2177, 2147483648
    %v2180 = vmul.f32 %v2178, 1.442695
    %v2181 = vpow.pop %v2180
    %v2182 = vmul.f32 %v2179, 1.442695
    %v2183 = vpow.pop %v2182
    %v2184 = vadd.f32 %v2181, 1.0
    %v2185 = vadd.f32 %v2183, 1.0
    %v2186 = vrcp.pop %v2184
    %v2187 = vmul.f32 1.0, %v2186
    %v2188 = vrcp.pop %v2185
    %v2189 = vmul.f32 1.0, %v2188
    %v2190 = vtanh.pop %v2177
    %v2192 = vrot.slane %v2088, 6
    %v2194 = vmul.f32 %v2187, %v2192
    %v2195 = vmul.f32 %v2187, %v2190
    %2197 = vrot.lane.b32.xlu0 %v2195, 64
    %v2198 = vpop.permute.xlu0 %2197
    %v2200 = vadd.f32 %v2194, %v2198
    %v2201 = vtanh.pop %v2200
    %v2202 = vmul.f32 %v2189, %v2201
    %2204 = vrot.lane.b32.xlu0 %v2202, 64
    %v2205 = vpop.permute.xlu0 %2204
    %2207 = vst.msk [vmem:[#allocation3 + $0x8] sm:$0xc] %vm717, %v2205
    %2208 = vst.msk [vmem:[#allocation3 + $0x2] sm:$0xc] %vm719, %v2202
    %v2209 = vrot.slane %v2202, 2
    %2210 = vrot.lane.b32.xlu0 %v2209, 64
    %v2211 = vpop.permute.xlu0 %2210
    %v2212 = vsel %vm500, %v2211, 0
    %2214 = vmatprep.subr.mxu0 %v1530
    %2215 = vmatpush1.msra.mxu0 %v1529
    %2216 = vmatprep.subr.mxu0 %v1532
    %2217 = vmatpush1.msra.mxu0 %v1531
    %2218 = vmatprep.subr.mxu0 %v1534
    %2219 = vmatpush1.msra.mxu0 %v1533
    %2220 = vmatprep.subr.mxu0 %v1536
    %2221 = vmatpush1.msra.mxu0 %v1535
    %2222 = vmatprep.subr.mxu0 %v1538
    %2223 = vmatpush1.msra.mxu0 %v1537
    %2224 = vmatprep.subr.mxu0 %v1540
    %2225 = vmatpush1.msra.mxu0 %v1539
    %2226 = vmatprep.subr.mxu0 %v1542
    %2227 = vmatpush1.msra.mxu0 %v1541
    %2228 = vmatprep.subr.mxu0 %v1544
    %2229 = vmatpush1.msra.mxu0 %v1543
    %2230 = vmatprep.subr.mxu0 0.0
    %2231 = vmatpush1.msra.mxu0 0.0
    %2232 = vmatprep.subr.mxu0 0.0
    %2233 = vmatpush1.msra.mxu0 0.0
    %2234 = vmatprep.subr.mxu0 0.0
    %2235 = vmatpush1.msra.mxu0 0.0
    %2236 = vmatprep.subr.mxu0 0.0
    %2237 = vmatpush1.msra.mxu0 0.0
    %2238 = vmatprep.subr.mxu0 0.0
    %2239 = vmatpush1.msra.mxu0 0.0
    %2240 = vmatprep.subr.mxu0 0.0
    %2241 = vmatpush1.msra.mxu0 0.0
    %2242 = vmatprep.subr.mxu0 0.0
    %2243 = vmatpush1.msra.mxu0 0.0
    %2244 = vmatprep.subr.mxu0 0.0
    %2245 = vmatpush1.msra.mxu0 0.0
    %2246 = vmatprep.subr.mxu0 0.0
    %2247 = vmatpush1.msra.mxu0 0.0
    %2248 = vmatprep.subr.mxu0 0.0
    %2249 = vmatpush1.msra.mxu0 0.0
    %2250 = vmatprep.subr.mxu0 0.0
    %2251 = vmatpush1.msra.mxu0 0.0
    %2252 = vmatprep.subr.mxu0 0.0
    %2253 = vmatpush1.msra.mxu0 0.0
    %2254 = vmatprep.subr.mxu0 0.0
    %2255 = vmatpush1.msra.mxu0 0.0
    %2256 = vmatprep.subr.mxu0 0.0
    %2257 = vmatpush1.msra.mxu0 0.0
    %2258 = vmatprep.subr.mxu0 0.0
    %2259 = vmatpush1.msra.mxu0 0.0
    %2260 = vmatprep.subr.mxu0 0.0
    %2261 = vmatpush1.msra.mxu0 0.0
    %2262 = vmatprep.subr.mxu0 0.0
    %2263 = vmatpush1.msra.mxu0 0.0
    %2264 = vmatprep.subr.mxu0 0.0
    %2265 = vmatpush1.msra.mxu0 0.0
    %2266 = vmatprep.subr.mxu0 0.0
    %2267 = vmatpush1.msra.mxu0 0.0
    %2268 = vmatprep.subr.mxu0 0.0
    %2269 = vmatpush1.msra.mxu0 0.0
    %2270 = vmatprep.subr.mxu0 0.0
    %2271 = vmatpush1.msra.mxu0 0.0
    %2272 = vmatprep.subr.mxu0 0.0
    %2273 = vmatpush1.msra.mxu0 0.0
    %2274 = vmatprep.subr.mxu0 0.0
    %2275 = vmatpush1.msra.mxu0 0.0
    %2276 = vmatprep.subr.mxu0 0.0
    %2277 = vmatpush1.msra.mxu0 0.0
    %2278 = vmatprep.mubr.f32.mxu0 0.0
    %2279 = vmatmul.mubr.f32.gmra.mrb[0].mxu0 %v2212
    %v2280 = vpop.f32.mrb[0].mxu0
    %v2281 = vadd.f32 0.0, %v2280
    %v2282 = vpop.f32.mrb[0].mxu0
    %v2283 = vadd.f32 0.0, %v2282
    %2284 = vdwg.mxu0
    %v2287 = vrot.slane %v2281, 4
    %v2288 = vrot.slane %v2283, 4
    %v2291 = vadd.f32 %v1525, %v2287
    %v2292 = vadd.f32 %v1527, %v2288
    %v2293 = vxor.u32 %v2291, 2147483648
    %v2294 = vxor.u32 %v2292, 2147483648
    %v2295 = vmul.f32 %v2293, 1.442695
    %v2296 = vpow.pop %v2295
    %v2297 = vmul.f32 %v2294, 1.442695
    %v2298 = vpow.pop %v2297
    %v2299 = vadd.f32 %v2296, 1.0
    %v2300 = vadd.f32 %v2298, 1.0
    %v2301 = vrcp.pop %v2299
    %v2302 = vmul.f32 1.0, %v2301
    %v2303 = vrcp.pop %v2300
    %v2304 = vmul.f32 1.0, %v2303
    %v2305 = vtanh.pop %v2292
    %v2307 = vrot.slane %v2200, 6
    %v2309 = vmul.f32 %v2302, %v2307
    %v2310 = vmul.f32 %v2302, %v2305
    %2312 = vrot.lane.b32.xlu0 %v2310, 64
    %v2313 = vpop.permute.xlu0 %2312
    %v2315 = vadd.f32 %v2309, %v2313
    %v2316 = vtanh.pop %v2315
    %v2317 = vmul.f32 %v2304, %v2316
    %2319 = vrot.lane.b32.xlu0 %v2317, 64
    %v2320 = vpop.permute.xlu0 %2319
    %2322 = vst.msk [vmem:[#allocation3 + $0x8] sm:$0x30] %vm834, %v2320
    %2323 = vst.msk [vmem:[#allocation3 - $0x2] sm:$0x30] %vm836, %v2317
    %v2324 = vrot.slane %v2317, 4
    %2325 = vrot.lane.b32.xlu0 %v2324, 64
    %v2326 = vpop.permute.xlu0 %2325
    %v2327 = vsel %vm500, %v2326, 0
    %2329 = vmatprep.subr.mxu0 %v1530
    %2330 = vmatpush1.msra.mxu0 %v1529
    %2331 = vmatprep.subr.mxu0 %v1532
    %2332 = vmatpush1.msra.mxu0 %v1531
    %2333 = vmatprep.subr.mxu0 %v1534
    %2334 = vmatpush1.msra.mxu0 %v1533
    %2335 = vmatprep.subr.mxu0 %v1536
    %2336 = vmatpush1.msra.mxu0 %v1535
    %2337 = vmatprep.subr.mxu0 %v1538
    %2338 = vmatpush1.msra.mxu0 %v1537
    %2339 = vmatprep.subr.mxu0 %v1540
    %2340 = vmatpush1.msra.mxu0 %v1539
    %2341 = vmatprep.subr.mxu0 %v1542
    %2342 = vmatpush1.msra.mxu0 %v1541
    %2343 = vmatprep.subr.mxu0 %v1544
    %2344 = vmatpush1.msra.mxu0 %v1543
    %2345 = vmatprep.subr.mxu0 0.0
    %2346 = vmatpush1.msra.mxu0 0.0
    %2347 = vmatprep.subr.mxu0 0.0
    %2348 = vmatpush1.msra.mxu0 0.0
    %2349 = vmatprep.subr.mxu0 0.0
    %2350 = vmatpush1.msra.mxu0 0.0
    %2351 = vmatprep.subr.mxu0 0.0
    %2352 = vmatpush1.msra.mxu0 0.0
    %2353 = vmatprep.subr.mxu0 0.0
    %2354 = vmatpush1.msra.mxu0 0.0
    %2355 = vmatprep.subr.mxu0 0.0
    %2356 = vmatpush1.msra.mxu0 0.0
    %2357 = vmatprep.subr.mxu0 0.0
    %2358 = vmatpush1.msra.mxu0 0.0
    %2359 = vmatprep.subr.mxu0 0.0
    %2360 = vmatpush1.msra.mxu0 0.0
    %2361 = vmatprep.subr.mxu0 0.0
    %2362 = vmatpush1.msra.mxu0 0.0
    %2363 = vmatprep.subr.mxu0 0.0
    %2364 = vmatpush1.msra.mxu0 0.0
    %2365 = vmatprep.subr.mxu0 0.0
    %2366 = vmatpush1.msra.mxu0 0.0
    %2367 = vmatprep.subr.mxu0 0.0
    %2368 = vmatpush1.msra.mxu0 0.0
    %2369 = vmatprep.subr.mxu0 0.0
    %2370 = vmatpush1.msra.mxu0 0.0
    %2371 = vmatprep.subr.mxu0 0.0
    %2372 = vmatpush1.msra.mxu0 0.0
    %2373 = vmatprep.subr.mxu0 0.0
    %2374 = vmatpush1.msra.mxu0 0.0
    %2375 = vmatprep.subr.mxu0 0.0
    %2376 = vmatpush1.msra.mxu0 0.0
    %2377 = vmatprep.subr.mxu0 0.0
    %2378 = vmatpush1.msra.mxu0 0.0
    %2379 = vmatprep.subr.mxu0 0.0
    %2380 = vmatpush1.msra.mxu0 0.0
    %2381 = vmatprep.subr.mxu0 0.0
    %2382 = vmatpush1.msra.mxu0 0.0
    %2383 = vmatprep.subr.mxu0 0.0
    %2384 = vmatpush1.msra.mxu0 0.0
    %2385 = vmatprep.subr.mxu0 0.0
    %2386 = vmatpush1.msra.mxu0 0.0
    %2387 = vmatprep.subr.mxu0 0.0
    %2388 = vmatpush1.msra.mxu0 0.0
    %2389 = vmatprep.subr.mxu0 0.0
    %2390 = vmatpush1.msra.mxu0 0.0
    %2391 = vmatprep.subr.mxu0 0.0
    %2392 = vmatpush1.msra.mxu0 0.0
    %2393 = vmatprep.mubr.f32.mxu0 0.0
    %2394 = vmatmul.mubr.f32.gmra.mrb[0].mxu0 %v2327
    %v2395 = vpop.f32.mrb[0].mxu0
    %v2396 = vadd.f32 0.0, %v2395
    %v2397 = vpop.f32.mrb[0].mxu0
    %v2398 = vadd.f32 0.0, %v2397
    %2399 = vdwg.mxu0
    %v2402 = vrot.slane %v2396, 2
    %v2403 = vrot.slane %v2398, 2
    %v2406 = vadd.f32 %v1525, %v2402
    %v2407 = vadd.f32 %v1527, %v2403
    %v2408 = vxor.u32 %v2406, 2147483648
    %v2409 = vxor.u32 %v2407, 2147483648
    %v2410 = vmul.f32 %v2408, 1.442695
    %v2411 = vpow.pop %v2410
    %v2412 = vmul.f32 %v2409, 1.442695
    %v2413 = vpow.pop %v2412
    %v2414 = vadd.f32 %v2411, 1.0
    %v2415 = vadd.f32 %v2413, 1.0
    %v2416 = vrcp.pop %v2414
    %v2417 = vmul.f32 1.0, %v2416
    %v2418 = vrcp.pop %v2415
    %v2419 = vmul.f32 1.0, %v2418
    %v2420 = vtanh.pop %v2407
    %v2422 = vrot.slane %v2315, 6
    %v2424 = vmul.f32 %v2417, %v2422
    %v2425 = vmul.f32 %v2417, %v2420
    %2427 = vrot.lane.b32.xlu0 %v2425, 64
    %v2428 = vpop.permute.xlu0 %2427
    %v2430 = vadd.f32 %v2424, %v2428
    %v2431 = vtanh.pop %v2430
    %v2432 = vmul.f32 %v2419, %v2431
    %2434 = vrot.lane.b32.xlu0 %v2432, 64
    %v2435 = vpop.permute.xlu0 %2434
    %2437 = vst.msk [vmem:[#allocation3 + $0x8] sm:$0xc0] %vm951, %v2435
    %2438 = vst.msk [vmem:[#allocation3 - $0x6] sm:$0xc0] %vm953, %v2432
    %v2439 = vld [vmem:[#allocation3] sm:$0xff]
    %v2440 = vld [vmem:[#allocation3 + $0x8] sm:$0xff]
    %v2441 = vsel %vm301, %v2435, 0.0
    %vm2442 = vcmask 785408
    %v2443 = vsel %vm2442, %v2441, %v2432
    %v2445 = vrot.slane %v2443, 6
    %v2447 = vmul.f32 %v2439, %v2445
    %v2448 = vsel %vm125, %v2447, 0.0
    %2449 = vadd.xlane.f32.xlu0 %v2448
    %v2450 = vpop.xlane.xlu0 %2449
    %v2451 = vrot.slane %v2443, 4
    %v2453 = vmul.f32 %v2439, %v2451
    %vm2454 = vcmask 1043458
    %v2455 = vsel %vm2454, %v2453, 0.0
    %2456 = vadd.xlane.f32.xlu0 %v2455
    %v2457 = vpop.xlane.xlu0 %2456
    %v2458 = vrot.slane %v2443, 2
    %v2460 = vmul.f32 %v2439, %v2458
    %vm2461 = vcmask 1045508
    %v2462 = vsel %vm2461, %v2460, 0.0
    %2463 = vadd.xlane.f32.xlu0 %v2462
    %v2464 = vpop.xlane.xlu0 %2463
    %v2465 = vmul.f32 %v2439, %v2443
    %vm2466 = vcmask 1047558
    %v2467 = vsel %vm2466, %v2465, 0.0
    %2468 = vadd.xlane.f32.xlu0 %v2467
    %v2469 = vpop.xlane.xlu0 %2468
    %v2470 = vmul.f32 %v2440, %v2445
    %v2471 = vsel %vm125, %v2470, 0.0
    %2472 = vadd.xlane.f32.xlu0 %v2471
    %v2473 = vpop.xlane.xlu0 %2472
    %v2474 = vmul.f32 %v2440, %v2451
    %v2475 = vsel %vm2454, %v2474, 0.0
    %2476 = vadd.xlane.f32.xlu0 %v2475
    %v2477 = vpop.xlane.xlu0 %2476
    %v2478 = vmul.f32 %v2440, %v2458
    %v2479 = vsel %vm2461, %v2478, 0.0
    %2480 = vadd.xlane.f32.xlu0 %v2479
    %v2481 = vpop.xlane.xlu0 %2480
    %v2482 = vmul.f32 %v2440, %v2443
    %v2483 = vsel %vm2466, %v2482, 0.0
    %2484 = vadd.xlane.f32.xlu0 %v2483
    %v2485 = vpop.xlane.xlu0 %2484
    %v2487 = vrot.slane %v2457, 2
    %v2489 = vmax.f32 %v2450, %v2487
    %v2491 = vrot.slane %v2464, 4
    %v2493 = vmax.f32 %v2489, %v2491
    %v2495 = vrot.slane %v2469, 6
    %v2497 = vmax.f32 %v2493, %v2495
    %v2498 = vmax.f32 %v2497, %v2473
    %v2500 = vrot.slane %v2477, 2
    %v2502 = vmax.f32 %v2498, %v2500
    %v2504 = vrot.slane %v2481, 4
    %v2506 = vmax.f32 %v2502, %v2504
    %v2508 = vrot.slane %v2485, 6
    %v2510 = vmax.f32 %v2506, %v2508
    %v2511 = vsub.f32 %v2450, %v2510
    %v2512 = vmul.f32 %v2511, 1.442695
    %v2513 = vpow.pop %v2512
    %v2515 = vrot.slane %v2510, 6
    %v2517 = vsub.f32 %v2457, %v2515
    %v2518 = vmul.f32 %v2517, 1.442695
    %v2519 = vpow.pop %v2518
    %v2520 = vrot.slane %v2510, 4
    %v2522 = vsub.f32 %v2464, %v2520
    %v2523 = vmul.f32 %v2522, 1.442695
    %v2524 = vpow.pop %v2523
    %v2525 = vrot.slane %v2510, 2
    %v2527 = vsub.f32 %v2469, %v2525
    %v2528 = vmul.f32 %v2527, 1.442695
    %v2529 = vpow.pop %v2528
    %v2530 = vsub.f32 %v2473, %v2510
    %v2531 = vmul.f32 %v2530, 1.442695
    %v2532 = vpow.pop %v2531
    %v2533 = vsub.f32 %v2477, %v2515
    %v2534 = vmul.f32 %v2533, 1.442695
    %v2535 = vpow.pop %v2534
    %v2536 = vsub.f32 %v2481, %v2520
    %v2537 = vmul.f32 %v2536, 1.442695
    %v2538 = vpow.pop %v2537
    %v2539 = vsub.f32 %v2485, %v2525
    %v2540 = vmul.f32 %v2539, 1.442695
    %v2541 = vpow.pop %v2540
    %v2543 = vrot.slane %v2519, 2
    %v2545 = vadd.f32 %v2513, %v2543
    %v2547 = vrot.slane %v2524, 4
    %v2549 = vadd.f32 %v2545, %v2547
    %v2551 = vrot.slane %v2529, 6
    %v2553 = vadd.f32 %v2549, %v2551
    %v2554 = vadd.f32 %v2553, %v2532
    %v2556 = vrot.slane %v2535, 2
    %v2558 = vadd.f32 %v2554, %v2556
    %v2560 = vrot.slane %v2538, 4
    %v2562 = vadd.f32 %v2558, %v2560
    %v2564 = vrot.slane %v2541, 6
    %v2566 = vadd.f32 %v2562, %v2564
    %v2567 = vrcp.pop %v2566
    %2569 = vset.pattern.permute.xlu0 0
    %2570 = vperm.xlu0 %2569, %v2513
    %v2571 = vpop.permute.xlu0 %2570
    %v2573 = vmul.f32 %v2571, %v2439
    %2574 = vset.pattern.permute.xlu0 0
    %2575 = vperm.xlu0 %2574, %v2519
    %v2576 = vpop.permute.xlu0 %2575
    %v2578 = vmul.f32 %v2576, %v2439
    %v2580 = vrot.slane %v2578, 2
    %v2582 = vadd.f32 %v2573, %v2580
    %2583 = vset.pattern.permute.xlu0 0
    %2584 = vperm.xlu0 %2583, %v2524
    %v2585 = vpop.permute.xlu0 %2584
    %v2587 = vmul.f32 %v2585, %v2439
    %v2589 = vrot.slane %v2587, 4
    %v2591 = vadd.f32 %v2582, %v2589
    %2592 = vset.pattern.permute.xlu0 0
    %2593 = vperm.xlu0 %2592, %v2529
    %v2594 = vpop.permute.xlu0 %2593
    %v2596 = vmul.f32 %v2594, %v2439
    %v2598 = vrot.slane %v2596, 6
    %v2600 = vadd.f32 %v2591, %v2598
    %2602 = vset.pattern.permute.xlu0 0
    %2603 = vperm.xlu0 %2602, %v2532
    %v2604 = vpop.permute.xlu0 %2603
    %v2606 = vmul.f32 %v2604, %v2440
    %v2607 = vadd.f32 %v2600, %v2606
    %2608 = vset.pattern.permute.xlu0 0
    %2609 = vperm.xlu0 %2608, %v2535
    %v2610 = vpop.permute.xlu0 %2609
    %v2612 = vmul.f32 %v2610, %v2440
    %v2614 = vrot.slane %v2612, 2
    %v2616 = vadd.f32 %v2607, %v2614
    %2617 = vset.pattern.permute.xlu0 0
    %2618 = vperm.xlu0 %2617, %v2538
    %v2619 = vpop.permute.xlu0 %2618
    %v2621 = vmul.f32 %v2619, %v2440
    %v2623 = vrot.slane %v2621, 4
    %v2625 = vadd.f32 %v2616, %v2623
    %2626 = vset.pattern.permute.xlu0 0
    %2627 = vperm.xlu0 %2626, %v2541
    %v2628 = vpop.permute.xlu0 %2627
    %v2630 = vmul.f32 %v2628, %v2440
    %v2632 = vrot.slane %v2630, 6
    %v2634 = vadd.f32 %v2625, %v2632
    %2636 = vset.pattern.permute.xlu0 0
    %2637 = vperm.xlu0 %2636, %v2567
    %v2638 = vpop.permute.xlu0 %2637
    %v2640 = vmul.f32 %v2634, %v2638
    %v2641 = vld [vmem:[%s9] sm:$0xff]
    %v2642 = vld [vmem:[%s9 + $0x8] sm:$0xff]
    %v2643 = vld [vmem:[%s9 + $0x10] sm:$0xff]
    %v2644 = vld [vmem:[%s9 + $0x18] sm:$0xff]
    %v2645 = vld [vmem:[%s9 + $0x20] sm:$0xff]
    %v2646 = vld [vmem:[%s9 + $0x28] sm:$0xff]
    %v2647 = vld [vmem:[%s9 + $0x30] sm:$0xff]
    %v2648 = vld [vmem:[%s9 + $0x38] sm:$0xff]
    %v2649 = vld [vmem:[%s10] sm:$0xff]
    %v2650 = vld [vmem:[%s10 + $0x8] sm:$0xff]
    %v2651 = vld [vmem:[%s10 + $0x10] sm:$0xff]
    %v2652 = vld [vmem:[%s10 + $0x18] sm:$0xff]
    %v2653 = vld [vmem:[%s10 + $0x20] sm:$0xff]
    %v2654 = vld [vmem:[%s10 + $0x28] sm:$0xff]
    %v2655 = vld [vmem:[%s10 + $0x30] sm:$0xff]
    %v2656 = vld [vmem:[%s10 + $0x38] sm:$0xff]
    %v2657 = vld [vmem:[%s10 + $0x40] sm:$0xff]
    %v2658 = vld [vmem:[%s10 + $0x48] sm:$0xff]
    %v2659 = vld [vmem:[%s10 + $0x50] sm:$0xff]
    %v2660 = vld [vmem:[%s10 + $0x58] sm:$0xff]
    %v2661 = vld [vmem:[%s10 + $0x60] sm:$0xff]
    %v2662 = vld [vmem:[%s10 + $0x68] sm:$0xff]
    %v2663 = vld [vmem:[%s10 + $0x70] sm:$0xff]
    %v2664 = vld [vmem:[%s10 + $0x78] sm:$0xff]
    %2665 = vmatprep.subr.mxu0 0.0
    %2666 = vmatpush1.msra.mxu0 %v2649
    %2667 = vmatprep.subr.mxu0 0.0
    %2668 = vmatpush1.msra.mxu0 %v2650
    %2669 = vmatprep.subr.mxu0 0.0
    %2670 = vmatpush1.msra.mxu0 %v2651
    %2671 = vmatprep.subr.mxu0 0.0
    %2672 = vmatpush1.msra.mxu0 %v2652
    %2673 = vmatprep.subr.mxu0 0.0
    %2674 = vmatpush1.msra.mxu0 %v2653
    %2675 = vmatprep.subr.mxu0 0.0
    %2676 = vmatpush1.msra.mxu0 %v2654
    %2677 = vmatprep.subr.mxu0 0.0
    %2678 = vmatpush1.msra.mxu0 %v2655
    %2679 = vmatprep.subr.mxu0 0.0
    %2680 = vmatpush1.msra.mxu0 %v2656
    %2681 = vmatprep.subr.mxu0 0.0
    %2682 = vmatpush1.msra.mxu0 %v2657
    %2683 = vmatprep.subr.mxu0 0.0
    %2684 = vmatpush1.msra.mxu0 %v2658
    %2685 = vmatprep.subr.mxu0 0.0
    %2686 = vmatpush1.msra.mxu0 %v2659
    %2687 = vmatprep.subr.mxu0 0.0
    %2688 = vmatpush1.msra.mxu0 %v2660
    %2689 = vmatprep.subr.mxu0 0.0
    %2690 = vmatpush1.msra.mxu0 %v2661
    %2691 = vmatprep.subr.mxu0 0.0
    %2692 = vmatpush1.msra.mxu0 %v2662
    %2693 = vmatprep.subr.mxu0 0.0
    %2694 = vmatpush1.msra.mxu0 %v2663
    %2695 = vmatprep.subr.mxu0 0.0
    %2696 = vmatpush1.msra.mxu0 %v2664
    %2697 = vmatprep.subr.mxu0 0.0
    %2698 = vmatpush1.msra.mxu0 0.0
    %2699 = vmatprep.subr.mxu0 0.0
    %2700 = vmatpush1.msra.mxu0 0.0
    %2701 = vmatprep.subr.mxu0 0.0
    %2702 = vmatpush1.msra.mxu0 0.0
    %2703 = vmatprep.subr.mxu0 0.0
    %2704 = vmatpush1.msra.mxu0 0.0
    %2705 = vmatprep.subr.mxu0 0.0
    %2706 = vmatpush1.msra.mxu0 0.0
    %2707 = vmatprep.subr.mxu0 0.0
    %2708 = vmatpush1.msra.mxu0 0.0
    %2709 = vmatprep.subr.mxu0 0.0
    %2710 = vmatpush1.msra.mxu0 0.0
    %2711 = vmatprep.subr.mxu0 0.0
    %2712 = vmatpush1.msra.mxu0 0.0
    %2713 = vmatprep.subr.mxu0 0.0
    %2714 = vmatpush1.msra.mxu0 0.0
    %2715 = vmatprep.subr.mxu0 0.0
    %2716 = vmatpush1.msra.mxu0 0.0
    %2717 = vmatprep.subr.mxu0 0.0
    %2718 = vmatpush1.msra.mxu0 0.0
    %2719 = vmatprep.subr.mxu0 0.0
    %2720 = vmatpush1.msra.mxu0 0.0
    %2721 = vmatprep.subr.mxu0 0.0
    %2722 = vmatpush1.msra.mxu0 0.0
    %2723 = vmatprep.subr.mxu0 0.0
    %2724 = vmatpush1.msra.mxu0 0.0
    %2725 = vmatprep.subr.mxu0 0.0
    %2726 = vmatpush1.msra.mxu0 0.0
    %2727 = vmatprep.subr.mxu0 0.0
    %2728 = vmatpush1.msra.mxu0 0.0
    %2729 = vmatprep.mubr.f32.mxu0 0.0
    %2730 = vmatmul.mubr.f32.gmra.mrb[0].mxu0 %v2640
    %v2731 = vpop.f32.mrb[0].mxu0
    %v2732 = vadd.f32 0.0, %v2731
    %v2733 = vpop.f32.mrb[0].mxu0
    %2734 = vdwg.mxu0
    %v2735 = vrot.slane %v2432, 6
    %2736 = vrot.lane.b32.xlu0 %v2735, 64
    %v2737 = vpop.permute.xlu0 %2736
    %v2738 = vsel %vm500, %v2737, 0
    %2740 = vmatprep.subr.mxu0 0.0
    %2741 = vmatpush1.msra.mxu0 %v2641
    %2742 = vmatprep.subr.mxu0 0.0
    %2743 = vmatpush1.msra.mxu0 %v2642
    %2744 = vmatprep.subr.mxu0 0.0
    %2745 = vmatpush1.msra.mxu0 %v2643
    %2746 = vmatprep.subr.mxu0 0.0
    %2747 = vmatpush1.msra.mxu0 %v2644
    %2748 = vmatprep.subr.mxu0 0.0
    %2749 = vmatpush1.msra.mxu0 %v2645
    %2750 = vmatprep.subr.mxu0 0.0
    %2751 = vmatpush1.msra.mxu0 %v2646
    %2752 = vmatprep.subr.mxu0 0.0
    %2753 = vmatpush1.msra.mxu0 %v2647
    %2754 = vmatprep.subr.mxu0 0.0
    %2755 = vmatpush1.msra.mxu0 %v2648
    %2756 = vmatprep.subr.mxu0 0.0
    %2757 = vmatpush1.msra.mxu0 0.0
    %2758 = vmatprep.subr.mxu0 0.0
    %2759 = vmatpush1.msra.mxu0 0.0
    %2760 = vmatprep.subr.mxu0 0.0
    %2761 = vmatpush1.msra.mxu0 0.0
    %2762 = vmatprep.subr.mxu0 0.0
    %2763 = vmatpush1.msra.mxu0 0.0
    %2764 = vmatprep.subr.mxu0 0.0
    %2765 = vmatpush1.msra.mxu0 0.0
    %2766 = vmatprep.subr.mxu0 0.0
    %2767 = vmatpush1.msra.mxu0 0.0
    %2768 = vmatprep.subr.mxu0 0.0
    %2769 = vmatpush1.msra.mxu0 0.0
    %2770 = vmatprep.subr.mxu0 0.0
    %2771 = vmatpush1.msra.mxu0 0.0
    %2772 = vmatprep.subr.mxu0 0.0
    %2773 = vmatpush1.msra.mxu0 0.0
    %2774 = vmatprep.subr.mxu0 0.0
    %2775 = vmatpush1.msra.mxu0 0.0
    %2776 = vmatprep.subr.mxu0 0.0
    %2777 = vmatpush1.msra.mxu0 0.0
    %2778 = vmatprep.subr.mxu0 0.0
    %2779 = vmatpush1.msra.mxu0 0.0
    %2780 = vmatprep.subr.mxu0 0.0
    %2781 = vmatpush1.msra.mxu0 0.0
    %2782 = vmatprep.subr.mxu0 0.0
    %2783 = vmatpush1.msra.mxu0 0.0
    %2784 = vmatprep.subr.mxu0 0.0
    %2785 = vmatpush1.msra.mxu0 0.0
    %2786 = vmatprep.subr.mxu0 0.0
    %2787 = vmatpush1.msra.mxu0 0.0
    %2788 = vmatprep.subr.mxu0 0.0
    %2789 = vmatpush1.msra.mxu0 0.0
    %2790 = vmatprep.subr.mxu0 0.0
    %2791 = vmatpush1.msra.mxu0 0.0
    %2792 = vmatprep.subr.mxu0 0.0
    %2793 = vmatpush1.msra.mxu0 0.0
    %2794 = vmatprep.subr.mxu0 0.0
    %2795 = vmatpush1.msra.mxu0 0.0
    %2796 = vmatprep.subr.mxu0 0.0
    %2797 = vmatpush1.msra.mxu0 0.0
    %2798 = vmatprep.subr.mxu0 0.0
    %2799 = vmatpush1.msra.mxu0 0.0
    %2800 = vmatprep.subr.mxu0 0.0
    %2801 = vmatpush1.msra.mxu0 0.0
    %2802 = vmatprep.subr.mxu0 0.0
    %2803 = vmatpush1.msra.mxu0 0.0
    %2804 = vmatprep.mubr.f32.mxu0 0.0
    %2805 = vmatmul.mubr.f32.gmra.mrb[0].mxu0 %v2738
    %v2806 = vpop.f32.mrb[0].mxu0
    %v2807 = vadd.f32 %v2732, %v2806
    %v2808 = vpop.f32.mrb[0].mxu0
    %2809 = vdwg.mxu0
    %v2810 = vld [vmem:[%s11] sm:$0x1]
    %v2812 = vlaneseq
    %v2813 = vshrl.u32 %v2812, 7
    %v2814 = vsub.s32 0, %v2813
    %v2815 = vrot.slane %v2810, %v2814
    %v2817 = vadd.f32 %v2807, %v2815
    %vm2818 = vcmask 25600
    %v2819 = vsel %vm2818, %v2817, -inf
    %2820 = vmax.xlane.f32.xlu0 %v2819
    %v2821 = vpop.xlane.xlu0 %2820
    %v2822 = vsub.f32 %v2817, %v2821
    %v2823 = vmul.f32 %v2822, 1.442695
    %v2824 = vpow.pop %v2823
    %v2825 = vsel %vm2818, %v2824, 0.0
    %2826 = vadd.xlane.f32.xlu0 %v2825
    %v2827 = vpop.xlane.xlu0 %2826
    %v2828 = vrcp.pop %v2827
    %v2829 = vmul.f32 %v2824, %v2828
    %2830 = vst.msk [vmem:[#allocation10] sm:$0x3] %vm2818, %v2829
    // Predicated region
    $region62: #{seq2seq_attention_forward.1} parent=1 // pred_check
      _
    $region63: #{seq2seq_attention_forward.1} parent=1 // pred_check_branch
      %2832 = sbr.rel (0) target = $region65
    $region64: #{seq2seq_attention_forward.1} parent=1 // pred_region
      %s2834 = ssub.s32 32, 32
      %2835 = vsyncadd [#allocation6], %s2834
      %s2837 = sshll.u32 [#allocation10], 4
      %s2838 = int_to_ptr.vmem [resolvable:$true] %s2837
      %2840 = dma.vmem_to_hbm [thread:$0]  %s2838, 32, %s12, [#allocation6]
    $region65: #{seq2seq_attention_forward.1} parent=1 // pred_fallthru
      _
    // Predicated region
    $region66: #{seq2seq_attention_forward.1} parent=1 // pred_check
      _
    $region67: #{seq2seq_attention_forward.1} parent=1 // pred_check_branch
      %2842 = sbr.rel (0) target = $region69
    $region68: #{seq2seq_attention_forward.1} parent=1 // pred_region
      %2843 = dma.done [#allocation6], 32
    $region69: #{seq2seq_attention_forward.1} parent=1 // pred_fallthru
      _
    %2844 = vsyncpa [#allocation5], 1
    %2845 = vsyncpa [#allocation8], 1
    %2846 = vsyncpa [#allocation6], 1

</llo_original>
